<compile_context>
chip_gen: v5e
topology: v5e:2x2
jax: 0.10.0
libtpu: 0.0.40
codegen_flags: <defaults>
</compile_context>

<pallas_src>
import functools

import jax
import jax.numpy as jnp
from jax.experimental import pallas as pl
from jax.experimental.pallas import tpu as pltpu

FC1_UNITS = 512
FC2_UNITS = 256
FC3_UNITS = 64
FC4_UNITS = 16

MAX_BATCH_TILE = 1024  # keeps per-tile VMEM well under v5e's 16 MiB scoped default


def _cdiv(a, b):
    return (a + b - 1) // b


def _round_up(x, m):
    return _cdiv(x, m) * m


def _choose_tiling(batch):
    """Pick (batch_tile, num_tiles) from the batch size.

    * batch <= 512: a single grid step, padded only to a multiple of 8 rows
      (the output block is full-extent, so no 128-lane alignment is needed).
    * larger batches: an even number of steps (both v7x TensorCores get equal
      work; v5e/v6e just run a short sequential grid) with tiles capped at
      MAX_BATCH_TILE and rounded to a multiple of 128 so the lane-dense
      (1, batch_tile) output block stays a legal block shape.
    """
    if batch <= 512:
        return _round_up(batch, 8), 1
    num_tiles = max(2, _round_up(_cdiv(batch, MAX_BATCH_TILE), 2))
    tile = _round_up(_cdiv(batch, num_tiles), 128)
    return tile, num_tiles


def critic_kernel(state_ref, action_ref,
                  w1_ref, b1_ref,
                  w2s_ref, w2a_ref, b2_ref,
                  w3_ref, b3_ref,
                  w4_ref, b4_ref,
                  w5_ref, b5_ref,
                  out_ref):
    f32 = jnp.float32
    bf16 = jnp.bfloat16

    # fc1 + relu (MXU bf16 x bf16 -> f32 accumulate); re-cast to bf16 once at
    # the ReLU so the wide intermediates stay half-size.
    x = jnp.dot(state_ref[...].astype(bf16), w1_ref[...],
                preferred_element_type=f32)
    x = jnp.maximum(x + b1_ref[...], 0.0).astype(bf16)

    # fc2 over cat([x, action], 1), split into two matmuls:
    #   state path (K=512) + action path (K=action_size) both on the MXU;
    #   the tiny K=4 push hides completely under the K=512 matmul.
    h = jnp.dot(x, w2s_ref[...], preferred_element_type=f32)
    h = h + jnp.dot(action_ref[...].astype(bf16), w2a_ref[...],
                    preferred_element_type=f32)
    x = jnp.maximum(h + b2_ref[...], 0.0).astype(bf16)

    # fc3 + relu
    x = jnp.dot(x, w3_ref[...], preferred_element_type=f32)
    x = jnp.maximum(x + b3_ref[...], 0.0).astype(bf16)

    # fc4 + relu (kept f32: it feeds the VPU fc5 path)
    x = jnp.dot(x, w4_ref[...], preferred_element_type=f32)
    x = jnp.maximum(x + b4_ref[...], 0.0)            # (bt, 16) f32

    # fc5 (N=1): transpose to (16, bt) on the XLU, multiply by the (16, 1)
    # weight column and reduce over sublanes.  The Q row is born lane-dense,
    # so the output store is a (1, bt) lane-major write instead of bt/8
    # lane-masked column stores.
    xt = jnp.transpose(x)                             # (16, bt)
    q = jnp.sum(xt * w5_ref[...], axis=0, keepdims=True) + b5_ref[...]
    out_ref[...] = q                                  # (1, bt)


@jax.jit
def critic_forward(state, action, params):
    B, S = state.shape
    A = action.shape[1]
    (w1, b1, w2s, w2a, b2, w3, b3, w4, b4, w5, b5) = params

    batch_tile, num_tiles = _choose_tiling(B)
    Bp = batch_tile * num_tiles
    if Bp != B:
        state = jnp.pad(state, ((0, Bp - B), (0, 0)))
        action = jnp.pad(action, ((0, Bp - B), (0, 0)))

    def batch_spec(feat):
        return pl.BlockSpec((batch_tile, feat), lambda i: (i, 0))

    def full_spec(arr):
        r, c = arr.shape
        return pl.BlockSpec((r, c), lambda i: (0, 0))

    weight_bytes = sum(int(p.size) * p.dtype.itemsize for p in params)
    flops = 2 * Bp * (S * FC1_UNITS + (FC1_UNITS + A) * FC2_UNITS
                      + FC2_UNITS * FC3_UNITS + FC3_UNITS * FC4_UNITS
                      + FC4_UNITS * 1)
    bytes_accessed = Bp * (S + A + 1) * 4 + weight_bytes
    cost = pl.CostEstimate(flops=flops, transcendentals=0,
                           bytes_accessed=bytes_accessed)

    out = pl.pallas_call(
        critic_kernel,
        out_shape=jax.ShapeDtypeStruct((1, Bp), jnp.float32),
        grid_spec=pltpu.PrefetchScalarGridSpec(
            num_scalar_prefetch=0,
            grid=(num_tiles,),
            in_specs=[
                batch_spec(S),          # state
                batch_spec(A),          # action
                full_spec(w1), full_spec(b1),
                full_spec(w2s), full_spec(w2a), full_spec(b2),
                full_spec(w3), full_spec(b3),
                full_spec(w4), full_spec(b4),
                full_spec(w5), full_spec(b5),
            ],
            out_specs=pl.BlockSpec((1, batch_tile), lambda i: (0, i)),
        ),
        compiler_params=pltpu.CompilerParams(
            dimension_semantics=("parallel",)),
        cost_estimate=cost,
    )(state, action, w1, b1, w2s, w2a, b2, w3, b3, w4, b4, w5, b5)

    # lane-dense (1, Bp) row -> (B, 1) column, dropping padded rows.
    return out[0, :B].reshape(B, 1)


def init_params(key, state_size, action_size):
    """Deterministic init mirroring Critic.reset_parameters() semantics.

    PyTorch Linear weight is (out, in); hidden_init uses weight.size()[0]=out,
    so lim = 1/sqrt(out_features). Biases keep the nn.Linear default
    uniform(-1/sqrt(in_features), 1/sqrt(in_features)).

    Storage: weights transposed to (in, out); everything the MXU touches
    (w1, w2_state, w2_action, w3, w4) is bf16, the fc5 weight column and all
    biases stay f32 (VPU path).
    """
    ks = jax.random.split(key, 10)

    def w_init(k, in_f, out_f, lim):
        return jax.random.uniform(k, (in_f, out_f), jnp.float32, -lim, lim)

    def b_init(k, in_f, out_f):
        lim = 1.0 / jnp.sqrt(in_f)
        return jax.random.uniform(k, (1, out_f), jnp.float32, -lim, lim)

    fc2_in = FC1_UNITS + action_size

    w1 = w_init(ks[0], state_size, FC1_UNITS, 1.0 / jnp.sqrt(FC1_UNITS))
    b1 = b_init(ks[1], state_size, FC1_UNITS)
    w2 = w_init(ks[2], fc2_in, FC2_UNITS, 1.0 / jnp.sqrt(FC2_UNITS))
    b2 = b_init(ks[3], fc2_in, FC2_UNITS)
    w3 = w_init(ks[4], FC2_UNITS, FC3_UNITS, 1.0 / jnp.sqrt(FC3_UNITS))
    b3 = b_init(ks[5], FC2_UNITS, FC3_UNITS)
    w4 = w_init(ks[6], FC3_UNITS, FC4_UNITS, 1.0 / jnp.sqrt(FC4_UNITS))
    b4 = b_init(ks[7], FC3_UNITS, FC4_UNITS)
    w5 = w_init(ks[8], FC4_UNITS, 1, 0.003)          # (16, 1) column, f32
    b5 = b_init(ks[9], FC4_UNITS, 1)

    # Split fc2 weight into the state-path block (first FC1_UNITS rows of the
    # concatenated input) and the action-path block (last action_size rows).
    w2s = w2[:FC1_UNITS, :]
    w2a = w2[FC1_UNITS:, :]

    bf16 = jnp.bfloat16
    return (w1.astype(bf16), b1,
            w2s.astype(bf16), w2a.astype(bf16), b2,
            w3.astype(bf16), b3,
            w4.astype(bf16), b4,
            w5, b5)


def critic_reference(state, action, params):
    """Pure-JAX reference replicating the kernel's exact dtype path."""
    (w1, b1, w2s, w2a, b2, w3, b3, w4, b4, w5, b5) = params
    f32, bf16 = jnp.float32, jnp.bfloat16
    x = jnp.maximum(
        jnp.dot(state.astype(bf16), w1, preferred_element_type=f32) + b1,
        0.0).astype(bf16)
    h = (jnp.dot(x, w2s, preferred_element_type=f32)
         + jnp.dot(action.astype(bf16), w2a, preferred_element_type=f32))
    x = jnp.maximum(h + b2, 0.0).astype(bf16)
    x = jnp.maximum(
        jnp.dot(x, w3, preferred_element_type=f32) + b3, 0.0).astype(bf16)
    x = jnp.maximum(
        jnp.dot(x, w4, preferred_element_type=f32) + b4, 0.0)
    return jnp.sum(x * w5.T, axis=-1, keepdims=True) + b5


def critic_reference_f32(state, action, params):
    """Pure-f32 reference (fidelity check vs. the original PyTorch Critic)."""
    (w1, b1, w2s, w2a, b2, w3, b3, w4, b4, w5, b5) = params
    f32 = jnp.float32
    x = jnp.maximum(state @ w1.astype(f32) + b1, 0.0)
    h = x @ w2s.astype(f32) + action @ w2a.astype(f32) + b2
    x = jnp.maximum(h, 0.0)
    x = jnp.maximum(x @ w3.astype(f32) + b3, 0.0)
    x = jnp.maximum(x @ w4.astype(f32) + b4, 0.0)
    return x @ w5 + b5


if __name__ == "__main__":
    key = jax.random.PRNGKey(0)
    k_params, k_state, k_action = jax.random.split(key, 3)

    state_size = 32
    action_size = 4
    params = init_params(k_params, state_size, action_size)

    # Two batch sizes: 300 exercises the single-tile path (pads only to 304),
    # 1000 exercises the multi-tile path (2 x 512 tiles, lane-dense blocks).
    for batch in (300, 1000):
        ks, ka = jax.random.split(jax.random.fold_in(k_state, batch))
        state = jax.random.normal(ks, (batch, state_size), jnp.float32)
        action = jax.random.normal(ka, (batch, action_size), jnp.float32)

        q = critic_forward(state, action, params)
        q = jax.block_until_ready(q)
        assert q.shape == (batch, 1), q.shape

        q_ref = critic_reference(state, action, params)
        max_err = float(jnp.max(jnp.abs(q - q_ref)))
        assert jnp.allclose(q, q_ref, atol=5e-3, rtol=1e-2), (
            f"B={batch}: mismatch vs. dtype-replica reference, max err {max_err}")

        q_f32 = critic_reference_f32(state, action, params)
        max_err_f32 = float(jnp.max(jnp.abs(q - q_f32)))
        assert max_err_f32 < 0.1, (
            f"B={batch}: bf16 path drifted from f32 Critic, max err {max_err_f32}")

    print("KERNEL_OK")
</pallas_src>

<mosaic_0001>
module attributes {stable_mosaic.version = 11 : i64} {
  func.func @critic_kernel(%arg0: i32, %arg1: memref<304x32xf32, #tpu.memory_space<vmem>>, %arg2: memref<304x4xf32, #tpu.memory_space<vmem>>, %arg3: memref<32x512xbf16, #tpu.memory_space<vmem>>, %arg4: memref<1x512xf32, #tpu.memory_space<vmem>>, %arg5: memref<512x256xbf16, #tpu.memory_space<vmem>>, %arg6: memref<4x256xbf16, #tpu.memory_space<vmem>>, %arg7: memref<1x256xf32, #tpu.memory_space<vmem>>, %arg8: memref<256x64xbf16, #tpu.memory_space<vmem>>, %arg9: memref<1x64xf32, #tpu.memory_space<vmem>>, %arg10: memref<64x16xbf16, #tpu.memory_space<vmem>>, %arg11: memref<1x16xf32, #tpu.memory_space<vmem>>, %arg12: memref<16x1xf32, #tpu.memory_space<vmem>>, %arg13: memref<1x1xf32, #tpu.memory_space<vmem>>, %arg14: memref<1x304xf32, #tpu.memory_space<vmem>>) attributes {dimension_semantics = [#tpu.dimension_semantics<parallel>], iteration_bounds = array<i64: 1>, scalar_prefetch = 0 : i64, scratch_operands = 0 : i64, tpu.core_type = #tpu.core_type<tc>, window_params = [{transform_indices = @transform_0, window_bounds = array<i64: 304, 32>}, {transform_indices = @transform_1, window_bounds = array<i64: 304, 4>}, {pipeline_mode = #tpu.pipeline_mode<synchronous>, transform_indices = @transform_2, window_bounds = array<i64: 32, 512>}, {pipeline_mode = #tpu.pipeline_mode<synchronous>, transform_indices = @transform_3, window_bounds = array<i64: 1, 512>}, {pipeline_mode = #tpu.pipeline_mode<synchronous>, transform_indices = @transform_4, window_bounds = array<i64: 512, 256>}, {pipeline_mode = #tpu.pipeline_mode<synchronous>, transform_indices = @transform_5, window_bounds = array<i64: 4, 256>}, {pipeline_mode = #tpu.pipeline_mode<synchronous>, transform_indices = @transform_6, window_bounds = array<i64: 1, 256>}, {pipeline_mode = #tpu.pipeline_mode<synchronous>, transform_indices = @transform_7, window_bounds = array<i64: 256, 64>}, {pipeline_mode = #tpu.pipeline_mode<synchronous>, transform_indices = @transform_8, window_bounds = array<i64: 1, 64>}, {pipeline_mode = #tpu.pipeline_mode<synchronous>, transform_indices = @transform_9, window_bounds = array<i64: 64, 16>}, {pipeline_mode = #tpu.pipeline_mode<synchronous>, transform_indices = @transform_10, window_bounds = array<i64: 1, 16>}, {pipeline_mode = #tpu.pipeline_mode<synchronous>, transform_indices = @transform_11, window_bounds = array<i64: 16, 1>}, {pipeline_mode = #tpu.pipeline_mode<synchronous>, transform_indices = @transform_12, window_bounds = array<i64: 1, 1>}, {transform_indices = @transform_13, window_bounds = array<i64: 1, 304>}]} {
    %c0 = arith.constant 0 : index
    %c0_0 = arith.constant 0 : index
    %0 = vector.load %arg1[%c0, %c0_0] : memref<304x32xf32, #tpu.memory_space<vmem>>, vector<304x32xf32>
    %1 = arith.truncf %0 : vector<304x32xf32> to vector<304x32xbf16>
    %c0_1 = arith.constant 0 : index
    %c0_2 = arith.constant 0 : index
    %2 = vector.load %arg3[%c0_1, %c0_2] : memref<32x512xbf16, #tpu.memory_space<vmem>>, vector<32x512xbf16>
    %cst = arith.constant dense<0.000000e+00> : vector<304x512xf32>
    %3 = tpu.matmul %1, %2, %cst {dimension_numbers = #tpu.dot_dimension_numbers<[1], [0], [0], [1], [0, 0, 1, 1], [], []>} : vector<304x32xbf16>, vector<32x512xbf16>, vector<304x512xf32> -> vector<304x512xf32>
    %c0_3 = arith.constant 0 : index
    %c0_4 = arith.constant 0 : index
    %4 = vector.load %arg4[%c0_3, %c0_4] : memref<1x512xf32, #tpu.memory_space<vmem>>, vector<1x512xf32>
    %5 = vector.broadcast %4 : vector<1x512xf32> to vector<304x512xf32>
    %6 = arith.addf %3, %5 : vector<304x512xf32>
    %cst_5 = arith.constant 0.000000e+00 : f32
    %7 = vector.broadcast %cst_5 : f32 to vector<304x512xf32>
    %8 = arith.maximumf %6, %7 : vector<304x512xf32>
    %9 = arith.truncf %8 : vector<304x512xf32> to vector<304x512xbf16>
    %c0_6 = arith.constant 0 : index
    %c0_7 = arith.constant 0 : index
    %10 = vector.load %arg5[%c0_6, %c0_7] : memref<512x256xbf16, #tpu.memory_space<vmem>>, vector<512x256xbf16>
    %cst_8 = arith.constant dense<0.000000e+00> : vector<304x256xf32>
    %11 = tpu.matmul %9, %10, %cst_8 {dimension_numbers = #tpu.dot_dimension_numbers<[1], [0], [0], [1], [0, 0, 1, 1], [], []>} : vector<304x512xbf16>, vector<512x256xbf16>, vector<304x256xf32> -> vector<304x256xf32>
    %c0_9 = arith.constant 0 : index
    %c0_10 = arith.constant 0 : index
    %12 = vector.load %arg2[%c0_9, %c0_10] : memref<304x4xf32, #tpu.memory_space<vmem>>, vector<304x4xf32>
    %13 = arith.truncf %12 : vector<304x4xf32> to vector<304x4xbf16>
    %c0_11 = arith.constant 0 : index
    %c0_12 = arith.constant 0 : index
    %14 = vector.load %arg6[%c0_11, %c0_12] : memref<4x256xbf16, #tpu.memory_space<vmem>>, vector<4x256xbf16>
    %cst_13 = arith.constant dense<0.000000e+00> : vector<304x256xf32>
    %15 = tpu.matmul %13, %14, %cst_13 {dimension_numbers = #tpu.dot_dimension_numbers<[1], [0], [0], [1], [0, 0, 1, 1], [], []>} : vector<304x4xbf16>, vector<4x256xbf16>, vector<304x256xf32> -> vector<304x256xf32>
    %16 = arith.addf %11, %15 : vector<304x256xf32>
    %c0_14 = arith.constant 0 : index
    %c0_15 = arith.constant 0 : index
    %17 = vector.load %arg7[%c0_14, %c0_15] : memref<1x256xf32, #tpu.memory_space<vmem>>, vector<1x256xf32>
    %18 = vector.broadcast %17 : vector<1x256xf32> to vector<304x256xf32>
    %19 = arith.addf %16, %18 : vector<304x256xf32>
    %cst_16 = arith.constant 0.000000e+00 : f32
    %20 = vector.broadcast %cst_16 : f32 to vector<304x256xf32>
    %21 = arith.maximumf %19, %20 : vector<304x256xf32>
    %22 = arith.truncf %21 : vector<304x256xf32> to vector<304x256xbf16>
    %c0_17 = arith.constant 0 : index
    %c0_18 = arith.constant 0 : index
    %23 = vector.load %arg8[%c0_17, %c0_18] : memref<256x64xbf16, #tpu.memory_space<vmem>>, vector<256x64xbf16>
    %cst_19 = arith.constant dense<0.000000e+00> : vector<304x64xf32>
    %24 = tpu.matmul %22, %23, %cst_19 {dimension_numbers = #tpu.dot_dimension_numbers<[1], [0], [0], [1], [0, 0, 1, 1], [], []>} : vector<304x256xbf16>, vector<256x64xbf16>, vector<304x64xf32> -> vector<304x64xf32>
    %c0_20 = arith.constant 0 : index
    %c0_21 = arith.constant 0 : index
    %25 = vector.load %arg9[%c0_20, %c0_21] : memref<1x64xf32, #tpu.memory_space<vmem>>, vector<1x64xf32>
    %26 = vector.broadcast %25 : vector<1x64xf32> to vector<304x64xf32>
    %27 = arith.addf %24, %26 : vector<304x64xf32>
    %cst_22 = arith.constant 0.000000e+00 : f32
    %28 = vector.broadcast %cst_22 : f32 to vector<304x64xf32>
    %29 = arith.maximumf %27, %28 : vector<304x64xf32>
    %30 = arith.truncf %29 : vector<304x64xf32> to vector<304x64xbf16>
    %c0_23 = arith.constant 0 : index
    %c0_24 = arith.constant 0 : index
    %31 = vector.load %arg10[%c0_23, %c0_24] : memref<64x16xbf16, #tpu.memory_space<vmem>>, vector<64x16xbf16>
    %cst_25 = arith.constant dense<0.000000e+00> : vector<304x16xf32>
    %32 = tpu.matmul %30, %31, %cst_25 {dimension_numbers = #tpu.dot_dimension_numbers<[1], [0], [0], [1], [0, 0, 1, 1], [], []>} : vector<304x64xbf16>, vector<64x16xbf16>, vector<304x16xf32> -> vector<304x16xf32>
    %c0_26 = arith.constant 0 : index
    %c0_27 = arith.constant 0 : index
    %33 = vector.load %arg11[%c0_26, %c0_27] : memref<1x16xf32, #tpu.memory_space<vmem>>, vector<1x16xf32>
    %34 = vector.broadcast %33 : vector<1x16xf32> to vector<304x16xf32>
    %35 = arith.addf %32, %34 : vector<304x16xf32>
    %cst_28 = arith.constant 0.000000e+00 : f32
    %36 = vector.broadcast %cst_28 : f32 to vector<304x16xf32>
    %37 = arith.maximumf %35, %36 : vector<304x16xf32>
    %38 = tpu.transpose %37, [1, 0] : vector<304x16xf32> -> vector<16x304xf32>
    %c0_29 = arith.constant 0 : index
    %c0_30 = arith.constant 0 : index
    %39 = vector.load %arg12[%c0_29, %c0_30] : memref<16x1xf32, #tpu.memory_space<vmem>>, vector<16x1xf32>
    %40 = vector.broadcast %39 : vector<16x1xf32> to vector<16x304xf32>
    %41 = arith.mulf %38, %40 : vector<16x304xf32>
    %cst_31 = arith.constant dense<0.000000e+00> : vector<304xf32>
    %42 = vector.multi_reduction <add>, %41, %cst_31 [0] : vector<16x304xf32> to vector<304xf32>
    %43 = vector.shape_cast %42 : vector<304xf32> to vector<1x304xf32>
    %c0_32 = arith.constant 0 : index
    %c0_33 = arith.constant 0 : index
    %44 = vector.load %arg13[%c0_32, %c0_33] : memref<1x1xf32, #tpu.memory_space<vmem>>, vector<1x1xf32>
    %45 = vector.broadcast %44 : vector<1x1xf32> to vector<1x304xf32>
    %46 = arith.addf %43, %45 : vector<1x304xf32>
    %c0_34 = arith.constant 0 : index
    %c0_35 = arith.constant 0 : index
    %47 = vector.load %arg14[%c0_34, %c0_35] : memref<1x304xf32, #tpu.memory_space<vmem>>, vector<1x304xf32>
    tpu.vector_store %arg14[%c0_34, %c0_35], %46 {strides = array<i32>} : memref<1x304xf32, #tpu.memory_space<vmem>>, vector<1x304xf32>,
    return
  }
  func.func @transform_0(%arg0: i32) -> (i32, i32) {
    %c0_i32 = arith.constant 0 : i32
    %c0_i32_0 = arith.constant 0 : i32
    return %arg0, %c0_i32 : i32, i32
  }
  func.func @transform_1(%arg0: i32) -> (i32, i32) {
    %c0_i32 = arith.constant 0 : i32
    %c0_i32_0 = arith.constant 0 : i32
    return %arg0, %c0_i32 : i32, i32
  }
  func.func @transform_2(%arg0: i32) -> (i32, i32) {
    %c0_i32 = arith.constant 0 : i32
    %c0_i32_0 = arith.constant 0 : i32
    %c0_i32_1 = arith.constant 0 : i32
    return %c0_i32, %c0_i32_0 : i32, i32
  }
  func.func @transform_3(%arg0: i32) -> (i32, i32) {
    %c0_i32 = arith.constant 0 : i32
    %c0_i32_0 = arith.constant 0 : i32
    %c0_i32_1 = arith.constant 0 : i32
    return %c0_i32, %c0_i32_0 : i32, i32
  }
  func.func @transform_4(%arg0: i32) -> (i32, i32) {
    %c0_i32 = arith.constant 0 : i32
    %c0_i32_0 = arith.constant 0 : i32
    %c0_i32_1 = arith.constant 0 : i32
    return %c0_i32, %c0_i32_0 : i32, i32
  }
  func.func @transform_5(%arg0: i32) -> (i32, i32) {
    %c0_i32 = arith.constant 0 : i32
    %c0_i32_0 = arith.constant 0 : i32
    %c0_i32_1 = arith.constant 0 : i32
    return %c0_i32, %c0_i32_0 : i32, i32
  }
  func.func @transform_6(%arg0: i32) -> (i32, i32) {
    %c0_i32 = arith.constant 0 : i32
    %c0_i32_0 = arith.constant 0 : i32
    %c0_i32_1 = arith.constant 0 : i32
    return %c0_i32, %c0_i32_0 : i32, i32
  }
  func.func @transform_7(%arg0: i32) -> (i32, i32) {
    %c0_i32 = arith.constant 0 : i32
    %c0_i32_0 = arith.constant 0 : i32
    %c0_i32_1 = arith.constant 0 : i32
    return %c0_i32, %c0_i32_0 : i32, i32
  }
  func.func @transform_8(%arg0: i32) -> (i32, i32) {
    %c0_i32 = arith.constant 0 : i32
    %c0_i32_0 = arith.constant 0 : i32
    %c0_i32_1 = arith.constant 0 : i32
    return %c0_i32, %c0_i32_0 : i32, i32
  }
  func.func @transform_9(%arg0: i32) -> (i32, i32) {
    %c0_i32 = arith.constant 0 : i32
    %c0_i32_0 = arith.constant 0 : i32
    %c0_i32_1 = arith.constant 0 : i32
    return %c0_i32, %c0_i32_0 : i32, i32
  }
  func.func @transform_10(%arg0: i32) -> (i32, i32) {
    %c0_i32 = arith.constant 0 : i32
    %c0_i32_0 = arith.constant 0 : i32
    %c0_i32_1 = arith.constant 0 : i32
    return %c0_i32, %c0_i32_0 : i32, i32
  }
  func.func @transform_11(%arg0: i32) -> (i32, i32) {
    %c0_i32 = arith.constant 0 : i32
    %c0_i32_0 = arith.constant 0 : i32
    %c0_i32_1 = arith.constant 0 : i32
    return %c0_i32, %c0_i32_0 : i32, i32
  }
  func.func @transform_12(%arg0: i32) -> (i32, i32) {
    %c0_i32 = arith.constant 0 : i32
    %c0_i32_0 = arith.constant 0 : i32
    %c0_i32_1 = arith.constant 0 : i32
    return %c0_i32, %c0_i32_0 : i32, i32
  }
  func.func @transform_13(%arg0: i32) -> (i32, i32) {
    %c0_i32 = arith.constant 0 : i32
    %c0_i32_0 = arith.constant 0 : i32
    return %c0_i32, %arg0 : i32, i32
  }
}

</mosaic_0001>

<llo_original>
// kernel: critic_forward.1
$region0: #{critic_forward.1}
  #allocation0 [shape = 'u32[]', space=smem, size = 0x4, offset = 0x4, fixed_abs, tag = 'smem constant byte address 0x4 - core index']
  #allocation1 [shape = 'u32[72,128]{1,0:T(1,128)}', space=vmem, size = 0x9000, scoped, tag = 'internal scratch']
  #allocation2 [shape = 'f32[1,1]{1,0:T(1,128)S(1)}', space=vmem, size = 0x200, scoped, tag = 'scoped memory for critic_forward.1']
  %s0 = inlined_call_operand.vmem [shape: f32[304,32], index: 0, kind: input, shape index: {}]
  %s1 = inlined_call_operand.vmem [shape: f32[304,4], index: 1, kind: input, shape index: {}]
  %s2 = inlined_call_operand.vmem [shape: bf16[32,512], index: 2, kind: input, shape index: {}]
  %s3 = inlined_call_operand.vmem [shape: f32[1,512], index: 3, kind: input, shape index: {}]
  %s4 = inlined_call_operand.vmem [shape: bf16[512,256], index: 4, kind: input, shape index: {}]
  %s5 = inlined_call_operand.vmem [shape: bf16[4,256], index: 5, kind: input, shape index: {}]
  %s6 = inlined_call_operand.vmem [shape: f32[1,256], index: 6, kind: input, shape index: {}]
  %s7 = inlined_call_operand.vmem [shape: bf16[256,64], index: 7, kind: input, shape index: {}]
  %s8 = inlined_call_operand.vmem [shape: f32[1,64], index: 8, kind: input, shape index: {}]
  %s9 = inlined_call_operand.vmem [shape: bf16[64,16], index: 9, kind: input, shape index: {}]
  %s10 = inlined_call_operand.vmem [shape: f32[1,16], index: 10, kind: input, shape index: {}]
  %s11 = inlined_call_operand.vmem [shape: f32[16,1], index: 11, kind: input, shape index: {}]
  %s12 = inlined_call_operand.<no memory space> [shape: f32[1,1], index: 12, kind: input, shape index: {}]
  %s13 = inlined_call_operand.vmem [shape: f32[1,304], index: 13, kind: output, shape index: {}]
  %s14 = sld [smem:[#allocation0]]
  $region62: #{critic_forward.1} parent=0
    _
  %s16 = ssub.s32 1, %s14
  %s17 = scalar_select 0, %s16, %s14
  %v18 = vstv %s12
  %19 = vst [vmem:[#allocation2] sm:$0x1] %v18
  // Predicated region
  $region2: #{critic_forward.1} parent=0 // pred_check
    _
  $region3: #{critic_forward.1} parent=0 // pred_check_branch
    %21 = sbr.rel (0) target = $region5
  $region4: #{critic_forward.1} parent=0 // pred_region
    _
  $region5: #{critic_forward.1} parent=0 // pred_fallthru
    _
  // Predicated region
  $region6: #{critic_forward.1} parent=0 // pred_check
    _
  $region7: #{critic_forward.1} parent=0 // pred_check_branch
    %23 = sbr.rel (0) target = $region9
  $region8: #{critic_forward.1} parent=0 // pred_region
    _
  $region9: #{critic_forward.1} parent=0 // pred_fallthru
    _
  // Predicated region
  $region10: #{critic_forward.1} parent=0 // pred_check
    _
  $region11: #{critic_forward.1} parent=0 // pred_check_branch
    %25 = sbr.rel (0) target = $region13
  $region12: #{critic_forward.1} parent=0 // pred_region
    _
  $region13: #{critic_forward.1} parent=0 // pred_fallthru
    _
  // Predicated region
  $region14: #{critic_forward.1} parent=0 // pred_check
    _
  $region15: #{critic_forward.1} parent=0 // pred_check_branch
    %27 = sbr.rel (0) target = $region17
  $region16: #{critic_forward.1} parent=0 // pred_region
    _
  $region17: #{critic_forward.1} parent=0 // pred_fallthru
    _
  // Predicated region
  $region18: #{critic_forward.1} parent=0 // pred_check
    _
  $region19: #{critic_forward.1} parent=0 // pred_check_branch
    %29 = sbr.rel (0) target = $region21
  $region20: #{critic_forward.1} parent=0 // pred_region
    _
  $region21: #{critic_forward.1} parent=0 // pred_fallthru
    _
  // Predicated region
  $region22: #{critic_forward.1} parent=0 // pred_check
    _
  $region23: #{critic_forward.1} parent=0 // pred_check_branch
    %31 = sbr.rel (0) target = $region25
  $region24: #{critic_forward.1} parent=0 // pred_region
    _
  $region25: #{critic_forward.1} parent=0 // pred_fallthru
    _
  // Predicated region
  $region26: #{critic_forward.1} parent=0 // pred_check
    _
  $region27: #{critic_forward.1} parent=0 // pred_check_branch
    %33 = sbr.rel (0) target = $region29
  $region28: #{critic_forward.1} parent=0 // pred_region
    _
  $region29: #{critic_forward.1} parent=0 // pred_fallthru
    _
  // Predicated region
  $region30: #{critic_forward.1} parent=0 // pred_check
    _
  $region31: #{critic_forward.1} parent=0 // pred_check_branch
    %35 = sbr.rel (0) target = $region33
  $region32: #{critic_forward.1} parent=0 // pred_region
    _
  $region33: #{critic_forward.1} parent=0 // pred_fallthru
    _
  // Predicated region
  $region34: #{critic_forward.1} parent=0 // pred_check
    _
  $region35: #{critic_forward.1} parent=0 // pred_check_branch
    %37 = sbr.rel (0) target = $region37
  $region36: #{critic_forward.1} parent=0 // pred_region
    _
  $region37: #{critic_forward.1} parent=0 // pred_fallthru
    _
  // Predicated region
  $region38: #{critic_forward.1} parent=0 // pred_check
    _
  $region39: #{critic_forward.1} parent=0 // pred_check_branch
    %39 = sbr.rel (0) target = $region41
  $region40: #{critic_forward.1} parent=0 // pred_region
    _
  $region41: #{critic_forward.1} parent=0 // pred_fallthru
    _
  // Predicated region
  $region42: #{critic_forward.1} parent=0 // pred_check
    _
  $region43: #{critic_forward.1} parent=0 // pred_check_branch
    %41 = sbr.rel (0) target = $region45
  $region44: #{critic_forward.1} parent=0 // pred_region
    _
  $region45: #{critic_forward.1} parent=0 // pred_fallthru
    _
  // Predicated region
  $region46: #{critic_forward.1} parent=0 // pred_check
    _
  $region47: #{critic_forward.1} parent=0 // pred_check_branch
    %43 = sbr.rel (0) target = $region49
  $region48: #{critic_forward.1} parent=0 // pred_region
    _
  $region49: #{critic_forward.1} parent=0 // pred_fallthru
    _
  // Predicated region
  $region50: #{critic_forward.1} parent=0 // pred_check
    _
  $region51: #{critic_forward.1} parent=0 // pred_check_branch
    %45 = sbr.rel (0) target = $region53
  $region52: #{critic_forward.1} parent=0 // pred_region
    _
  $region53: #{critic_forward.1} parent=0 // pred_fallthru
    _
  %v47 = vld [vmem:[%s0] sm:$0xff]
  %v48 = vld [vmem:[%s0 + $0x8] sm:$0xff]
  %v49 = vld [vmem:[%s0 + $0x10] sm:$0xff]
  %v50 = vld [vmem:[%s0 + $0x18] sm:$0xff]
  %v51 = vld [vmem:[%s0 + $0x20] sm:$0xff]
  %v52 = vld [vmem:[%s0 + $0x28] sm:$0xff]
  %v53 = vld [vmem:[%s0 + $0x30] sm:$0xff]
  %v54 = vld [vmem:[%s0 + $0x38] sm:$0xff]
  %v55 = vld [vmem:[%s0 + $0x40] sm:$0xff]
  %v56 = vld [vmem:[%s0 + $0x48] sm:$0xff]
  %v57 = vld [vmem:[%s0 + $0x50] sm:$0xff]
  %v58 = vld [vmem:[%s0 + $0x58] sm:$0xff]
  %v59 = vld [vmem:[%s0 + $0x60] sm:$0xff]
  %v60 = vld [vmem:[%s0 + $0x68] sm:$0xff]
  %v61 = vld [vmem:[%s0 + $0x70] sm:$0xff]
  %v62 = vld [vmem:[%s0 + $0x78] sm:$0xff]
  %v63 = vld [vmem:[%s0 + $0x80] sm:$0xff]
  %v64 = vld [vmem:[%s0 + $0x88] sm:$0xff]
  %v65 = vld [vmem:[%s0 + $0x90] sm:$0xff]
  %v66 = vld [vmem:[%s0 + $0x98] sm:$0xff]
  %v67 = vld [vmem:[%s0 + $0xa0] sm:$0xff]
  %v68 = vld [vmem:[%s0 + $0xa8] sm:$0xff]
  %v69 = vld [vmem:[%s0 + $0xb0] sm:$0xff]
  %v70 = vld [vmem:[%s0 + $0xb8] sm:$0xff]
  %v71 = vld [vmem:[%s0 + $0xc0] sm:$0xff]
  %v72 = vld [vmem:[%s0 + $0xc8] sm:$0xff]
  %v73 = vld [vmem:[%s0 + $0xd0] sm:$0xff]
  %v74 = vld [vmem:[%s0 + $0xd8] sm:$0xff]
  %v75 = vld [vmem:[%s0 + $0xe0] sm:$0xff]
  %v76 = vld [vmem:[%s0 + $0xe8] sm:$0xff]
  %v77 = vld [vmem:[%s0 + $0xf0] sm:$0xff]
  %v78 = vld [vmem:[%s0 + $0xf8] sm:$0xff]
  %v79 = vld [vmem:[%s0 + $0x100] sm:$0xff]
  %v80 = vld [vmem:[%s0 + $0x108] sm:$0xff]
  %v81 = vld [vmem:[%s0 + $0x110] sm:$0xff]
  %v82 = vld [vmem:[%s0 + $0x118] sm:$0xff]
  %v83 = vld [vmem:[%s0 + $0x120] sm:$0xff]
  %v84 = vld [vmem:[%s0 + $0x128] sm:$0xff]
  %v85 = vpack.c.bf16 %v48, %v47
  %v86 = vpack.c.bf16 %v50, %v49
  %v87 = vpack.c.bf16 %v52, %v51
  %v88 = vpack.c.bf16 %v54, %v53
  %v89 = vpack.c.bf16 %v56, %v55
  %v90 = vpack.c.bf16 %v58, %v57
  %v91 = vpack.c.bf16 %v60, %v59
  %v92 = vpack.c.bf16 %v62, %v61
  %v93 = vpack.c.bf16 %v64, %v63
  %v94 = vpack.c.bf16 %v66, %v65
  %v95 = vpack.c.bf16 %v68, %v67
  %v96 = vpack.c.bf16 %v70, %v69
  %v97 = vpack.c.bf16 %v72, %v71
  %v98 = vpack.c.bf16 %v74, %v73
  %v99 = vpack.c.bf16 %v76, %v75
  %v100 = vpack.c.bf16 %v78, %v77
  %v101 = vpack.c.bf16 %v80, %v79
  %v102 = vpack.c.bf16 %v82, %v81
  %v103 = vpack.c.bf16 %v84, %v83
  %v104 = vld [vmem:[%s2] sm:$0xff]
  %v105 = vld [vmem:[%s2 + $0x8] sm:$0xff]
  %v106 = vld [vmem:[%s2 + $0x10] sm:$0xff]
  %v107 = vld [vmem:[%s2 + $0x18] sm:$0xff]
  %v108 = vld [vmem:[%s2 + $0x20] sm:$0xff]
  %v109 = vld [vmem:[%s2 + $0x28] sm:$0xff]
  %v110 = vld [vmem:[%s2 + $0x30] sm:$0xff]
  %v111 = vld [vmem:[%s2 + $0x38] sm:$0xff]
  %v112 = vld [vmem:[%s3] sm:$0xf]
  %v114 = vperm.slane %v112, 0
  %v115 = vperm.slane %v112, 1
  %v116 = vperm.slane %v112, 2
  %v117 = vperm.slane %v112, 3
  %v130 = vunpack.c.l.b16 %v104
  %v131 = vunpack.c.h.b16 %v104
  %v132 = vunpack.c.l.b16 %v105
  %v133 = vunpack.c.h.b16 %v105
  %v134 = vunpack.c.l.b16 %v106
  %v135 = vunpack.c.h.b16 %v106
  %v136 = vunpack.c.l.b16 %v107
  %v137 = vunpack.c.h.b16 %v107
  %v138 = vunpack.c.l.b16 %v108
  %v139 = vunpack.c.h.b16 %v108
  %v140 = vunpack.c.l.b16 %v109
  %v141 = vunpack.c.h.b16 %v109
  %v142 = vunpack.c.l.b16 %v110
  %v143 = vunpack.c.h.b16 %v110
  %v144 = vunpack.c.l.b16 %v111
  %v145 = vunpack.c.h.b16 %v111
  %v146 = vpack.c.b16 %v134, %v130
  %v147 = vpack.c.b16 %v135, %v131
  %v148 = vpack.c.b16 %v136, %v132
  %v149 = vpack.c.b16 %v137, %v133
  %v150 = vpack.c.b16 %v142, %v138
  %v151 = vpack.c.b16 %v143, %v139
  %v152 = vpack.c.b16 %v144, %v140
  %v153 = vpack.c.b16 %v145, %v141
  %vm162 = vcmask 261120
  %v164 = vsel %vm162, %v85, 0
  %v167 = vsel %vm162, %v86, 0
  %v170 = vsel %vm162, %v87, 0
  %v173 = vsel %vm162, %v88, 0
  %v176 = vsel %vm162, %v89, 0
  %v179 = vsel %vm162, %v90, 0
  %v182 = vsel %vm162, %v91, 0
  %v185 = vsel %vm162, %v92, 0
  %v188 = vsel %vm162, %v93, 0
  %v191 = vsel %vm162, %v94, 0
  %v194 = vsel %vm162, %v95, 0
  %v197 = vsel %vm162, %v96, 0
  %v200 = vsel %vm162, %v97, 0
  %v203 = vsel %vm162, %v98, 0
  %v206 = vsel %vm162, %v99, 0
  %v209 = vsel %vm162, %v100, 0
  %v212 = vsel %vm162, %v101, 0
  %v215 = vsel %vm162, %v102, 0
  %v218 = vsel %vm162, %v103, 0
  %220 = vmatpush.bf16.msra.mxu0 0
  %221 = vmatpush.bf16.msra.mxu0 0
  %222 = vmatpush.bf16.msra.mxu0 0
  %223 = vmatpush.bf16.msra.mxu0 0
  %224 = vmatpush.bf16.msra.mxu0 0
  %225 = vmatpush.bf16.msra.mxu0 0
  %226 = vmatpush.bf16.msra.mxu0 %v150
  %227 = vmatpush.bf16.msra.mxu0 %v146
  %228 = vmatmul.bf16.gmra.mxu0 %v164
  %v229 = vpop.f32.mrf.mxu0
  %v230 = vadd.f32 %v114, %v229
  %v231 = vpop.f32.mrf.mxu0
  %v232 = vadd.f32 %v114, %v231
  %233 = vmatmul.bf16.gmra.mxu0 %v167
  %v234 = vpop.f32.mrf.mxu0
  %v235 = vadd.f32 %v114, %v234
  %v236 = vpop.f32.mrf.mxu0
  %v237 = vadd.f32 %v114, %v236
  %238 = vmatmul.bf16.gmra.mxu0 %v170
  %v239 = vpop.f32.mrf.mxu0
  %v240 = vadd.f32 %v114, %v239
  %v241 = vpop.f32.mrf.mxu0
  %v242 = vadd.f32 %v114, %v241
  %243 = vmatmul.bf16.gmra.mxu0 %v173
  %v244 = vpop.f32.mrf.mxu0
  %v245 = vadd.f32 %v114, %v244
  %v246 = vpop.f32.mrf.mxu0
  %v247 = vadd.f32 %v114, %v246
  %248 = vmatmul.bf16.gmra.mxu0 %v176
  %v249 = vpop.f32.mrf.mxu0
  %v250 = vadd.f32 %v114, %v249
  %v251 = vpop.f32.mrf.mxu0
  %v252 = vadd.f32 %v114, %v251
  %253 = vmatmul.bf16.gmra.mxu0 %v179
  %v254 = vpop.f32.mrf.mxu0
  %v255 = vadd.f32 %v114, %v254
  %v256 = vpop.f32.mrf.mxu0
  %v257 = vadd.f32 %v114, %v256
  %258 = vmatmul.bf16.gmra.mxu0 %v182
  %v259 = vpop.f32.mrf.mxu0
  %v260 = vadd.f32 %v114, %v259
  %v261 = vpop.f32.mrf.mxu0
  %v262 = vadd.f32 %v114, %v261
  %263 = vmatmul.bf16.gmra.mxu0 %v185
  %v264 = vpop.f32.mrf.mxu0
  %v265 = vadd.f32 %v114, %v264
  %v266 = vpop.f32.mrf.mxu0
  %v267 = vadd.f32 %v114, %v266
  %268 = vmatmul.bf16.gmra.mxu0 %v188
  %v269 = vpop.f32.mrf.mxu0
  %v270 = vadd.f32 %v114, %v269
  %v271 = vpop.f32.mrf.mxu0
  %v272 = vadd.f32 %v114, %v271
  %273 = vmatmul.bf16.gmra.mxu0 %v191
  %v274 = vpop.f32.mrf.mxu0
  %v275 = vadd.f32 %v114, %v274
  %v276 = vpop.f32.mrf.mxu0
  %v277 = vadd.f32 %v114, %v276
  %278 = vmatmul.bf16.gmra.mxu0 %v194
  %v279 = vpop.f32.mrf.mxu0
  %v280 = vadd.f32 %v114, %v279
  %v281 = vpop.f32.mrf.mxu0
  %v282 = vadd.f32 %v114, %v281
  %283 = vmatmul.bf16.gmra.mxu0 %v197
  %v284 = vpop.f32.mrf.mxu0
  %v285 = vadd.f32 %v114, %v284
  %v286 = vpop.f32.mrf.mxu0
  %v287 = vadd.f32 %v114, %v286
  %288 = vmatmul.bf16.gmra.mxu0 %v200
  %v289 = vpop.f32.mrf.mxu0
  %v290 = vadd.f32 %v114, %v289
  %v291 = vpop.f32.mrf.mxu0
  %v292 = vadd.f32 %v114, %v291
  %293 = vmatmul.bf16.gmra.mxu0 %v203
  %v294 = vpop.f32.mrf.mxu0
  %v295 = vadd.f32 %v114, %v294
  %v296 = vpop.f32.mrf.mxu0
  %v297 = vadd.f32 %v114, %v296
  %298 = vmatmul.bf16.gmra.mxu0 %v206
  %v299 = vpop.f32.mrf.mxu0
  %v300 = vadd.f32 %v114, %v299
  %v301 = vpop.f32.mrf.mxu0
  %v302 = vadd.f32 %v114, %v301
  %303 = vmatmul.bf16.gmra.mxu0 %v209
  %v304 = vpop.f32.mrf.mxu0
  %v305 = vadd.f32 %v114, %v304
  %v306 = vpop.f32.mrf.mxu0
  %v307 = vadd.f32 %v114, %v306
  %308 = vmatmul.bf16.gmra.mxu0 %v212
  %v309 = vpop.f32.mrf.mxu0
  %v310 = vadd.f32 %v114, %v309
  %v311 = vpop.f32.mrf.mxu0
  %v312 = vadd.f32 %v114, %v311
  %313 = vmatmul.bf16.gmra.mxu0 %v215
  %v314 = vpop.f32.mrf.mxu0
  %v315 = vadd.f32 %v114, %v314
  %v316 = vpop.f32.mrf.mxu0
  %v317 = vadd.f32 %v114, %v316
  %318 = vmatmul.bf16.gmra.mxu0 %v218
  %v319 = vpop.f32.mrf.mxu0
  %v320 = vadd.f32 %v114, %v319
  %v321 = vpop.f32.mrf.mxu0
  %v322 = vadd.f32 %v114, %v321
  %323 = vdwg.mxu0
  %324 = vmatpush.bf16.msra.mxu0 0
  %325 = vmatpush.bf16.msra.mxu0 0
  %326 = vmatpush.bf16.msra.mxu0 0
  %327 = vmatpush.bf16.msra.mxu0 0
  %328 = vmatpush.bf16.msra.mxu0 0
  %329 = vmatpush.bf16.msra.mxu0 0
  %330 = vmatpush.bf16.msra.mxu0 %v151
  %331 = vmatpush.bf16.msra.mxu0 %v147
  %332 = vmatmul.bf16.gmra.mxu0 %v164
  %v333 = vpop.f32.mrf.mxu0
  %v334 = vadd.f32 %v115, %v333
  %v335 = vpop.f32.mrf.mxu0
  %v336 = vadd.f32 %v115, %v335
  %337 = vmatmul.bf16.gmra.mxu0 %v167
  %v338 = vpop.f32.mrf.mxu0
  %v339 = vadd.f32 %v115, %v338
  %v340 = vpop.f32.mrf.mxu0
  %v341 = vadd.f32 %v115, %v340
  %342 = vmatmul.bf16.gmra.mxu0 %v170
  %v343 = vpop.f32.mrf.mxu0
  %v344 = vadd.f32 %v115, %v343
  %v345 = vpop.f32.mrf.mxu0
  %v346 = vadd.f32 %v115, %v345
  %347 = vmatmul.bf16.gmra.mxu0 %v173
  %v348 = vpop.f32.mrf.mxu0
  %v349 = vadd.f32 %v115, %v348
  %v350 = vpop.f32.mrf.mxu0
  %v351 = vadd.f32 %v115, %v350
  %352 = vmatmul.bf16.gmra.mxu0 %v176
  %v353 = vpop.f32.mrf.mxu0
  %v354 = vadd.f32 %v115, %v353
  %v355 = vpop.f32.mrf.mxu0
  %v356 = vadd.f32 %v115, %v355
  %357 = vmatmul.bf16.gmra.mxu0 %v179
  %v358 = vpop.f32.mrf.mxu0
  %v359 = vadd.f32 %v115, %v358
  %v360 = vpop.f32.mrf.mxu0
  %v361 = vadd.f32 %v115, %v360
  %362 = vmatmul.bf16.gmra.mxu0 %v182
  %v363 = vpop.f32.mrf.mxu0
  %v364 = vadd.f32 %v115, %v363
  %v365 = vpop.f32.mrf.mxu0
  %v366 = vadd.f32 %v115, %v365
  %367 = vmatmul.bf16.gmra.mxu0 %v185
  %v368 = vpop.f32.mrf.mxu0
  %v369 = vadd.f32 %v115, %v368
  %v370 = vpop.f32.mrf.mxu0
  %v371 = vadd.f32 %v115, %v370
  %372 = vmatmul.bf16.gmra.mxu0 %v188
  %v373 = vpop.f32.mrf.mxu0
  %v374 = vadd.f32 %v115, %v373
  %v375 = vpop.f32.mrf.mxu0
  %v376 = vadd.f32 %v115, %v375
  %377 = vmatmul.bf16.gmra.mxu0 %v191
  %v378 = vpop.f32.mrf.mxu0
  %v379 = vadd.f32 %v115, %v378
  %v380 = vpop.f32.mrf.mxu0
  %v381 = vadd.f32 %v115, %v380
  %382 = vmatmul.bf16.gmra.mxu0 %v194
  %v383 = vpop.f32.mrf.mxu0
  %v384 = vadd.f32 %v115, %v383
  %v385 = vpop.f32.mrf.mxu0
  %v386 = vadd.f32 %v115, %v385
  %387 = vmatmul.bf16.gmra.mxu0 %v197
  %v388 = vpop.f32.mrf.mxu0
  %v389 = vadd.f32 %v115, %v388
  %v390 = vpop.f32.mrf.mxu0
  %v391 = vadd.f32 %v115, %v390
  %392 = vmatmul.bf16.gmra.mxu0 %v200
  %v393 = vpop.f32.mrf.mxu0
  %v394 = vadd.f32 %v115, %v393
  %v395 = vpop.f32.mrf.mxu0
  %v396 = vadd.f32 %v115, %v395
  %397 = vmatmul.bf16.gmra.mxu0 %v203
  %v398 = vpop.f32.mrf.mxu0
  %v399 = vadd.f32 %v115, %v398
  %v400 = vpop.f32.mrf.mxu0
  %v401 = vadd.f32 %v115, %v400
  %402 = vmatmul.bf16.gmra.mxu0 %v206
  %v403 = vpop.f32.mrf.mxu0
  %v404 = vadd.f32 %v115, %v403
  %v405 = vpop.f32.mrf.mxu0
  %v406 = vadd.f32 %v115, %v405
  %407 = vmatmul.bf16.gmra.mxu0 %v209
  %v408 = vpop.f32.mrf.mxu0
  %v409 = vadd.f32 %v115, %v408
  %v410 = vpop.f32.mrf.mxu0
  %v411 = vadd.f32 %v115, %v410
  %412 = vmatmul.bf16.gmra.mxu0 %v212
  %v413 = vpop.f32.mrf.mxu0
  %v414 = vadd.f32 %v115, %v413
  %v415 = vpop.f32.mrf.mxu0
  %v416 = vadd.f32 %v115, %v415
  %417 = vmatmul.bf16.gmra.mxu0 %v215
  %v418 = vpop.f32.mrf.mxu0
  %v419 = vadd.f32 %v115, %v418
  %v420 = vpop.f32.mrf.mxu0
  %v421 = vadd.f32 %v115, %v420
  %422 = vmatmul.bf16.gmra.mxu0 %v218
  %v423 = vpop.f32.mrf.mxu0
  %v424 = vadd.f32 %v115, %v423
  %v425 = vpop.f32.mrf.mxu0
  %v426 = vadd.f32 %v115, %v425
  %427 = vdwg.mxu0
  %428 = vmatpush.bf16.msra.mxu0 0
  %429 = vmatpush.bf16.msra.mxu0 0
  %430 = vmatpush.bf16.msra.mxu0 0
  %431 = vmatpush.bf16.msra.mxu0 0
  %432 = vmatpush.bf16.msra.mxu0 0
  %433 = vmatpush.bf16.msra.mxu0 0
  %434 = vmatpush.bf16.msra.mxu0 %v152
  %435 = vmatpush.bf16.msra.mxu0 %v148
  %436 = vmatmul.bf16.gmra.mxu0 %v164
  %v437 = vpop.f32.mrf.mxu0
  %v438 = vadd.f32 %v116, %v437
  %v439 = vpop.f32.mrf.mxu0
  %v440 = vadd.f32 %v116, %v439
  %441 = vmatmul.bf16.gmra.mxu0 %v167
  %v442 = vpop.f32.mrf.mxu0
  %v443 = vadd.f32 %v116, %v442
  %v444 = vpop.f32.mrf.mxu0
  %v445 = vadd.f32 %v116, %v444
  %446 = vmatmul.bf16.gmra.mxu0 %v170
  %v447 = vpop.f32.mrf.mxu0
  %v448 = vadd.f32 %v116, %v447
  %v449 = vpop.f32.mrf.mxu0
  %v450 = vadd.f32 %v116, %v449
  %451 = vmatmul.bf16.gmra.mxu0 %v173
  %v452 = vpop.f32.mrf.mxu0
  %v453 = vadd.f32 %v116, %v452
  %v454 = vpop.f32.mrf.mxu0
  %v455 = vadd.f32 %v116, %v454
  %456 = vmatmul.bf16.gmra.mxu0 %v176
  %v457 = vpop.f32.mrf.mxu0
  %v458 = vadd.f32 %v116, %v457
  %v459 = vpop.f32.mrf.mxu0
  %v460 = vadd.f32 %v116, %v459
  %461 = vmatmul.bf16.gmra.mxu0 %v179
  %v462 = vpop.f32.mrf.mxu0
  %v463 = vadd.f32 %v116, %v462
  %v464 = vpop.f32.mrf.mxu0
  %v465 = vadd.f32 %v116, %v464
  %466 = vmatmul.bf16.gmra.mxu0 %v182
  %v467 = vpop.f32.mrf.mxu0
  %v468 = vadd.f32 %v116, %v467
  %v469 = vpop.f32.mrf.mxu0
  %v470 = vadd.f32 %v116, %v469
  %471 = vmatmul.bf16.gmra.mxu0 %v185
  %v472 = vpop.f32.mrf.mxu0
  %v473 = vadd.f32 %v116, %v472
  %v474 = vpop.f32.mrf.mxu0
  %v475 = vadd.f32 %v116, %v474
  %476 = vmatmul.bf16.gmra.mxu0 %v188
  %v477 = vpop.f32.mrf.mxu0
  %v478 = vadd.f32 %v116, %v477
  %v479 = vpop.f32.mrf.mxu0
  %v480 = vadd.f32 %v116, %v479
  %481 = vmatmul.bf16.gmra.mxu0 %v191
  %v482 = vpop.f32.mrf.mxu0
  %v483 = vadd.f32 %v116, %v482
  %v484 = vpop.f32.mrf.mxu0
  %v485 = vadd.f32 %v116, %v484
  %486 = vmatmul.bf16.gmra.mxu0 %v194
  %v487 = vpop.f32.mrf.mxu0
  %v488 = vadd.f32 %v116, %v487
  %v489 = vpop.f32.mrf.mxu0
  %v490 = vadd.f32 %v116, %v489
  %491 = vmatmul.bf16.gmra.mxu0 %v197
  %v492 = vpop.f32.mrf.mxu0
  %v493 = vadd.f32 %v116, %v492
  %v494 = vpop.f32.mrf.mxu0
  %v495 = vadd.f32 %v116, %v494
  %496 = vmatmul.bf16.gmra.mxu0 %v200
  %v497 = vpop.f32.mrf.mxu0
  %v498 = vadd.f32 %v116, %v497
  %v499 = vpop.f32.mrf.mxu0
  %v500 = vadd.f32 %v116, %v499
  %501 = vmatmul.bf16.gmra.mxu0 %v203
  %v502 = vpop.f32.mrf.mxu0
  %v503 = vadd.f32 %v116, %v502
  %v504 = vpop.f32.mrf.mxu0
  %v505 = vadd.f32 %v116, %v504
  %506 = vmatmul.bf16.gmra.mxu0 %v206
  %v507 = vpop.f32.mrf.mxu0
  %v508 = vadd.f32 %v116, %v507
  %v509 = vpop.f32.mrf.mxu0
  %v510 = vadd.f32 %v116, %v509
  %511 = vmatmul.bf16.gmra.mxu0 %v209
  %v512 = vpop.f32.mrf.mxu0
  %v513 = vadd.f32 %v116, %v512
  %v514 = vpop.f32.mrf.mxu0
  %v515 = vadd.f32 %v116, %v514
  %516 = vmatmul.bf16.gmra.mxu0 %v212
  %v517 = vpop.f32.mrf.mxu0
  %v518 = vadd.f32 %v116, %v517
  %v519 = vpop.f32.mrf.mxu0
  %v520 = vadd.f32 %v116, %v519
  %521 = vmatmul.bf16.gmra.mxu0 %v215
  %v522 = vpop.f32.mrf.mxu0
  %v523 = vadd.f32 %v116, %v522
  %v524 = vpop.f32.mrf.mxu0
  %v525 = vadd.f32 %v116, %v524
  %526 = vmatmul.bf16.gmra.mxu0 %v218
  %v527 = vpop.f32.mrf.mxu0
  %v528 = vadd.f32 %v116, %v527
  %v529 = vpop.f32.mrf.mxu0
  %v530 = vadd.f32 %v116, %v529
  %531 = vdwg.mxu0
  %532 = vmatpush.bf16.msra.mxu0 0
  %533 = vmatpush.bf16.msra.mxu0 0
  %534 = vmatpush.bf16.msra.mxu0 0
  %535 = vmatpush.bf16.msra.mxu0 0
  %536 = vmatpush.bf16.msra.mxu0 0
  %537 = vmatpush.bf16.msra.mxu0 0
  %538 = vmatpush.bf16.msra.mxu0 %v153
  %539 = vmatpush.bf16.msra.mxu0 %v149
  %540 = vmatmul.bf16.gmra.mxu0 %v164
  %v541 = vpop.f32.mrf.mxu0
  %v542 = vadd.f32 %v117, %v541
  %v543 = vpop.f32.mrf.mxu0
  %v544 = vadd.f32 %v117, %v543
  %545 = vmatmul.bf16.gmra.mxu0 %v167
  %v546 = vpop.f32.mrf.mxu0
  %v547 = vadd.f32 %v117, %v546
  %v548 = vpop.f32.mrf.mxu0
  %v549 = vadd.f32 %v117, %v548
  %550 = vmatmul.bf16.gmra.mxu0 %v170
  %v551 = vpop.f32.mrf.mxu0
  %v552 = vadd.f32 %v117, %v551
  %v553 = vpop.f32.mrf.mxu0
  %v554 = vadd.f32 %v117, %v553
  %555 = vmatmul.bf16.gmra.mxu0 %v173
  %v556 = vpop.f32.mrf.mxu0
  %v557 = vadd.f32 %v117, %v556
  %v558 = vpop.f32.mrf.mxu0
  %v559 = vadd.f32 %v117, %v558
  %560 = vmatmul.bf16.gmra.mxu0 %v176
  %v561 = vpop.f32.mrf.mxu0
  %v562 = vadd.f32 %v117, %v561
  %v563 = vpop.f32.mrf.mxu0
  %v564 = vadd.f32 %v117, %v563
  %565 = vmatmul.bf16.gmra.mxu0 %v179
  %v566 = vpop.f32.mrf.mxu0
  %v567 = vadd.f32 %v117, %v566
  %v568 = vpop.f32.mrf.mxu0
  %v569 = vadd.f32 %v117, %v568
  %570 = vmatmul.bf16.gmra.mxu0 %v182
  %v571 = vpop.f32.mrf.mxu0
  %v572 = vadd.f32 %v117, %v571
  %v573 = vpop.f32.mrf.mxu0
  %v574 = vadd.f32 %v117, %v573
  %575 = vmatmul.bf16.gmra.mxu0 %v185
  %v576 = vpop.f32.mrf.mxu0
  %v577 = vadd.f32 %v117, %v576
  %v578 = vpop.f32.mrf.mxu0
  %v579 = vadd.f32 %v117, %v578
  %580 = vmatmul.bf16.gmra.mxu0 %v188
  %v581 = vpop.f32.mrf.mxu0
  %v582 = vadd.f32 %v117, %v581
  %v583 = vpop.f32.mrf.mxu0
  %v584 = vadd.f32 %v117, %v583
  %585 = vmatmul.bf16.gmra.mxu0 %v191
  %v586 = vpop.f32.mrf.mxu0
  %v587 = vadd.f32 %v117, %v586
  %v588 = vpop.f32.mrf.mxu0
  %v589 = vadd.f32 %v117, %v588
  %590 = vmatmul.bf16.gmra.mxu0 %v194
  %v591 = vpop.f32.mrf.mxu0
  %v592 = vadd.f32 %v117, %v591
  %v593 = vpop.f32.mrf.mxu0
  %v594 = vadd.f32 %v117, %v593
  %595 = vmatmul.bf16.gmra.mxu0 %v197
  %v596 = vpop.f32.mrf.mxu0
  %v597 = vadd.f32 %v117, %v596
  %v598 = vpop.f32.mrf.mxu0
  %v599 = vadd.f32 %v117, %v598
  %600 = vmatmul.bf16.gmra.mxu0 %v200
  %v601 = vpop.f32.mrf.mxu0
  %v602 = vadd.f32 %v117, %v601
  %v603 = vpop.f32.mrf.mxu0
  %v604 = vadd.f32 %v117, %v603
  %605 = vmatmul.bf16.gmra.mxu0 %v203
  %v606 = vpop.f32.mrf.mxu0
  %v607 = vadd.f32 %v117, %v606
  %v608 = vpop.f32.mrf.mxu0
  %v609 = vadd.f32 %v117, %v608
  %610 = vmatmul.bf16.gmra.mxu0 %v206
  %v611 = vpop.f32.mrf.mxu0
  %v612 = vadd.f32 %v117, %v611
  %v613 = vpop.f32.mrf.mxu0
  %v614 = vadd.f32 %v117, %v613
  %615 = vmatmul.bf16.gmra.mxu0 %v209
  %v616 = vpop.f32.mrf.mxu0
  %v617 = vadd.f32 %v117, %v616
  %v618 = vpop.f32.mrf.mxu0
  %v619 = vadd.f32 %v117, %v618
  %620 = vmatmul.bf16.gmra.mxu0 %v212
  %v621 = vpop.f32.mrf.mxu0
  %v622 = vadd.f32 %v117, %v621
  %v623 = vpop.f32.mrf.mxu0
  %v624 = vadd.f32 %v117, %v623
  %625 = vmatmul.bf16.gmra.mxu0 %v215
  %v626 = vpop.f32.mrf.mxu0
  %v627 = vadd.f32 %v117, %v626
  %v628 = vpop.f32.mrf.mxu0
  %v629 = vadd.f32 %v117, %v628
  %630 = vmatmul.bf16.gmra.mxu0 %v218
  %v631 = vpop.f32.mrf.mxu0
  %v632 = vadd.f32 %v117, %v631
  %v633 = vpop.f32.mrf.mxu0
  %v634 = vadd.f32 %v117, %v633
  %635 = vdwg.mxu0
  %v636 = vmax.f32 %v230, 0.0
  %v637 = vmax.f32 %v334, 0.0
  %v638 = vmax.f32 %v438, 0.0
  %v639 = vmax.f32 %v542, 0.0
  %v640 = vmax.f32 %v232, 0.0
  %v641 = vmax.f32 %v336, 0.0
  %v642 = vmax.f32 %v440, 0.0
  %v643 = vmax.f32 %v544, 0.0
  %v644 = vmax.f32 %v235, 0.0
  %v645 = vmax.f32 %v339, 0.0
  %v646 = vmax.f32 %v443, 0.0
  %v647 = vmax.f32 %v547, 0.0
  %v648 = vmax.f32 %v237, 0.0
  %v649 = vmax.f32 %v341, 0.0
  %v650 = vmax.f32 %v445, 0.0
  %v651 = vmax.f32 %v549, 0.0
  %v652 = vmax.f32 %v240, 0.0
  %v653 = vmax.f32 %v344, 0.0
  %v654 = vmax.f32 %v448, 0.0
  %v655 = vmax.f32 %v552, 0.0
  %v656 = vmax.f32 %v242, 0.0
  %v657 = vmax.f32 %v346, 0.0
  %v658 = vmax.f32 %v450, 0.0
  %v659 = vmax.f32 %v554, 0.0
  %v660 = vmax.f32 %v245, 0.0
  %v661 = vmax.f32 %v349, 0.0
  %v662 = vmax.f32 %v453, 0.0
  %v663 = vmax.f32 %v557, 0.0
  %v664 = vmax.f32 %v247, 0.0
  %v665 = vmax.f32 %v351, 0.0
  %v666 = vmax.f32 %v455, 0.0
  %v667 = vmax.f32 %v559, 0.0
  %v668 = vmax.f32 %v250, 0.0
  %v669 = vmax.f32 %v354, 0.0
  %v670 = vmax.f32 %v458, 0.0
  %v671 = vmax.f32 %v562, 0.0
  %v672 = vmax.f32 %v252, 0.0
  %v673 = vmax.f32 %v356, 0.0
  %v674 = vmax.f32 %v460, 0.0
  %v675 = vmax.f32 %v564, 0.0
  %v676 = vmax.f32 %v255, 0.0
  %v677 = vmax.f32 %v359, 0.0
  %v678 = vmax.f32 %v463, 0.0
  %v679 = vmax.f32 %v567, 0.0
  %v680 = vmax.f32 %v257, 0.0
  %v681 = vmax.f32 %v361, 0.0
  %v682 = vmax.f32 %v465, 0.0
  %v683 = vmax.f32 %v569, 0.0
  %v684 = vmax.f32 %v260, 0.0
  %v685 = vmax.f32 %v364, 0.0
  %v686 = vmax.f32 %v468, 0.0
  %v687 = vmax.f32 %v572, 0.0
  %v688 = vmax.f32 %v262, 0.0
  %v689 = vmax.f32 %v366, 0.0
  %v690 = vmax.f32 %v470, 0.0
  %v691 = vmax.f32 %v574, 0.0
  %v692 = vmax.f32 %v265, 0.0
  %v693 = vmax.f32 %v369, 0.0
  %v694 = vmax.f32 %v473, 0.0
  %v695 = vmax.f32 %v577, 0.0
  %v696 = vmax.f32 %v267, 0.0
  %v697 = vmax.f32 %v371, 0.0
  %v698 = vmax.f32 %v475, 0.0
  %v699 = vmax.f32 %v579, 0.0
  %v700 = vmax.f32 %v270, 0.0
  %v701 = vmax.f32 %v374, 0.0
  %v702 = vmax.f32 %v478, 0.0
  %v703 = vmax.f32 %v582, 0.0
  %v704 = vmax.f32 %v272, 0.0
  %v705 = vmax.f32 %v376, 0.0
  %v706 = vmax.f32 %v480, 0.0
  %v707 = vmax.f32 %v584, 0.0
  %v708 = vmax.f32 %v275, 0.0
  %v709 = vmax.f32 %v379, 0.0
  %v710 = vmax.f32 %v483, 0.0
  %v711 = vmax.f32 %v587, 0.0
  %v712 = vmax.f32 %v277, 0.0
  %v713 = vmax.f32 %v381, 0.0
  %v714 = vmax.f32 %v485, 0.0
  %v715 = vmax.f32 %v589, 0.0
  %v716 = vmax.f32 %v280, 0.0
  %v717 = vmax.f32 %v384, 0.0
  %v718 = vmax.f32 %v488, 0.0
  %v719 = vmax.f32 %v592, 0.0
  %v720 = vmax.f32 %v282, 0.0
  %v721 = vmax.f32 %v386, 0.0
  %v722 = vmax.f32 %v490, 0.0
  %v723 = vmax.f32 %v594, 0.0
  %v724 = vmax.f32 %v285, 0.0
  %v725 = vmax.f32 %v389, 0.0
  %v726 = vmax.f32 %v493, 0.0
  %v727 = vmax.f32 %v597, 0.0
  %v728 = vmax.f32 %v287, 0.0
  %v729 = vmax.f32 %v391, 0.0
  %v730 = vmax.f32 %v495, 0.0
  %v731 = vmax.f32 %v599, 0.0
  %v732 = vmax.f32 %v290, 0.0
  %v733 = vmax.f32 %v394, 0.0
  %v734 = vmax.f32 %v498, 0.0
  %v735 = vmax.f32 %v602, 0.0
  %v736 = vmax.f32 %v292, 0.0
  %v737 = vmax.f32 %v396, 0.0
  %v738 = vmax.f32 %v500, 0.0
  %v739 = vmax.f32 %v604, 0.0
  %v740 = vmax.f32 %v295, 0.0
  %v741 = vmax.f32 %v399, 0.0
  %v742 = vmax.f32 %v503, 0.0
  %v743 = vmax.f32 %v607, 0.0
  %v744 = vmax.f32 %v297, 0.0
  %v745 = vmax.f32 %v401, 0.0
  %v746 = vmax.f32 %v505, 0.0
  %v747 = vmax.f32 %v609, 0.0
  %v748 = vmax.f32 %v300, 0.0
  %v749 = vmax.f32 %v404, 0.0
  %v750 = vmax.f32 %v508, 0.0
  %v751 = vmax.f32 %v612, 0.0
  %v752 = vmax.f32 %v302, 0.0
  %v753 = vmax.f32 %v406, 0.0
  %v754 = vmax.f32 %v510, 0.0
  %v755 = vmax.f32 %v614, 0.0
  %v756 = vmax.f32 %v305, 0.0
  %v757 = vmax.f32 %v409, 0.0
  %v758 = vmax.f32 %v513, 0.0
  %v759 = vmax.f32 %v617, 0.0
  %v760 = vmax.f32 %v307, 0.0
  %v761 = vmax.f32 %v411, 0.0
  %v762 = vmax.f32 %v515, 0.0
  %v763 = vmax.f32 %v619, 0.0
  %v764 = vmax.f32 %v310, 0.0
  %v765 = vmax.f32 %v414, 0.0
  %v766 = vmax.f32 %v518, 0.0
  %v767 = vmax.f32 %v622, 0.0
  %v768 = vmax.f32 %v312, 0.0
  %v769 = vmax.f32 %v416, 0.0
  %v770 = vmax.f32 %v520, 0.0
  %v771 = vmax.f32 %v624, 0.0
  %v772 = vmax.f32 %v315, 0.0
  %v773 = vmax.f32 %v419, 0.0
  %v774 = vmax.f32 %v523, 0.0
  %v775 = vmax.f32 %v627, 0.0
  %v776 = vmax.f32 %v317, 0.0
  %v777 = vmax.f32 %v421, 0.0
  %v778 = vmax.f32 %v525, 0.0
  %v779 = vmax.f32 %v629, 0.0
  %v780 = vmax.f32 %v320, 0.0
  %v781 = vmax.f32 %v424, 0.0
  %v782 = vmax.f32 %v528, 0.0
  %v783 = vmax.f32 %v632, 0.0
  %v784 = vmax.f32 %v322, 0.0
  %v785 = vmax.f32 %v426, 0.0
  %v786 = vmax.f32 %v530, 0.0
  %v787 = vmax.f32 %v634, 0.0
  %v788 = vpack.c.bf16 %v640, %v636
  %v789 = vpack.c.bf16 %v641, %v637
  %v790 = vpack.c.bf16 %v642, %v638
  %v791 = vpack.c.bf16 %v643, %v639
  %v792 = vpack.c.bf16 %v648, %v644
  %v793 = vpack.c.bf16 %v649, %v645
  %v794 = vpack.c.bf16 %v650, %v646
  %v795 = vpack.c.bf16 %v651, %v647
  %v796 = vpack.c.bf16 %v656, %v652
  %v797 = vpack.c.bf16 %v657, %v653
  %v798 = vpack.c.bf16 %v658, %v654
  %v799 = vpack.c.bf16 %v659, %v655
  %v800 = vpack.c.bf16 %v664, %v660
  %v801 = vpack.c.bf16 %v665, %v661
  %v802 = vpack.c.bf16 %v666, %v662
  %v803 = vpack.c.bf16 %v667, %v663
  %v804 = vpack.c.bf16 %v672, %v668
  %v805 = vpack.c.bf16 %v673, %v669
  %v806 = vpack.c.bf16 %v674, %v670
  %v807 = vpack.c.bf16 %v675, %v671
  %v808 = vpack.c.bf16 %v680, %v676
  %v809 = vpack.c.bf16 %v681, %v677
  %v810 = vpack.c.bf16 %v682, %v678
  %v811 = vpack.c.bf16 %v683, %v679
  %v812 = vpack.c.bf16 %v688, %v684
  %v813 = vpack.c.bf16 %v689, %v685
  %v814 = vpack.c.bf16 %v690, %v686
  %v815 = vpack.c.bf16 %v691, %v687
  %v816 = vpack.c.bf16 %v696, %v692
  %v817 = vpack.c.bf16 %v697, %v693
  %v818 = vpack.c.bf16 %v698, %v694
  %v819 = vpack.c.bf16 %v699, %v695
  %v820 = vpack.c.bf16 %v704, %v700
  %v821 = vpack.c.bf16 %v705, %v701
  %v822 = vpack.c.bf16 %v706, %v702
  %v823 = vpack.c.bf16 %v707, %v703
  %v824 = vpack.c.bf16 %v712, %v708
  %v825 = vpack.c.bf16 %v713, %v709
  %v826 = vpack.c.bf16 %v714, %v710
  %v827 = vpack.c.bf16 %v715, %v711
  %v828 = vpack.c.bf16 %v720, %v716
  %v829 = vpack.c.bf16 %v721, %v717
  %v830 = vpack.c.bf16 %v722, %v718
  %v831 = vpack.c.bf16 %v723, %v719
  %v832 = vpack.c.bf16 %v728, %v724
  %v833 = vpack.c.bf16 %v729, %v725
  %v834 = vpack.c.bf16 %v730, %v726
  %v835 = vpack.c.bf16 %v731, %v727
  %v836 = vpack.c.bf16 %v736, %v732
  %v837 = vpack.c.bf16 %v737, %v733
  %v838 = vpack.c.bf16 %v738, %v734
  %v839 = vpack.c.bf16 %v739, %v735
  %v840 = vpack.c.bf16 %v744, %v740
  %v841 = vpack.c.bf16 %v745, %v741
  %v842 = vpack.c.bf16 %v746, %v742
  %v843 = vpack.c.bf16 %v747, %v743
  %v844 = vpack.c.bf16 %v752, %v748
  %v845 = vpack.c.bf16 %v753, %v749
  %v846 = vpack.c.bf16 %v754, %v750
  %v847 = vpack.c.bf16 %v755, %v751
  %v848 = vpack.c.bf16 %v760, %v756
  %v849 = vpack.c.bf16 %v761, %v757
  %v850 = vpack.c.bf16 %v762, %v758
  %v851 = vpack.c.bf16 %v763, %v759
  %v852 = vpack.c.bf16 %v768, %v764
  %v853 = vpack.c.bf16 %v769, %v765
  %v854 = vpack.c.bf16 %v770, %v766
  %v855 = vpack.c.bf16 %v771, %v767
  %v856 = vpack.c.bf16 %v776, %v772
  %v857 = vpack.c.bf16 %v777, %v773
  %v858 = vpack.c.bf16 %v778, %v774
  %v859 = vpack.c.bf16 %v779, %v775
  %v860 = vpack.c.bf16 %v784, %v780
  %v861 = vpack.c.bf16 %v785, %v781
  %v862 = vpack.c.bf16 %v786, %v782
  %v863 = vpack.c.bf16 %v787, %v783
  %v864 = vld [vmem:[%s4] sm:$0xff]
  %v865 = vld [vmem:[%s4 + $0x8] sm:$0xff]
  %v866 = vld [vmem:[%s4 + $0x10] sm:$0xff]
  %v867 = vld [vmem:[%s4 + $0x18] sm:$0xff]
  %v868 = vld [vmem:[%s4 + $0x20] sm:$0xff]
  %v869 = vld [vmem:[%s4 + $0x28] sm:$0xff]
  %v870 = vld [vmem:[%s4 + $0x30] sm:$0xff]
  %v871 = vld [vmem:[%s4 + $0x38] sm:$0xff]
  %v872 = vld [vmem:[%s4 + $0x40] sm:$0xff]
  %v873 = vld [vmem:[%s4 + $0x48] sm:$0xff]
  %v874 = vld [vmem:[%s4 + $0x50] sm:$0xff]
  %v875 = vld [vmem:[%s4 + $0x58] sm:$0xff]
  %v876 = vld [vmem:[%s4 + $0x60] sm:$0xff]
  %v877 = vld [vmem:[%s4 + $0x68] sm:$0xff]
  %v878 = vld [vmem:[%s4 + $0x70] sm:$0xff]
  %v879 = vld [vmem:[%s4 + $0x78] sm:$0xff]
  %v880 = vld [vmem:[%s4 + $0x80] sm:$0xff]
  %v881 = vld [vmem:[%s4 + $0x88] sm:$0xff]
  %v882 = vld [vmem:[%s4 + $0x90] sm:$0xff]
  %v883 = vld [vmem:[%s4 + $0x98] sm:$0xff]
  %v884 = vld [vmem:[%s4 + $0xa0] sm:$0xff]
  %v885 = vld [vmem:[%s4 + $0xa8] sm:$0xff]
  %v886 = vld [vmem:[%s4 + $0xb0] sm:$0xff]
  %v887 = vld [vmem:[%s4 + $0xb8] sm:$0xff]
  %v888 = vld [vmem:[%s4 + $0xc0] sm:$0xff]
  %v889 = vld [vmem:[%s4 + $0xc8] sm:$0xff]
  %v890 = vld [vmem:[%s4 + $0xd0] sm:$0xff]
  %v891 = vld [vmem:[%s4 + $0xd8] sm:$0xff]
  %v892 = vld [vmem:[%s4 + $0xe0] sm:$0xff]
  %v893 = vld [vmem:[%s4 + $0xe8] sm:$0xff]
  %v894 = vld [vmem:[%s4 + $0xf0] sm:$0xff]
  %v895 = vld [vmem:[%s4 + $0xf8] sm:$0xff]
  %v896 = vld [vmem:[%s4 + $0x100] sm:$0xff]
  %v897 = vld [vmem:[%s4 + $0x108] sm:$0xff]
  %v898 = vld [vmem:[%s4 + $0x110] sm:$0xff]
  %v899 = vld [vmem:[%s4 + $0x118] sm:$0xff]
  %v900 = vld [vmem:[%s4 + $0x120] sm:$0xff]
  %v901 = vld [vmem:[%s4 + $0x128] sm:$0xff]
  %v902 = vld [vmem:[%s4 + $0x130] sm:$0xff]
  %v903 = vld [vmem:[%s4 + $0x138] sm:$0xff]
  %v904 = vld [vmem:[%s4 + $0x140] sm:$0xff]
  %v905 = vld [vmem:[%s4 + $0x148] sm:$0xff]
  %v906 = vld [vmem:[%s4 + $0x150] sm:$0xff]
  %v907 = vld [vmem:[%s4 + $0x158] sm:$0xff]
  %v908 = vld [vmem:[%s4 + $0x160] sm:$0xff]
  %v909 = vld [vmem:[%s4 + $0x168] sm:$0xff]
  %v910 = vld [vmem:[%s4 + $0x170] sm:$0xff]
  %v911 = vld [vmem:[%s4 + $0x178] sm:$0xff]
  %v912 = vld [vmem:[%s4 + $0x180] sm:$0xff]
  %v913 = vld [vmem:[%s4 + $0x188] sm:$0xff]
  %v914 = vld [vmem:[%s4 + $0x190] sm:$0xff]
  %v915 = vld [vmem:[%s4 + $0x198] sm:$0xff]
  %v916 = vld [vmem:[%s4 + $0x1a0] sm:$0xff]
  %v917 = vld [vmem:[%s4 + $0x1a8] sm:$0xff]
  %v918 = vld [vmem:[%s4 + $0x1b0] sm:$0xff]
  %v919 = vld [vmem:[%s4 + $0x1b8] sm:$0xff]
  %v920 = vld [vmem:[%s4 + $0x1c0] sm:$0xff]
  %v921 = vld [vmem:[%s4 + $0x1c8] sm:$0xff]
  %v922 = vld [vmem:[%s4 + $0x1d0] sm:$0xff]
  %v923 = vld [vmem:[%s4 + $0x1d8] sm:$0xff]
  %v924 = vld [vmem:[%s4 + $0x1e0] sm:$0xff]
  %v925 = vld [vmem:[%s4 + $0x1e8] sm:$0xff]
  %v926 = vld [vmem:[%s4 + $0x1f0] sm:$0xff]
  %v927 = vld [vmem:[%s4 + $0x1f8] sm:$0xff]
  %v928 = vld [vmem:[%s1] sm:$0xff]
  %v929 = vld [vmem:[%s1 + $0x8] sm:$0xff]
  %v930 = vld [vmem:[%s1 + $0x10] sm:$0xff]
  %v931 = vld [vmem:[%s1 + $0x18] sm:$0xff]
  %v932 = vld [vmem:[%s1 + $0x20] sm:$0xff]
  %v933 = vld [vmem:[%s1 + $0x28] sm:$0xff]
  %v934 = vld [vmem:[%s1 + $0x30] sm:$0xff]
  %v935 = vld [vmem:[%s1 + $0x38] sm:$0xff]
  %v936 = vld [vmem:[%s1 + $0x40] sm:$0xff]
  %v937 = vld [vmem:[%s1 + $0x48] sm:$0xff]
  %v938 = vld [vmem:[%s1 + $0x50] sm:$0xff]
  %v939 = vld [vmem:[%s1 + $0x58] sm:$0xff]
  %v940 = vld [vmem:[%s1 + $0x60] sm:$0xff]
  %v941 = vld [vmem:[%s1 + $0x68] sm:$0xff]
  %v942 = vld [vmem:[%s1 + $0x70] sm:$0xff]
  %v943 = vld [vmem:[%s1 + $0x78] sm:$0xff]
  %v944 = vld [vmem:[%s1 + $0x80] sm:$0xff]
  %v945 = vld [vmem:[%s1 + $0x88] sm:$0xff]
  %v946 = vld [vmem:[%s1 + $0x90] sm:$0xff]
  %v947 = vld [vmem:[%s1 + $0x98] sm:$0xff]
  %v948 = vld [vmem:[%s1 + $0xa0] sm:$0xff]
  %v949 = vld [vmem:[%s1 + $0xa8] sm:$0xff]
  %v950 = vld [vmem:[%s1 + $0xb0] sm:$0xff]
  %v951 = vld [vmem:[%s1 + $0xb8] sm:$0xff]
  %v952 = vld [vmem:[%s1 + $0xc0] sm:$0xff]
  %v953 = vld [vmem:[%s1 + $0xc8] sm:$0xff]
  %v954 = vld [vmem:[%s1 + $0xd0] sm:$0xff]
  %v955 = vld [vmem:[%s1 + $0xd8] sm:$0xff]
  %v956 = vld [vmem:[%s1 + $0xe0] sm:$0xff]
  %v957 = vld [vmem:[%s1 + $0xe8] sm:$0xff]
  %v958 = vld [vmem:[%s1 + $0xf0] sm:$0xff]
  %v959 = vld [vmem:[%s1 + $0xf8] sm:$0xff]
  %v960 = vld [vmem:[%s1 + $0x100] sm:$0xff]
  %v961 = vld [vmem:[%s1 + $0x108] sm:$0xff]
  %v962 = vld [vmem:[%s1 + $0x110] sm:$0xff]
  %v963 = vld [vmem:[%s1 + $0x118] sm:$0xff]
  %v964 = vld [vmem:[%s1 + $0x120] sm:$0xff]
  %v965 = vld [vmem:[%s1 + $0x128] sm:$0xff]
  %v966 = vpack.c.bf16 %v929, %v928
  %v967 = vpack.c.bf16 %v931, %v930
  %v968 = vpack.c.bf16 %v933, %v932
  %v969 = vpack.c.bf16 %v935, %v934
  %v970 = vpack.c.bf16 %v937, %v936
  %v971 = vpack.c.bf16 %v939, %v938
  %v972 = vpack.c.bf16 %v941, %v940
  %v973 = vpack.c.bf16 %v943, %v942
  %v974 = vpack.c.bf16 %v945, %v944
  %v975 = vpack.c.bf16 %v947, %v946
  %v976 = vpack.c.bf16 %v949, %v948
  %v977 = vpack.c.bf16 %v951, %v950
  %v978 = vpack.c.bf16 %v953, %v952
  %v979 = vpack.c.bf16 %v955, %v954
  %v980 = vpack.c.bf16 %v957, %v956
  %v981 = vpack.c.bf16 %v959, %v958
  %v982 = vpack.c.bf16 %v961, %v960
  %v983 = vpack.c.bf16 %v963, %v962
  %v984 = vpack.c.bf16 %v965, %v964
  %v985 = vld [vmem:[%s5] sm:$0xf]
  %987 = vst [vmem:[#allocation1] ss:$4 sm:$0xff] %v985
  %v988 = vld.sshfl [vmem:[#allocation1] sm:$0xff pattern:$0x73625140]
  %v989 = vld.sshfl [vmem:[#allocation1 + $0x8] sm:$0xff pattern:$0x73625140]
  %vm990 = vcmask 31744
  %v992 = vsel %vm990, %v966, 0
  %v995 = vsel %vm990, %v967, 0
  %v998 = vsel %vm990, %v968, 0
  %v1001 = vsel %vm990, %v969, 0
  %v1004 = vsel %vm990, %v970, 0
  %v1007 = vsel %vm990, %v971, 0
  %v1010 = vsel %vm990, %v972, 0
  %v1013 = vsel %vm990, %v973, 0
  %v1016 = vsel %vm990, %v974, 0
  %v1019 = vsel %vm990, %v975, 0
  %v1022 = vsel %vm990, %v976, 0
  %v1025 = vsel %vm990, %v977, 0
  %v1028 = vsel %vm990, %v978, 0
  %v1031 = vsel %vm990, %v979, 0
  %v1034 = vsel %vm990, %v980, 0
  %v1037 = vsel %vm990, %v981, 0
  %v1040 = vsel %vm990, %v982, 0
  %v1043 = vsel %vm990, %v983, 0
  %v1046 = vsel %vm990, %v984, 0
  %vm1048 = vcmask 1041408
  %v1049 = vsel %vm1048, %v988, 0
  %v1051 = vsel %vm1048, %v989, 0
  %1053 = vmatpush.bf16.msra.mxu0 0
  %1054 = vmatpush.bf16.msra.mxu0 0
  %1055 = vmatpush.bf16.msra.mxu0 0
  %1056 = vmatpush.bf16.msra.mxu0 0
  %1057 = vmatpush.bf16.msra.mxu0 0
  %1058 = vmatpush.bf16.msra.mxu0 0
  %1059 = vmatpush.bf16.msra.mxu0 0
  %1060 = vmatpush.bf16.msra.mxu0 %v1049
  %1061 = vmatmul.bf16.gmra.mxu0 %v992
  %v1062 = vpop.f32.mrf.mxu0
  %v1063 = vadd.f32 0.0, %v1062
  %v1064 = vpop.f32.mrf.mxu0
  %v1065 = vadd.f32 0.0, %v1064
  %1066 = vmatmul.bf16.gmra.mxu0 %v995
  %v1067 = vpop.f32.mrf.mxu0
  %v1068 = vadd.f32 0.0, %v1067
  %v1069 = vpop.f32.mrf.mxu0
  %v1070 = vadd.f32 0.0, %v1069
  %1071 = vmatmul.bf16.gmra.mxu0 %v998
  %v1072 = vpop.f32.mrf.mxu0
  %v1073 = vadd.f32 0.0, %v1072
  %v1074 = vpop.f32.mrf.mxu0
  %v1075 = vadd.f32 0.0, %v1074
  %1076 = vmatmul.bf16.gmra.mxu0 %v1001
  %v1077 = vpop.f32.mrf.mxu0
  %v1078 = vadd.f32 0.0, %v1077
  %v1079 = vpop.f32.mrf.mxu0
  %v1080 = vadd.f32 0.0, %v1079
  %1081 = vmatmul.bf16.gmra.mxu0 %v1004
  %v1082 = vpop.f32.mrf.mxu0
  %v1083 = vadd.f32 0.0, %v1082
  %v1084 = vpop.f32.mrf.mxu0
  %v1085 = vadd.f32 0.0, %v1084
  %1086 = vmatmul.bf16.gmra.mxu0 %v1007
  %v1087 = vpop.f32.mrf.mxu0
  %v1088 = vadd.f32 0.0, %v1087
  %v1089 = vpop.f32.mrf.mxu0
  %v1090 = vadd.f32 0.0, %v1089
  %1091 = vmatmul.bf16.gmra.mxu0 %v1010
  %v1092 = vpop.f32.mrf.mxu0
  %v1093 = vadd.f32 0.0, %v1092
  %v1094 = vpop.f32.mrf.mxu0
  %v1095 = vadd.f32 0.0, %v1094
  %1096 = vmatmul.bf16.gmra.mxu0 %v1013
  %v1097 = vpop.f32.mrf.mxu0
  %v1098 = vadd.f32 0.0, %v1097
  %v1099 = vpop.f32.mrf.mxu0
  %v1100 = vadd.f32 0.0, %v1099
  %1101 = vmatmul.bf16.gmra.mxu0 %v1016
  %v1102 = vpop.f32.mrf.mxu0
  %v1103 = vadd.f32 0.0, %v1102
  %v1104 = vpop.f32.mrf.mxu0
  %v1105 = vadd.f32 0.0, %v1104
  %1106 = vmatmul.bf16.gmra.mxu0 %v1019
  %v1107 = vpop.f32.mrf.mxu0
  %v1108 = vadd.f32 0.0, %v1107
  %v1109 = vpop.f32.mrf.mxu0
  %v1110 = vadd.f32 0.0, %v1109
  %1111 = vmatmul.bf16.gmra.mxu0 %v1022
  %v1112 = vpop.f32.mrf.mxu0
  %v1113 = vadd.f32 0.0, %v1112
  %v1114 = vpop.f32.mrf.mxu0
  %v1115 = vadd.f32 0.0, %v1114
  %1116 = vmatmul.bf16.gmra.mxu0 %v1025
  %v1117 = vpop.f32.mrf.mxu0
  %v1118 = vadd.f32 0.0, %v1117
  %v1119 = vpop.f32.mrf.mxu0
  %v1120 = vadd.f32 0.0, %v1119
  %1121 = vmatmul.bf16.gmra.mxu0 %v1028
  %v1122 = vpop.f32.mrf.mxu0
  %v1123 = vadd.f32 0.0, %v1122
  %v1124 = vpop.f32.mrf.mxu0
  %v1125 = vadd.f32 0.0, %v1124
  %1126 = vmatmul.bf16.gmra.mxu0 %v1031
  %v1127 = vpop.f32.mrf.mxu0
  %v1128 = vadd.f32 0.0, %v1127
  %v1129 = vpop.f32.mrf.mxu0
  %v1130 = vadd.f32 0.0, %v1129
  %1131 = vmatmul.bf16.gmra.mxu0 %v1034
  %v1132 = vpop.f32.mrf.mxu0
  %v1133 = vadd.f32 0.0, %v1132
  %v1134 = vpop.f32.mrf.mxu0
  %v1135 = vadd.f32 0.0, %v1134
  %1136 = vmatmul.bf16.gmra.mxu0 %v1037
  %v1137 = vpop.f32.mrf.mxu0
  %v1138 = vadd.f32 0.0, %v1137
  %v1139 = vpop.f32.mrf.mxu0
  %v1140 = vadd.f32 0.0, %v1139
  %1141 = vmatmul.bf16.gmra.mxu0 %v1040
  %v1142 = vpop.f32.mrf.mxu0
  %v1143 = vadd.f32 0.0, %v1142
  %v1144 = vpop.f32.mrf.mxu0
  %v1145 = vadd.f32 0.0, %v1144
  %1146 = vmatmul.bf16.gmra.mxu0 %v1043
  %v1147 = vpop.f32.mrf.mxu0
  %v1148 = vadd.f32 0.0, %v1147
  %v1149 = vpop.f32.mrf.mxu0
  %v1150 = vadd.f32 0.0, %v1149
  %1151 = vmatmul.bf16.gmra.mxu0 %v1046
  %v1152 = vpop.f32.mrf.mxu0
  %v1153 = vadd.f32 0.0, %v1152
  %v1154 = vpop.f32.mrf.mxu0
  %v1155 = vadd.f32 0.0, %v1154
  %1156 = vdwg.mxu0
  %1157 = vmatpush.bf16.msra.mxu0 0
  %1158 = vmatpush.bf16.msra.mxu0 0
  %1159 = vmatpush.bf16.msra.mxu0 0
  %1160 = vmatpush.bf16.msra.mxu0 0
  %1161 = vmatpush.bf16.msra.mxu0 0
  %1162 = vmatpush.bf16.msra.mxu0 0
  %1163 = vmatpush.bf16.msra.mxu0 0
  %1164 = vmatpush.bf16.msra.mxu0 %v1051
  %1165 = vmatmul.bf16.gmra.mxu0 %v992
  %v1166 = vpop.f32.mrf.mxu0
  %v1167 = vadd.f32 0.0, %v1166
  %v1168 = vpop.f32.mrf.mxu0
  %v1169 = vadd.f32 0.0, %v1168
  %1170 = vmatmul.bf16.gmra.mxu0 %v995
  %v1171 = vpop.f32.mrf.mxu0
  %v1172 = vadd.f32 0.0, %v1171
  %v1173 = vpop.f32.mrf.mxu0
  %v1174 = vadd.f32 0.0, %v1173
  %1175 = vmatmul.bf16.gmra.mxu0 %v998
  %v1176 = vpop.f32.mrf.mxu0
  %v1177 = vadd.f32 0.0, %v1176
  %v1178 = vpop.f32.mrf.mxu0
  %v1179 = vadd.f32 0.0, %v1178
  %1180 = vmatmul.bf16.gmra.mxu0 %v1001
  %v1181 = vpop.f32.mrf.mxu0
  %v1182 = vadd.f32 0.0, %v1181
  %v1183 = vpop.f32.mrf.mxu0
  %v1184 = vadd.f32 0.0, %v1183
  %1185 = vmatmul.bf16.gmra.mxu0 %v1004
  %v1186 = vpop.f32.mrf.mxu0
  %v1187 = vadd.f32 0.0, %v1186
  %v1188 = vpop.f32.mrf.mxu0
  %v1189 = vadd.f32 0.0, %v1188
  %1190 = vmatmul.bf16.gmra.mxu0 %v1007
  %v1191 = vpop.f32.mrf.mxu0
  %v1192 = vadd.f32 0.0, %v1191
  %v1193 = vpop.f32.mrf.mxu0
  %v1194 = vadd.f32 0.0, %v1193
  %1195 = vmatmul.bf16.gmra.mxu0 %v1010
  %v1196 = vpop.f32.mrf.mxu0
  %v1197 = vadd.f32 0.0, %v1196
  %v1198 = vpop.f32.mrf.mxu0
  %v1199 = vadd.f32 0.0, %v1198
  %1200 = vmatmul.bf16.gmra.mxu0 %v1013
  %v1201 = vpop.f32.mrf.mxu0
  %v1202 = vadd.f32 0.0, %v1201
  %v1203 = vpop.f32.mrf.mxu0
  %v1204 = vadd.f32 0.0, %v1203
  %1205 = vmatmul.bf16.gmra.mxu0 %v1016
  %v1206 = vpop.f32.mrf.mxu0
  %v1207 = vadd.f32 0.0, %v1206
  %v1208 = vpop.f32.mrf.mxu0
  %v1209 = vadd.f32 0.0, %v1208
  %1210 = vmatmul.bf16.gmra.mxu0 %v1019
  %v1211 = vpop.f32.mrf.mxu0
  %v1212 = vadd.f32 0.0, %v1211
  %v1213 = vpop.f32.mrf.mxu0
  %v1214 = vadd.f32 0.0, %v1213
  %1215 = vmatmul.bf16.gmra.mxu0 %v1022
  %v1216 = vpop.f32.mrf.mxu0
  %v1217 = vadd.f32 0.0, %v1216
  %v1218 = vpop.f32.mrf.mxu0
  %v1219 = vadd.f32 0.0, %v1218
  %1220 = vmatmul.bf16.gmra.mxu0 %v1025
  %v1221 = vpop.f32.mrf.mxu0
  %v1222 = vadd.f32 0.0, %v1221
  %v1223 = vpop.f32.mrf.mxu0
  %v1224 = vadd.f32 0.0, %v1223
  %1225 = vmatmul.bf16.gmra.mxu0 %v1028
  %v1226 = vpop.f32.mrf.mxu0
  %v1227 = vadd.f32 0.0, %v1226
  %v1228 = vpop.f32.mrf.mxu0
  %v1229 = vadd.f32 0.0, %v1228
  %1230 = vmatmul.bf16.gmra.mxu0 %v1031
  %v1231 = vpop.f32.mrf.mxu0
  %v1232 = vadd.f32 0.0, %v1231
  %v1233 = vpop.f32.mrf.mxu0
  %v1234 = vadd.f32 0.0, %v1233
  %1235 = vmatmul.bf16.gmra.mxu0 %v1034
  %v1236 = vpop.f32.mrf.mxu0
  %v1237 = vadd.f32 0.0, %v1236
  %v1238 = vpop.f32.mrf.mxu0
  %v1239 = vadd.f32 0.0, %v1238
  %1240 = vmatmul.bf16.gmra.mxu0 %v1037
  %v1241 = vpop.f32.mrf.mxu0
  %v1242 = vadd.f32 0.0, %v1241
  %v1243 = vpop.f32.mrf.mxu0
  %v1244 = vadd.f32 0.0, %v1243
  %1245 = vmatmul.bf16.gmra.mxu0 %v1040
  %v1246 = vpop.f32.mrf.mxu0
  %v1247 = vadd.f32 0.0, %v1246
  %v1248 = vpop.f32.mrf.mxu0
  %v1249 = vadd.f32 0.0, %v1248
  %1250 = vmatmul.bf16.gmra.mxu0 %v1043
  %v1251 = vpop.f32.mrf.mxu0
  %v1252 = vadd.f32 0.0, %v1251
  %v1253 = vpop.f32.mrf.mxu0
  %v1254 = vadd.f32 0.0, %v1253
  %1255 = vmatmul.bf16.gmra.mxu0 %v1046
  %v1256 = vpop.f32.mrf.mxu0
  %v1257 = vadd.f32 0.0, %v1256
  %v1258 = vpop.f32.mrf.mxu0
  %v1259 = vadd.f32 0.0, %v1258
  %1260 = vdwg.mxu0
  %v1325 = vunpack.c.l.b16 %v864
  %v1326 = vunpack.c.h.b16 %v864
  %v1327 = vunpack.c.l.b16 %v865
  %v1328 = vunpack.c.h.b16 %v865
  %v1329 = vunpack.c.l.b16 %v866
  %v1330 = vunpack.c.h.b16 %v866
  %v1331 = vunpack.c.l.b16 %v867
  %v1332 = vunpack.c.h.b16 %v867
  %v1333 = vunpack.c.l.b16 %v868
  %v1334 = vunpack.c.h.b16 %v868
  %v1335 = vunpack.c.l.b16 %v869
  %v1336 = vunpack.c.h.b16 %v869
  %v1337 = vunpack.c.l.b16 %v870
  %v1338 = vunpack.c.h.b16 %v870
  %v1339 = vunpack.c.l.b16 %v871
  %v1340 = vunpack.c.h.b16 %v871
  %v1341 = vunpack.c.l.b16 %v872
  %v1342 = vunpack.c.h.b16 %v872
  %v1343 = vunpack.c.l.b16 %v873
  %v1344 = vunpack.c.h.b16 %v873
  %v1345 = vunpack.c.l.b16 %v874
  %v1346 = vunpack.c.h.b16 %v874
  %v1347 = vunpack.c.l.b16 %v875
  %v1348 = vunpack.c.h.b16 %v875
  %v1349 = vunpack.c.l.b16 %v876
  %v1350 = vunpack.c.h.b16 %v876
  %v1351 = vunpack.c.l.b16 %v877
  %v1352 = vunpack.c.h.b16 %v877
  %v1353 = vunpack.c.l.b16 %v878
  %v1354 = vunpack.c.h.b16 %v878
  %v1355 = vunpack.c.l.b16 %v879
  %v1356 = vunpack.c.h.b16 %v879
  %v1357 = vunpack.c.l.b16 %v880
  %v1358 = vunpack.c.h.b16 %v880
  %v1359 = vunpack.c.l.b16 %v881
  %v1360 = vunpack.c.h.b16 %v881
  %v1361 = vunpack.c.l.b16 %v882
  %v1362 = vunpack.c.h.b16 %v882
  %v1363 = vunpack.c.l.b16 %v883
  %v1364 = vunpack.c.h.b16 %v883
  %v1365 = vunpack.c.l.b16 %v884
  %v1366 = vunpack.c.h.b16 %v884
  %v1367 = vunpack.c.l.b16 %v885
  %v1368 = vunpack.c.h.b16 %v885
  %v1369 = vunpack.c.l.b16 %v886
  %v1370 = vunpack.c.h.b16 %v886
  %v1371 = vunpack.c.l.b16 %v887
  %v1372 = vunpack.c.h.b16 %v887
  %v1373 = vunpack.c.l.b16 %v888
  %v1374 = vunpack.c.h.b16 %v888
  %v1375 = vunpack.c.l.b16 %v889
  %v1376 = vunpack.c.h.b16 %v889
  %v1377 = vunpack.c.l.b16 %v890
  %v1378 = vunpack.c.h.b16 %v890
  %v1379 = vunpack.c.l.b16 %v891
  %v1380 = vunpack.c.h.b16 %v891
  %v1381 = vunpack.c.l.b16 %v892
  %v1382 = vunpack.c.h.b16 %v892
  %v1383 = vunpack.c.l.b16 %v893
  %v1384 = vunpack.c.h.b16 %v893
  %v1385 = vunpack.c.l.b16 %v894
  %v1386 = vunpack.c.h.b16 %v894
  %v1387 = vunpack.c.l.b16 %v895
  %v1388 = vunpack.c.h.b16 %v895
  %v1389 = vunpack.c.l.b16 %v896
  %v1390 = vunpack.c.h.b16 %v896
  %v1391 = vunpack.c.l.b16 %v897
  %v1392 = vunpack.c.h.b16 %v897
  %v1393 = vunpack.c.l.b16 %v898
  %v1394 = vunpack.c.h.b16 %v898
  %v1395 = vunpack.c.l.b16 %v899
  %v1396 = vunpack.c.h.b16 %v899
  %v1397 = vunpack.c.l.b16 %v900
  %v1398 = vunpack.c.h.b16 %v900
  %v1399 = vunpack.c.l.b16 %v901
  %v1400 = vunpack.c.h.b16 %v901
  %v1401 = vunpack.c.l.b16 %v902
  %v1402 = vunpack.c.h.b16 %v902
  %v1403 = vunpack.c.l.b16 %v903
  %v1404 = vunpack.c.h.b16 %v903
  %v1405 = vunpack.c.l.b16 %v904
  %v1406 = vunpack.c.h.b16 %v904
  %v1407 = vunpack.c.l.b16 %v905
  %v1408 = vunpack.c.h.b16 %v905
  %v1409 = vunpack.c.l.b16 %v906
  %v1410 = vunpack.c.h.b16 %v906
  %v1411 = vunpack.c.l.b16 %v907
  %v1412 = vunpack.c.h.b16 %v907
  %v1413 = vunpack.c.l.b16 %v908
  %v1414 = vunpack.c.h.b16 %v908
  %v1415 = vunpack.c.l.b16 %v909
  %v1416 = vunpack.c.h.b16 %v909
  %v1417 = vunpack.c.l.b16 %v910
  %v1418 = vunpack.c.h.b16 %v910
  %v1419 = vunpack.c.l.b16 %v911
  %v1420 = vunpack.c.h.b16 %v911
  %v1421 = vunpack.c.l.b16 %v912
  %v1422 = vunpack.c.h.b16 %v912
  %v1423 = vunpack.c.l.b16 %v913
  %v1424 = vunpack.c.h.b16 %v913
  %v1425 = vunpack.c.l.b16 %v914
  %v1426 = vunpack.c.h.b16 %v914
  %v1427 = vunpack.c.l.b16 %v915
  %v1428 = vunpack.c.h.b16 %v915
  %v1429 = vunpack.c.l.b16 %v916
  %v1430 = vunpack.c.h.b16 %v916
  %v1431 = vunpack.c.l.b16 %v917
  %v1432 = vunpack.c.h.b16 %v917
  %v1433 = vunpack.c.l.b16 %v918
  %v1434 = vunpack.c.h.b16 %v918
  %v1435 = vunpack.c.l.b16 %v919
  %v1436 = vunpack.c.h.b16 %v919
  %v1437 = vunpack.c.l.b16 %v920
  %v1438 = vunpack.c.h.b16 %v920
  %v1439 = vunpack.c.l.b16 %v921
  %v1440 = vunpack.c.h.b16 %v921
  %v1441 = vunpack.c.l.b16 %v922
  %v1442 = vunpack.c.h.b16 %v922
  %v1443 = vunpack.c.l.b16 %v923
  %v1444 = vunpack.c.h.b16 %v923
  %v1445 = vunpack.c.l.b16 %v924
  %v1446 = vunpack.c.h.b16 %v924
  %v1447 = vunpack.c.l.b16 %v925
  %v1448 = vunpack.c.h.b16 %v925
  %v1449 = vunpack.c.l.b16 %v926
  %v1450 = vunpack.c.h.b16 %v926
  %v1451 = vunpack.c.l.b16 %v927
  %v1452 = vunpack.c.h.b16 %v927
  %v1453 = vpack.c.b16 %v1327, %v1325
  %v1454 = vpack.c.b16 %v1328, %v1326
  %v1455 = vpack.c.b16 %v1331, %v1329
  %v1456 = vpack.c.b16 %v1332, %v1330
  %v1457 = vpack.c.b16 %v1335, %v1333
  %v1458 = vpack.c.b16 %v1336, %v1334
  %v1459 = vpack.c.b16 %v1339, %v1337
  %v1460 = vpack.c.b16 %v1340, %v1338
  %v1461 = vpack.c.b16 %v1343, %v1341
  %v1462 = vpack.c.b16 %v1344, %v1342
  %v1463 = vpack.c.b16 %v1347, %v1345
  %v1464 = vpack.c.b16 %v1348, %v1346
  %v1465 = vpack.c.b16 %v1351, %v1349
  %v1466 = vpack.c.b16 %v1352, %v1350
  %v1467 = vpack.c.b16 %v1355, %v1353
  %v1468 = vpack.c.b16 %v1356, %v1354
  %v1469 = vpack.c.b16 %v1359, %v1357
  %v1470 = vpack.c.b16 %v1360, %v1358
  %v1471 = vpack.c.b16 %v1363, %v1361
  %v1472 = vpack.c.b16 %v1364, %v1362
  %v1473 = vpack.c.b16 %v1367, %v1365
  %v1474 = vpack.c.b16 %v1368, %v1366
  %v1475 = vpack.c.b16 %v1371, %v1369
  %v1476 = vpack.c.b16 %v1372, %v1370
  %v1477 = vpack.c.b16 %v1375, %v1373
  %v1478 = vpack.c.b16 %v1376, %v1374
  %v1479 = vpack.c.b16 %v1379, %v1377
  %v1480 = vpack.c.b16 %v1380, %v1378
  %v1481 = vpack.c.b16 %v1383, %v1381
  %v1482 = vpack.c.b16 %v1384, %v1382
  %v1483 = vpack.c.b16 %v1387, %v1385
  %v1484 = vpack.c.b16 %v1388, %v1386
  %v1485 = vpack.c.b16 %v1391, %v1389
  %v1486 = vpack.c.b16 %v1392, %v1390
  %v1487 = vpack.c.b16 %v1395, %v1393
  %v1488 = vpack.c.b16 %v1396, %v1394
  %v1489 = vpack.c.b16 %v1399, %v1397
  %v1490 = vpack.c.b16 %v1400, %v1398
  %v1491 = vpack.c.b16 %v1403, %v1401
  %v1492 = vpack.c.b16 %v1404, %v1402
  %v1493 = vpack.c.b16 %v1407, %v1405
  %v1494 = vpack.c.b16 %v1408, %v1406
  %v1495 = vpack.c.b16 %v1411, %v1409
  %v1496 = vpack.c.b16 %v1412, %v1410
  %v1497 = vpack.c.b16 %v1415, %v1413
  %v1498 = vpack.c.b16 %v1416, %v1414
  %v1499 = vpack.c.b16 %v1419, %v1417
  %v1500 = vpack.c.b16 %v1420, %v1418
  %v1501 = vpack.c.b16 %v1423, %v1421
  %v1502 = vpack.c.b16 %v1424, %v1422
  %v1503 = vpack.c.b16 %v1427, %v1425
  %v1504 = vpack.c.b16 %v1428, %v1426
  %v1505 = vpack.c.b16 %v1431, %v1429
  %v1506 = vpack.c.b16 %v1432, %v1430
  %v1507 = vpack.c.b16 %v1435, %v1433
  %v1508 = vpack.c.b16 %v1436, %v1434
  %v1509 = vpack.c.b16 %v1439, %v1437
  %v1510 = vpack.c.b16 %v1440, %v1438
  %v1511 = vpack.c.b16 %v1443, %v1441
  %v1512 = vpack.c.b16 %v1444, %v1442
  %v1513 = vpack.c.b16 %v1447, %v1445
  %v1514 = vpack.c.b16 %v1448, %v1446
  %v1515 = vpack.c.b16 %v1451, %v1449
  %v1516 = vpack.c.b16 %v1452, %v1450
  %1581 = vmatpush.bf16.msra.mxu0 %v1467
  %1582 = vmatpush.bf16.msra.mxu0 %v1465
  %1583 = vmatpush.bf16.msra.mxu0 %v1463
  %1584 = vmatpush.bf16.msra.mxu0 %v1461
  %1585 = vmatpush.bf16.msra.mxu0 %v1459
  %1586 = vmatpush.bf16.msra.mxu0 %v1457
  %1587 = vmatpush.bf16.msra.mxu0 %v1455
  %1588 = vmatpush.bf16.msra.mxu0 %v1453
  %1589 = vmatmul.bf16.gmra.mxu0 %v788
  %v1590 = vpop.f32.mrf.mxu0
  %v1591 = vadd.f32 %v1063, %v1590
  %v1592 = vpop.f32.mrf.mxu0
  %v1593 = vadd.f32 %v1065, %v1592
  %1594 = vmatmul.bf16.gmra.mxu0 %v792
  %v1595 = vpop.f32.mrf.mxu0
  %v1596 = vadd.f32 %v1068, %v1595
  %v1597 = vpop.f32.mrf.mxu0
  %v1598 = vadd.f32 %v1070, %v1597
  %1599 = vmatmul.bf16.gmra.mxu0 %v796
  %v1600 = vpop.f32.mrf.mxu0
  %v1601 = vadd.f32 %v1073, %v1600
  %v1602 = vpop.f32.mrf.mxu0
  %v1603 = vadd.f32 %v1075, %v1602
  %1604 = vmatmul.bf16.gmra.mxu0 %v800
  %v1605 = vpop.f32.mrf.mxu0
  %v1606 = vadd.f32 %v1078, %v1605
  %v1607 = vpop.f32.mrf.mxu0
  %v1608 = vadd.f32 %v1080, %v1607
  %1609 = vmatmul.bf16.gmra.mxu0 %v804
  %v1610 = vpop.f32.mrf.mxu0
  %v1611 = vadd.f32 %v1083, %v1610
  %v1612 = vpop.f32.mrf.mxu0
  %v1613 = vadd.f32 %v1085, %v1612
  %1614 = vmatmul.bf16.gmra.mxu0 %v808
  %v1615 = vpop.f32.mrf.mxu0
  %v1616 = vadd.f32 %v1088, %v1615
  %v1617 = vpop.f32.mrf.mxu0
  %v1618 = vadd.f32 %v1090, %v1617
  %1619 = vmatmul.bf16.gmra.mxu0 %v812
  %v1620 = vpop.f32.mrf.mxu0
  %v1621 = vadd.f32 %v1093, %v1620
  %v1622 = vpop.f32.mrf.mxu0
  %v1623 = vadd.f32 %v1095, %v1622
  %1624 = vmatmul.bf16.gmra.mxu0 %v816
  %v1625 = vpop.f32.mrf.mxu0
  %v1626 = vadd.f32 %v1098, %v1625
  %v1627 = vpop.f32.mrf.mxu0
  %v1628 = vadd.f32 %v1100, %v1627
  %1629 = vmatmul.bf16.gmra.mxu0 %v820
  %v1630 = vpop.f32.mrf.mxu0
  %v1631 = vadd.f32 %v1103, %v1630
  %v1632 = vpop.f32.mrf.mxu0
  %v1633 = vadd.f32 %v1105, %v1632
  %1634 = vmatmul.bf16.gmra.mxu0 %v824
  %v1635 = vpop.f32.mrf.mxu0
  %v1636 = vadd.f32 %v1108, %v1635
  %v1637 = vpop.f32.mrf.mxu0
  %v1638 = vadd.f32 %v1110, %v1637
  %1639 = vmatmul.bf16.gmra.mxu0 %v828
  %v1640 = vpop.f32.mrf.mxu0
  %v1641 = vadd.f32 %v1113, %v1640
  %v1642 = vpop.f32.mrf.mxu0
  %v1643 = vadd.f32 %v1115, %v1642
  %1644 = vmatmul.bf16.gmra.mxu0 %v832
  %v1645 = vpop.f32.mrf.mxu0
  %v1646 = vadd.f32 %v1118, %v1645
  %v1647 = vpop.f32.mrf.mxu0
  %v1648 = vadd.f32 %v1120, %v1647
  %1649 = vmatmul.bf16.gmra.mxu0 %v836
  %v1650 = vpop.f32.mrf.mxu0
  %v1651 = vadd.f32 %v1123, %v1650
  %v1652 = vpop.f32.mrf.mxu0
  %v1653 = vadd.f32 %v1125, %v1652
  %1654 = vmatmul.bf16.gmra.mxu0 %v840
  %v1655 = vpop.f32.mrf.mxu0
  %v1656 = vadd.f32 %v1128, %v1655
  %v1657 = vpop.f32.mrf.mxu0
  %v1658 = vadd.f32 %v1130, %v1657
  %1659 = vmatmul.bf16.gmra.mxu0 %v844
  %v1660 = vpop.f32.mrf.mxu0
  %v1661 = vadd.f32 %v1133, %v1660
  %v1662 = vpop.f32.mrf.mxu0
  %v1663 = vadd.f32 %v1135, %v1662
  %1664 = vmatmul.bf16.gmra.mxu0 %v848
  %v1665 = vpop.f32.mrf.mxu0
  %v1666 = vadd.f32 %v1138, %v1665
  %v1667 = vpop.f32.mrf.mxu0
  %v1668 = vadd.f32 %v1140, %v1667
  %1669 = vmatmul.bf16.gmra.mxu0 %v852
  %v1670 = vpop.f32.mrf.mxu0
  %v1671 = vadd.f32 %v1143, %v1670
  %v1672 = vpop.f32.mrf.mxu0
  %v1673 = vadd.f32 %v1145, %v1672
  %1674 = vmatmul.bf16.gmra.mxu0 %v856
  %v1675 = vpop.f32.mrf.mxu0
  %v1676 = vadd.f32 %v1148, %v1675
  %v1677 = vpop.f32.mrf.mxu0
  %v1678 = vadd.f32 %v1150, %v1677
  %1679 = vmatmul.bf16.gmra.mxu0 %v860
  %v1680 = vpop.f32.mrf.mxu0
  %v1681 = vadd.f32 %v1153, %v1680
  %v1682 = vpop.f32.mrf.mxu0
  %v1683 = vadd.f32 %v1155, %v1682
  %1684 = vdwg.mxu0
  %1685 = vmatpush.bf16.msra.mxu0 %v1483
  %1686 = vmatpush.bf16.msra.mxu0 %v1481
  %1687 = vmatpush.bf16.msra.mxu0 %v1479
  %1688 = vmatpush.bf16.msra.mxu0 %v1477
  %1689 = vmatpush.bf16.msra.mxu0 %v1475
  %1690 = vmatpush.bf16.msra.mxu0 %v1473
  %1691 = vmatpush.bf16.msra.mxu0 %v1471
  %1692 = vmatpush.bf16.msra.mxu0 %v1469
  %1693 = vmatmul.bf16.gmra.mxu0 %v789
  %v1694 = vpop.f32.mrf.mxu0
  %v1695 = vadd.f32 %v1591, %v1694
  %v1696 = vpop.f32.mrf.mxu0
  %v1697 = vadd.f32 %v1593, %v1696
  %1698 = vmatmul.bf16.gmra.mxu0 %v793
  %v1699 = vpop.f32.mrf.mxu0
  %v1700 = vadd.f32 %v1596, %v1699
  %v1701 = vpop.f32.mrf.mxu0
  %v1702 = vadd.f32 %v1598, %v1701
  %1703 = vmatmul.bf16.gmra.mxu0 %v797
  %v1704 = vpop.f32.mrf.mxu0
  %v1705 = vadd.f32 %v1601, %v1704
  %v1706 = vpop.f32.mrf.mxu0
  %v1707 = vadd.f32 %v1603, %v1706
  %1708 = vmatmul.bf16.gmra.mxu0 %v801
  %v1709 = vpop.f32.mrf.mxu0
  %v1710 = vadd.f32 %v1606, %v1709
  %v1711 = vpop.f32.mrf.mxu0
  %v1712 = vadd.f32 %v1608, %v1711
  %1713 = vmatmul.bf16.gmra.mxu0 %v805
  %v1714 = vpop.f32.mrf.mxu0
  %v1715 = vadd.f32 %v1611, %v1714
  %v1716 = vpop.f32.mrf.mxu0
  %v1717 = vadd.f32 %v1613, %v1716
  %1718 = vmatmul.bf16.gmra.mxu0 %v809
  %v1719 = vpop.f32.mrf.mxu0
  %v1720 = vadd.f32 %v1616, %v1719
  %v1721 = vpop.f32.mrf.mxu0
  %v1722 = vadd.f32 %v1618, %v1721
  %1723 = vmatmul.bf16.gmra.mxu0 %v813
  %v1724 = vpop.f32.mrf.mxu0
  %v1725 = vadd.f32 %v1621, %v1724
  %v1726 = vpop.f32.mrf.mxu0
  %v1727 = vadd.f32 %v1623, %v1726
  %1728 = vmatmul.bf16.gmra.mxu0 %v817
  %v1729 = vpop.f32.mrf.mxu0
  %v1730 = vadd.f32 %v1626, %v1729
  %v1731 = vpop.f32.mrf.mxu0
  %v1732 = vadd.f32 %v1628, %v1731
  %1733 = vmatmul.bf16.gmra.mxu0 %v821
  %v1734 = vpop.f32.mrf.mxu0
  %v1735 = vadd.f32 %v1631, %v1734
  %v1736 = vpop.f32.mrf.mxu0
  %v1737 = vadd.f32 %v1633, %v1736
  %1738 = vmatmul.bf16.gmra.mxu0 %v825
  %v1739 = vpop.f32.mrf.mxu0
  %v1740 = vadd.f32 %v1636, %v1739
  %v1741 = vpop.f32.mrf.mxu0
  %v1742 = vadd.f32 %v1638, %v1741
  %1743 = vmatmul.bf16.gmra.mxu0 %v829
  %v1744 = vpop.f32.mrf.mxu0
  %v1745 = vadd.f32 %v1641, %v1744
  %v1746 = vpop.f32.mrf.mxu0
  %v1747 = vadd.f32 %v1643, %v1746
  %1748 = vmatmul.bf16.gmra.mxu0 %v833
  %v1749 = vpop.f32.mrf.mxu0
  %v1750 = vadd.f32 %v1646, %v1749
  %v1751 = vpop.f32.mrf.mxu0
  %v1752 = vadd.f32 %v1648, %v1751
  %1753 = vmatmul.bf16.gmra.mxu0 %v837
  %v1754 = vpop.f32.mrf.mxu0
  %v1755 = vadd.f32 %v1651, %v1754
  %v1756 = vpop.f32.mrf.mxu0
  %v1757 = vadd.f32 %v1653, %v1756
  %1758 = vmatmul.bf16.gmra.mxu0 %v841
  %v1759 = vpop.f32.mrf.mxu0
  %v1760 = vadd.f32 %v1656, %v1759
  %v1761 = vpop.f32.mrf.mxu0
  %v1762 = vadd.f32 %v1658, %v1761
  %1763 = vmatmul.bf16.gmra.mxu0 %v845
  %v1764 = vpop.f32.mrf.mxu0
  %v1765 = vadd.f32 %v1661, %v1764
  %v1766 = vpop.f32.mrf.mxu0
  %v1767 = vadd.f32 %v1663, %v1766
  %1768 = vmatmul.bf16.gmra.mxu0 %v849
  %v1769 = vpop.f32.mrf.mxu0
  %v1770 = vadd.f32 %v1666, %v1769
  %v1771 = vpop.f32.mrf.mxu0
  %v1772 = vadd.f32 %v1668, %v1771
  %1773 = vmatmul.bf16.gmra.mxu0 %v853
  %v1774 = vpop.f32.mrf.mxu0
  %v1775 = vadd.f32 %v1671, %v1774
  %v1776 = vpop.f32.mrf.mxu0
  %v1777 = vadd.f32 %v1673, %v1776
  %1778 = vmatmul.bf16.gmra.mxu0 %v857
  %v1779 = vpop.f32.mrf.mxu0
  %v1780 = vadd.f32 %v1676, %v1779
  %v1781 = vpop.f32.mrf.mxu0
  %v1782 = vadd.f32 %v1678, %v1781
  %1783 = vmatmul.bf16.gmra.mxu0 %v861
  %v1784 = vpop.f32.mrf.mxu0
  %v1785 = vadd.f32 %v1681, %v1784
  %v1786 = vpop.f32.mrf.mxu0
  %v1787 = vadd.f32 %v1683, %v1786
  %1788 = vdwg.mxu0
  %1789 = vmatpush.bf16.msra.mxu0 %v1499
  %1790 = vmatpush.bf16.msra.mxu0 %v1497
  %1791 = vmatpush.bf16.msra.mxu0 %v1495
  %1792 = vmatpush.bf16.msra.mxu0 %v1493
  %1793 = vmatpush.bf16.msra.mxu0 %v1491
  %1794 = vmatpush.bf16.msra.mxu0 %v1489
  %1795 = vmatpush.bf16.msra.mxu0 %v1487
  %1796 = vmatpush.bf16.msra.mxu0 %v1485
  %1797 = vmatmul.bf16.gmra.mxu0 %v790
  %v1798 = vpop.f32.mrf.mxu0
  %v1799 = vadd.f32 %v1695, %v1798
  %v1800 = vpop.f32.mrf.mxu0
  %v1801 = vadd.f32 %v1697, %v1800
  %1802 = vmatmul.bf16.gmra.mxu0 %v794
  %v1803 = vpop.f32.mrf.mxu0
  %v1804 = vadd.f32 %v1700, %v1803
  %v1805 = vpop.f32.mrf.mxu0
  %v1806 = vadd.f32 %v1702, %v1805
  %1807 = vmatmul.bf16.gmra.mxu0 %v798
  %v1808 = vpop.f32.mrf.mxu0
  %v1809 = vadd.f32 %v1705, %v1808
  %v1810 = vpop.f32.mrf.mxu0
  %v1811 = vadd.f32 %v1707, %v1810
  %1812 = vmatmul.bf16.gmra.mxu0 %v802
  %v1813 = vpop.f32.mrf.mxu0
  %v1814 = vadd.f32 %v1710, %v1813
  %v1815 = vpop.f32.mrf.mxu0
  %v1816 = vadd.f32 %v1712, %v1815
  %1817 = vmatmul.bf16.gmra.mxu0 %v806
  %v1818 = vpop.f32.mrf.mxu0
  %v1819 = vadd.f32 %v1715, %v1818
  %v1820 = vpop.f32.mrf.mxu0
  %v1821 = vadd.f32 %v1717, %v1820
  %1822 = vmatmul.bf16.gmra.mxu0 %v810
  %v1823 = vpop.f32.mrf.mxu0
  %v1824 = vadd.f32 %v1720, %v1823
  %v1825 = vpop.f32.mrf.mxu0
  %v1826 = vadd.f32 %v1722, %v1825
  %1827 = vmatmul.bf16.gmra.mxu0 %v814
  %v1828 = vpop.f32.mrf.mxu0
  %v1829 = vadd.f32 %v1725, %v1828
  %v1830 = vpop.f32.mrf.mxu0
  %v1831 = vadd.f32 %v1727, %v1830
  %1832 = vmatmul.bf16.gmra.mxu0 %v818
  %v1833 = vpop.f32.mrf.mxu0
  %v1834 = vadd.f32 %v1730, %v1833
  %v1835 = vpop.f32.mrf.mxu0
  %v1836 = vadd.f32 %v1732, %v1835
  %1837 = vmatmul.bf16.gmra.mxu0 %v822
  %v1838 = vpop.f32.mrf.mxu0
  %v1839 = vadd.f32 %v1735, %v1838
  %v1840 = vpop.f32.mrf.mxu0
  %v1841 = vadd.f32 %v1737, %v1840
  %1842 = vmatmul.bf16.gmra.mxu0 %v826
  %v1843 = vpop.f32.mrf.mxu0
  %v1844 = vadd.f32 %v1740, %v1843
  %v1845 = vpop.f32.mrf.mxu0
  %v1846 = vadd.f32 %v1742, %v1845
  %1847 = vmatmul.bf16.gmra.mxu0 %v830
  %v1848 = vpop.f32.mrf.mxu0
  %v1849 = vadd.f32 %v1745, %v1848
  %v1850 = vpop.f32.mrf.mxu0
  %v1851 = vadd.f32 %v1747, %v1850
  %1852 = vmatmul.bf16.gmra.mxu0 %v834
  %v1853 = vpop.f32.mrf.mxu0
  %v1854 = vadd.f32 %v1750, %v1853
  %v1855 = vpop.f32.mrf.mxu0
  %v1856 = vadd.f32 %v1752, %v1855
  %1857 = vmatmul.bf16.gmra.mxu0 %v838
  %v1858 = vpop.f32.mrf.mxu0
  %v1859 = vadd.f32 %v1755, %v1858
  %v1860 = vpop.f32.mrf.mxu0
  %v1861 = vadd.f32 %v1757, %v1860
  %1862 = vmatmul.bf16.gmra.mxu0 %v842
  %v1863 = vpop.f32.mrf.mxu0
  %v1864 = vadd.f32 %v1760, %v1863
  %v1865 = vpop.f32.mrf.mxu0
  %v1866 = vadd.f32 %v1762, %v1865
  %1867 = vmatmul.bf16.gmra.mxu0 %v846
  %v1868 = vpop.f32.mrf.mxu0
  %v1869 = vadd.f32 %v1765, %v1868
  %v1870 = vpop.f32.mrf.mxu0
  %v1871 = vadd.f32 %v1767, %v1870
  %1872 = vmatmul.bf16.gmra.mxu0 %v850
  %v1873 = vpop.f32.mrf.mxu0
  %v1874 = vadd.f32 %v1770, %v1873
  %v1875 = vpop.f32.mrf.mxu0
  %v1876 = vadd.f32 %v1772, %v1875
  %1877 = vmatmul.bf16.gmra.mxu0 %v854
  %v1878 = vpop.f32.mrf.mxu0
  %v1879 = vadd.f32 %v1775, %v1878
  %v1880 = vpop.f32.mrf.mxu0
  %v1881 = vadd.f32 %v1777, %v1880
  %1882 = vmatmul.bf16.gmra.mxu0 %v858
  %v1883 = vpop.f32.mrf.mxu0
  %v1884 = vadd.f32 %v1780, %v1883
  %v1885 = vpop.f32.mrf.mxu0
  %v1886 = vadd.f32 %v1782, %v1885
  %1887 = vmatmul.bf16.gmra.mxu0 %v862
  %v1888 = vpop.f32.mrf.mxu0
  %v1889 = vadd.f32 %v1785, %v1888
  %v1890 = vpop.f32.mrf.mxu0
  %v1891 = vadd.f32 %v1787, %v1890
  %1892 = vdwg.mxu0
  %1893 = vmatpush.bf16.msra.mxu0 %v1515
  %1894 = vmatpush.bf16.msra.mxu0 %v1513
  %1895 = vmatpush.bf16.msra.mxu0 %v1511
  %1896 = vmatpush.bf16.msra.mxu0 %v1509
  %1897 = vmatpush.bf16.msra.mxu0 %v1507
  %1898 = vmatpush.bf16.msra.mxu0 %v1505
  %1899 = vmatpush.bf16.msra.mxu0 %v1503
  %1900 = vmatpush.bf16.msra.mxu0 %v1501
  %1901 = vmatmul.bf16.gmra.mxu0 %v791
  %v1902 = vpop.f32.mrf.mxu0
  %v1903 = vadd.f32 %v1799, %v1902
  %v1904 = vpop.f32.mrf.mxu0
  %v1905 = vadd.f32 %v1801, %v1904
  %1906 = vmatmul.bf16.gmra.mxu0 %v795
  %v1907 = vpop.f32.mrf.mxu0
  %v1908 = vadd.f32 %v1804, %v1907
  %v1909 = vpop.f32.mrf.mxu0
  %v1910 = vadd.f32 %v1806, %v1909
  %1911 = vmatmul.bf16.gmra.mxu0 %v799
  %v1912 = vpop.f32.mrf.mxu0
  %v1913 = vadd.f32 %v1809, %v1912
  %v1914 = vpop.f32.mrf.mxu0
  %v1915 = vadd.f32 %v1811, %v1914
  %1916 = vmatmul.bf16.gmra.mxu0 %v803
  %v1917 = vpop.f32.mrf.mxu0
  %v1918 = vadd.f32 %v1814, %v1917
  %v1919 = vpop.f32.mrf.mxu0
  %v1920 = vadd.f32 %v1816, %v1919
  %1921 = vmatmul.bf16.gmra.mxu0 %v807
  %v1922 = vpop.f32.mrf.mxu0
  %v1923 = vadd.f32 %v1819, %v1922
  %v1924 = vpop.f32.mrf.mxu0
  %v1925 = vadd.f32 %v1821, %v1924
  %1926 = vmatmul.bf16.gmra.mxu0 %v811
  %v1927 = vpop.f32.mrf.mxu0
  %v1928 = vadd.f32 %v1824, %v1927
  %v1929 = vpop.f32.mrf.mxu0
  %v1930 = vadd.f32 %v1826, %v1929
  %1931 = vmatmul.bf16.gmra.mxu0 %v815
  %v1932 = vpop.f32.mrf.mxu0
  %v1933 = vadd.f32 %v1829, %v1932
  %v1934 = vpop.f32.mrf.mxu0
  %v1935 = vadd.f32 %v1831, %v1934
  %1936 = vmatmul.bf16.gmra.mxu0 %v819
  %v1937 = vpop.f32.mrf.mxu0
  %v1938 = vadd.f32 %v1834, %v1937
  %v1939 = vpop.f32.mrf.mxu0
  %v1940 = vadd.f32 %v1836, %v1939
  %1941 = vmatmul.bf16.gmra.mxu0 %v823
  %v1942 = vpop.f32.mrf.mxu0
  %v1943 = vadd.f32 %v1839, %v1942
  %v1944 = vpop.f32.mrf.mxu0
  %v1945 = vadd.f32 %v1841, %v1944
  %1946 = vmatmul.bf16.gmra.mxu0 %v827
  %v1947 = vpop.f32.mrf.mxu0
  %v1948 = vadd.f32 %v1844, %v1947
  %v1949 = vpop.f32.mrf.mxu0
  %v1950 = vadd.f32 %v1846, %v1949
  %1951 = vmatmul.bf16.gmra.mxu0 %v831
  %v1952 = vpop.f32.mrf.mxu0
  %v1953 = vadd.f32 %v1849, %v1952
  %v1954 = vpop.f32.mrf.mxu0
  %v1955 = vadd.f32 %v1851, %v1954
  %1956 = vmatmul.bf16.gmra.mxu0 %v835
  %v1957 = vpop.f32.mrf.mxu0
  %v1958 = vadd.f32 %v1854, %v1957
  %v1959 = vpop.f32.mrf.mxu0
  %v1960 = vadd.f32 %v1856, %v1959
  %1961 = vmatmul.bf16.gmra.mxu0 %v839
  %v1962 = vpop.f32.mrf.mxu0
  %v1963 = vadd.f32 %v1859, %v1962
  %v1964 = vpop.f32.mrf.mxu0
  %v1965 = vadd.f32 %v1861, %v1964
  %1966 = vmatmul.bf16.gmra.mxu0 %v843
  %v1967 = vpop.f32.mrf.mxu0
  %v1968 = vadd.f32 %v1864, %v1967
  %v1969 = vpop.f32.mrf.mxu0
  %v1970 = vadd.f32 %v1866, %v1969
  %1971 = vmatmul.bf16.gmra.mxu0 %v847
  %v1972 = vpop.f32.mrf.mxu0
  %v1973 = vadd.f32 %v1869, %v1972
  %v1974 = vpop.f32.mrf.mxu0
  %v1975 = vadd.f32 %v1871, %v1974
  %1976 = vmatmul.bf16.gmra.mxu0 %v851
  %v1977 = vpop.f32.mrf.mxu0
  %v1978 = vadd.f32 %v1874, %v1977
  %v1979 = vpop.f32.mrf.mxu0
  %v1980 = vadd.f32 %v1876, %v1979
  %1981 = vmatmul.bf16.gmra.mxu0 %v855
  %v1982 = vpop.f32.mrf.mxu0
  %v1983 = vadd.f32 %v1879, %v1982
  %v1984 = vpop.f32.mrf.mxu0
  %v1985 = vadd.f32 %v1881, %v1984
  %1986 = vmatmul.bf16.gmra.mxu0 %v859
  %v1987 = vpop.f32.mrf.mxu0
  %v1988 = vadd.f32 %v1884, %v1987
  %v1989 = vpop.f32.mrf.mxu0
  %v1990 = vadd.f32 %v1886, %v1989
  %1991 = vmatmul.bf16.gmra.mxu0 %v863
  %v1992 = vpop.f32.mrf.mxu0
  %v1993 = vadd.f32 %v1889, %v1992
  %v1994 = vpop.f32.mrf.mxu0
  %v1995 = vadd.f32 %v1891, %v1994
  %1996 = vdwg.mxu0
  %1997 = vmatpush.bf16.msra.mxu0 %v1468
  %1998 = vmatpush.bf16.msra.mxu0 %v1466
  %1999 = vmatpush.bf16.msra.mxu0 %v1464
  %2000 = vmatpush.bf16.msra.mxu0 %v1462
  %2001 = vmatpush.bf16.msra.mxu0 %v1460
  %2002 = vmatpush.bf16.msra.mxu0 %v1458
  %2003 = vmatpush.bf16.msra.mxu0 %v1456
  %2004 = vmatpush.bf16.msra.mxu0 %v1454
  %2005 = vmatmul.bf16.gmra.mxu0 %v788
  %v2006 = vpop.f32.mrf.mxu0
  %v2007 = vadd.f32 %v1167, %v2006
  %v2008 = vpop.f32.mrf.mxu0
  %v2009 = vadd.f32 %v1169, %v2008
  %2010 = vmatmul.bf16.gmra.mxu0 %v792
  %v2011 = vpop.f32.mrf.mxu0
  %v2012 = vadd.f32 %v1172, %v2011
  %v2013 = vpop.f32.mrf.mxu0
  %v2014 = vadd.f32 %v1174, %v2013
  %2015 = vmatmul.bf16.gmra.mxu0 %v796
  %v2016 = vpop.f32.mrf.mxu0
  %v2017 = vadd.f32 %v1177, %v2016
  %v2018 = vpop.f32.mrf.mxu0
  %v2019 = vadd.f32 %v1179, %v2018
  %2020 = vmatmul.bf16.gmra.mxu0 %v800
  %v2021 = vpop.f32.mrf.mxu0
  %v2022 = vadd.f32 %v1182, %v2021
  %v2023 = vpop.f32.mrf.mxu0
  %v2024 = vadd.f32 %v1184, %v2023
  %2025 = vmatmul.bf16.gmra.mxu0 %v804
  %v2026 = vpop.f32.mrf.mxu0
  %v2027 = vadd.f32 %v1187, %v2026
  %v2028 = vpop.f32.mrf.mxu0
  %v2029 = vadd.f32 %v1189, %v2028
  %2030 = vmatmul.bf16.gmra.mxu0 %v808
  %v2031 = vpop.f32.mrf.mxu0
  %v2032 = vadd.f32 %v1192, %v2031
  %v2033 = vpop.f32.mrf.mxu0
  %v2034 = vadd.f32 %v1194, %v2033
  %2035 = vmatmul.bf16.gmra.mxu0 %v812
  %v2036 = vpop.f32.mrf.mxu0
  %v2037 = vadd.f32 %v1197, %v2036
  %v2038 = vpop.f32.mrf.mxu0
  %v2039 = vadd.f32 %v1199, %v2038
  %2040 = vmatmul.bf16.gmra.mxu0 %v816
  %v2041 = vpop.f32.mrf.mxu0
  %v2042 = vadd.f32 %v1202, %v2041
  %v2043 = vpop.f32.mrf.mxu0
  %v2044 = vadd.f32 %v1204, %v2043
  %2045 = vmatmul.bf16.gmra.mxu0 %v820
  %v2046 = vpop.f32.mrf.mxu0
  %v2047 = vadd.f32 %v1207, %v2046
  %v2048 = vpop.f32.mrf.mxu0
  %v2049 = vadd.f32 %v1209, %v2048
  %2050 = vmatmul.bf16.gmra.mxu0 %v824
  %v2051 = vpop.f32.mrf.mxu0
  %v2052 = vadd.f32 %v1212, %v2051
  %v2053 = vpop.f32.mrf.mxu0
  %v2054 = vadd.f32 %v1214, %v2053
  %2055 = vmatmul.bf16.gmra.mxu0 %v828
  %v2056 = vpop.f32.mrf.mxu0
  %v2057 = vadd.f32 %v1217, %v2056
  %v2058 = vpop.f32.mrf.mxu0
  %v2059 = vadd.f32 %v1219, %v2058
  %2060 = vmatmul.bf16.gmra.mxu0 %v832
  %v2061 = vpop.f32.mrf.mxu0
  %v2062 = vadd.f32 %v1222, %v2061
  %v2063 = vpop.f32.mrf.mxu0
  %v2064 = vadd.f32 %v1224, %v2063
  %2065 = vmatmul.bf16.gmra.mxu0 %v836
  %v2066 = vpop.f32.mrf.mxu0
  %v2067 = vadd.f32 %v1227, %v2066
  %v2068 = vpop.f32.mrf.mxu0
  %v2069 = vadd.f32 %v1229, %v2068
  %2070 = vmatmul.bf16.gmra.mxu0 %v840
  %v2071 = vpop.f32.mrf.mxu0
  %v2072 = vadd.f32 %v1232, %v2071
  %v2073 = vpop.f32.mrf.mxu0
  %v2074 = vadd.f32 %v1234, %v2073
  %2075 = vmatmul.bf16.gmra.mxu0 %v844
  %v2076 = vpop.f32.mrf.mxu0
  %v2077 = vadd.f32 %v1237, %v2076
  %v2078 = vpop.f32.mrf.mxu0
  %v2079 = vadd.f32 %v1239, %v2078
  %2080 = vmatmul.bf16.gmra.mxu0 %v848
  %v2081 = vpop.f32.mrf.mxu0
  %v2082 = vadd.f32 %v1242, %v2081
  %v2083 = vpop.f32.mrf.mxu0
  %v2084 = vadd.f32 %v1244, %v2083
  %2085 = vmatmul.bf16.gmra.mxu0 %v852
  %v2086 = vpop.f32.mrf.mxu0
  %v2087 = vadd.f32 %v1247, %v2086
  %v2088 = vpop.f32.mrf.mxu0
  %v2089 = vadd.f32 %v1249, %v2088
  %2090 = vmatmul.bf16.gmra.mxu0 %v856
  %v2091 = vpop.f32.mrf.mxu0
  %v2092 = vadd.f32 %v1252, %v2091
  %v2093 = vpop.f32.mrf.mxu0
  %v2094 = vadd.f32 %v1254, %v2093
  %2095 = vmatmul.bf16.gmra.mxu0 %v860
  %v2096 = vpop.f32.mrf.mxu0
  %v2097 = vadd.f32 %v1257, %v2096
  %v2098 = vpop.f32.mrf.mxu0
  %v2099 = vadd.f32 %v1259, %v2098
  %2100 = vdwg.mxu0
  %2101 = vmatpush.bf16.msra.mxu0 %v1484
  %2102 = vmatpush.bf16.msra.mxu0 %v1482
  %2103 = vmatpush.bf16.msra.mxu0 %v1480
  %2104 = vmatpush.bf16.msra.mxu0 %v1478
  %2105 = vmatpush.bf16.msra.mxu0 %v1476
  %2106 = vmatpush.bf16.msra.mxu0 %v1474
  %2107 = vmatpush.bf16.msra.mxu0 %v1472
  %2108 = vmatpush.bf16.msra.mxu0 %v1470
  %2109 = vmatmul.bf16.gmra.mxu0 %v789
  %v2110 = vpop.f32.mrf.mxu0
  %v2111 = vadd.f32 %v2007, %v2110
  %v2112 = vpop.f32.mrf.mxu0
  %v2113 = vadd.f32 %v2009, %v2112
  %2114 = vmatmul.bf16.gmra.mxu0 %v793
  %v2115 = vpop.f32.mrf.mxu0
  %v2116 = vadd.f32 %v2012, %v2115
  %v2117 = vpop.f32.mrf.mxu0
  %v2118 = vadd.f32 %v2014, %v2117
  %2119 = vmatmul.bf16.gmra.mxu0 %v797
  %v2120 = vpop.f32.mrf.mxu0
  %v2121 = vadd.f32 %v2017, %v2120
  %v2122 = vpop.f32.mrf.mxu0
  %v2123 = vadd.f32 %v2019, %v2122
  %2124 = vmatmul.bf16.gmra.mxu0 %v801
  %v2125 = vpop.f32.mrf.mxu0
  %v2126 = vadd.f32 %v2022, %v2125
  %v2127 = vpop.f32.mrf.mxu0
  %v2128 = vadd.f32 %v2024, %v2127
  %2129 = vmatmul.bf16.gmra.mxu0 %v805
  %v2130 = vpop.f32.mrf.mxu0
  %v2131 = vadd.f32 %v2027, %v2130
  %v2132 = vpop.f32.mrf.mxu0
  %v2133 = vadd.f32 %v2029, %v2132
  %2134 = vmatmul.bf16.gmra.mxu0 %v809
  %v2135 = vpop.f32.mrf.mxu0
  %v2136 = vadd.f32 %v2032, %v2135
  %v2137 = vpop.f32.mrf.mxu0
  %v2138 = vadd.f32 %v2034, %v2137
  %2139 = vmatmul.bf16.gmra.mxu0 %v813
  %v2140 = vpop.f32.mrf.mxu0
  %v2141 = vadd.f32 %v2037, %v2140
  %v2142 = vpop.f32.mrf.mxu0
  %v2143 = vadd.f32 %v2039, %v2142
  %2144 = vmatmul.bf16.gmra.mxu0 %v817
  %v2145 = vpop.f32.mrf.mxu0
  %v2146 = vadd.f32 %v2042, %v2145
  %v2147 = vpop.f32.mrf.mxu0
  %v2148 = vadd.f32 %v2044, %v2147
  %2149 = vmatmul.bf16.gmra.mxu0 %v821
  %v2150 = vpop.f32.mrf.mxu0
  %v2151 = vadd.f32 %v2047, %v2150
  %v2152 = vpop.f32.mrf.mxu0
  %v2153 = vadd.f32 %v2049, %v2152
  %2154 = vmatmul.bf16.gmra.mxu0 %v825
  %v2155 = vpop.f32.mrf.mxu0
  %v2156 = vadd.f32 %v2052, %v2155
  %v2157 = vpop.f32.mrf.mxu0
  %v2158 = vadd.f32 %v2054, %v2157
  %2159 = vmatmul.bf16.gmra.mxu0 %v829
  %v2160 = vpop.f32.mrf.mxu0
  %v2161 = vadd.f32 %v2057, %v2160
  %v2162 = vpop.f32.mrf.mxu0
  %v2163 = vadd.f32 %v2059, %v2162
  %2164 = vmatmul.bf16.gmra.mxu0 %v833
  %v2165 = vpop.f32.mrf.mxu0
  %v2166 = vadd.f32 %v2062, %v2165
  %v2167 = vpop.f32.mrf.mxu0
  %v2168 = vadd.f32 %v2064, %v2167
  %2169 = vmatmul.bf16.gmra.mxu0 %v837
  %v2170 = vpop.f32.mrf.mxu0
  %v2171 = vadd.f32 %v2067, %v2170
  %v2172 = vpop.f32.mrf.mxu0
  %v2173 = vadd.f32 %v2069, %v2172
  %2174 = vmatmul.bf16.gmra.mxu0 %v841
  %v2175 = vpop.f32.mrf.mxu0
  %v2176 = vadd.f32 %v2072, %v2175
  %v2177 = vpop.f32.mrf.mxu0
  %v2178 = vadd.f32 %v2074, %v2177
  %2179 = vmatmul.bf16.gmra.mxu0 %v845
  %v2180 = vpop.f32.mrf.mxu0
  %v2181 = vadd.f32 %v2077, %v2180
  %v2182 = vpop.f32.mrf.mxu0
  %v2183 = vadd.f32 %v2079, %v2182
  %2184 = vmatmul.bf16.gmra.mxu0 %v849
  %v2185 = vpop.f32.mrf.mxu0
  %v2186 = vadd.f32 %v2082, %v2185
  %v2187 = vpop.f32.mrf.mxu0
  %v2188 = vadd.f32 %v2084, %v2187
  %2189 = vmatmul.bf16.gmra.mxu0 %v853
  %v2190 = vpop.f32.mrf.mxu0
  %v2191 = vadd.f32 %v2087, %v2190
  %v2192 = vpop.f32.mrf.mxu0
  %v2193 = vadd.f32 %v2089, %v2192
  %2194 = vmatmul.bf16.gmra.mxu0 %v857
  %v2195 = vpop.f32.mrf.mxu0
  %v2196 = vadd.f32 %v2092, %v2195
  %v2197 = vpop.f32.mrf.mxu0
  %v2198 = vadd.f32 %v2094, %v2197
  %2199 = vmatmul.bf16.gmra.mxu0 %v861
  %v2200 = vpop.f32.mrf.mxu0
  %v2201 = vadd.f32 %v2097, %v2200
  %v2202 = vpop.f32.mrf.mxu0
  %v2203 = vadd.f32 %v2099, %v2202
  %2204 = vdwg.mxu0
  %2205 = vmatpush.bf16.msra.mxu0 %v1500
  %2206 = vmatpush.bf16.msra.mxu0 %v1498
  %2207 = vmatpush.bf16.msra.mxu0 %v1496
  %2208 = vmatpush.bf16.msra.mxu0 %v1494
  %2209 = vmatpush.bf16.msra.mxu0 %v1492
  %2210 = vmatpush.bf16.msra.mxu0 %v1490
  %2211 = vmatpush.bf16.msra.mxu0 %v1488
  %2212 = vmatpush.bf16.msra.mxu0 %v1486
  %2213 = vmatmul.bf16.gmra.mxu0 %v790
  %v2214 = vpop.f32.mrf.mxu0
  %v2215 = vadd.f32 %v2111, %v2214
  %v2216 = vpop.f32.mrf.mxu0
  %v2217 = vadd.f32 %v2113, %v2216
  %2218 = vmatmul.bf16.gmra.mxu0 %v794
  %v2219 = vpop.f32.mrf.mxu0
  %v2220 = vadd.f32 %v2116, %v2219
  %v2221 = vpop.f32.mrf.mxu0
  %v2222 = vadd.f32 %v2118, %v2221
  %2223 = vmatmul.bf16.gmra.mxu0 %v798
  %v2224 = vpop.f32.mrf.mxu0
  %v2225 = vadd.f32 %v2121, %v2224
  %v2226 = vpop.f32.mrf.mxu0
  %v2227 = vadd.f32 %v2123, %v2226
  %2228 = vmatmul.bf16.gmra.mxu0 %v802
  %v2229 = vpop.f32.mrf.mxu0
  %v2230 = vadd.f32 %v2126, %v2229
  %v2231 = vpop.f32.mrf.mxu0
  %v2232 = vadd.f32 %v2128, %v2231
  %2233 = vmatmul.bf16.gmra.mxu0 %v806
  %v2234 = vpop.f32.mrf.mxu0
  %v2235 = vadd.f32 %v2131, %v2234
  %v2236 = vpop.f32.mrf.mxu0
  %v2237 = vadd.f32 %v2133, %v2236
  %2238 = vmatmul.bf16.gmra.mxu0 %v810
  %v2239 = vpop.f32.mrf.mxu0
  %v2240 = vadd.f32 %v2136, %v2239
  %v2241 = vpop.f32.mrf.mxu0
  %v2242 = vadd.f32 %v2138, %v2241
  %2243 = vmatmul.bf16.gmra.mxu0 %v814
  %v2244 = vpop.f32.mrf.mxu0
  %v2245 = vadd.f32 %v2141, %v2244
  %v2246 = vpop.f32.mrf.mxu0
  %v2247 = vadd.f32 %v2143, %v2246
  %2248 = vmatmul.bf16.gmra.mxu0 %v818
  %v2249 = vpop.f32.mrf.mxu0
  %v2250 = vadd.f32 %v2146, %v2249
  %v2251 = vpop.f32.mrf.mxu0
  %v2252 = vadd.f32 %v2148, %v2251
  %2253 = vmatmul.bf16.gmra.mxu0 %v822
  %v2254 = vpop.f32.mrf.mxu0
  %v2255 = vadd.f32 %v2151, %v2254
  %v2256 = vpop.f32.mrf.mxu0
  %v2257 = vadd.f32 %v2153, %v2256
  %2258 = vmatmul.bf16.gmra.mxu0 %v826
  %v2259 = vpop.f32.mrf.mxu0
  %v2260 = vadd.f32 %v2156, %v2259
  %v2261 = vpop.f32.mrf.mxu0
  %v2262 = vadd.f32 %v2158, %v2261
  %2263 = vmatmul.bf16.gmra.mxu0 %v830
  %v2264 = vpop.f32.mrf.mxu0
  %v2265 = vadd.f32 %v2161, %v2264
  %v2266 = vpop.f32.mrf.mxu0
  %v2267 = vadd.f32 %v2163, %v2266
  %2268 = vmatmul.bf16.gmra.mxu0 %v834
  %v2269 = vpop.f32.mrf.mxu0
  %v2270 = vadd.f32 %v2166, %v2269
  %v2271 = vpop.f32.mrf.mxu0
  %v2272 = vadd.f32 %v2168, %v2271
  %2273 = vmatmul.bf16.gmra.mxu0 %v838
  %v2274 = vpop.f32.mrf.mxu0
  %v2275 = vadd.f32 %v2171, %v2274
  %v2276 = vpop.f32.mrf.mxu0
  %v2277 = vadd.f32 %v2173, %v2276
  %2278 = vmatmul.bf16.gmra.mxu0 %v842
  %v2279 = vpop.f32.mrf.mxu0
  %v2280 = vadd.f32 %v2176, %v2279
  %v2281 = vpop.f32.mrf.mxu0
  %v2282 = vadd.f32 %v2178, %v2281
  %2283 = vmatmul.bf16.gmra.mxu0 %v846
  %v2284 = vpop.f32.mrf.mxu0
  %v2285 = vadd.f32 %v2181, %v2284
  %v2286 = vpop.f32.mrf.mxu0
  %v2287 = vadd.f32 %v2183, %v2286
  %2288 = vmatmul.bf16.gmra.mxu0 %v850
  %v2289 = vpop.f32.mrf.mxu0
  %v2290 = vadd.f32 %v2186, %v2289
  %v2291 = vpop.f32.mrf.mxu0
  %v2292 = vadd.f32 %v2188, %v2291
  %2293 = vmatmul.bf16.gmra.mxu0 %v854
  %v2294 = vpop.f32.mrf.mxu0
  %v2295 = vadd.f32 %v2191, %v2294
  %v2296 = vpop.f32.mrf.mxu0
  %v2297 = vadd.f32 %v2193, %v2296
  %2298 = vmatmul.bf16.gmra.mxu0 %v858
  %v2299 = vpop.f32.mrf.mxu0
  %v2300 = vadd.f32 %v2196, %v2299
  %v2301 = vpop.f32.mrf.mxu0
  %v2302 = vadd.f32 %v2198, %v2301
  %2303 = vmatmul.bf16.gmra.mxu0 %v862
  %v2304 = vpop.f32.mrf.mxu0
  %v2305 = vadd.f32 %v2201, %v2304
  %v2306 = vpop.f32.mrf.mxu0
  %v2307 = vadd.f32 %v2203, %v2306
  %2308 = vdwg.mxu0
  %2309 = vmatpush.bf16.msra.mxu0 %v1516
  %2310 = vmatpush.bf16.msra.mxu0 %v1514
  %2311 = vmatpush.bf16.msra.mxu0 %v1512
  %2312 = vmatpush.bf16.msra.mxu0 %v1510
  %2313 = vmatpush.bf16.msra.mxu0 %v1508
  %2314 = vmatpush.bf16.msra.mxu0 %v1506
  %2315 = vmatpush.bf16.msra.mxu0 %v1504
  %2316 = vmatpush.bf16.msra.mxu0 %v1502
  %2317 = vmatmul.bf16.gmra.mxu0 %v791
  %v2318 = vpop.f32.mrf.mxu0
  %v2319 = vadd.f32 %v2215, %v2318
  %v2320 = vpop.f32.mrf.mxu0
  %v2321 = vadd.f32 %v2217, %v2320
  %2322 = vmatmul.bf16.gmra.mxu0 %v795
  %v2323 = vpop.f32.mrf.mxu0
  %v2324 = vadd.f32 %v2220, %v2323
  %v2325 = vpop.f32.mrf.mxu0
  %v2326 = vadd.f32 %v2222, %v2325
  %2327 = vmatmul.bf16.gmra.mxu0 %v799
  %v2328 = vpop.f32.mrf.mxu0
  %v2329 = vadd.f32 %v2225, %v2328
  %v2330 = vpop.f32.mrf.mxu0
  %v2331 = vadd.f32 %v2227, %v2330
  %2332 = vmatmul.bf16.gmra.mxu0 %v803
  %v2333 = vpop.f32.mrf.mxu0
  %v2334 = vadd.f32 %v2230, %v2333
  %v2335 = vpop.f32.mrf.mxu0
  %v2336 = vadd.f32 %v2232, %v2335
  %2337 = vmatmul.bf16.gmra.mxu0 %v807
  %v2338 = vpop.f32.mrf.mxu0
  %v2339 = vadd.f32 %v2235, %v2338
  %v2340 = vpop.f32.mrf.mxu0
  %v2341 = vadd.f32 %v2237, %v2340
  %2342 = vmatmul.bf16.gmra.mxu0 %v811
  %v2343 = vpop.f32.mrf.mxu0
  %v2344 = vadd.f32 %v2240, %v2343
  %v2345 = vpop.f32.mrf.mxu0
  %v2346 = vadd.f32 %v2242, %v2345
  %2347 = vmatmul.bf16.gmra.mxu0 %v815
  %v2348 = vpop.f32.mrf.mxu0
  %v2349 = vadd.f32 %v2245, %v2348
  %v2350 = vpop.f32.mrf.mxu0
  %v2351 = vadd.f32 %v2247, %v2350
  %2352 = vmatmul.bf16.gmra.mxu0 %v819
  %v2353 = vpop.f32.mrf.mxu0
  %v2354 = vadd.f32 %v2250, %v2353
  %v2355 = vpop.f32.mrf.mxu0
  %v2356 = vadd.f32 %v2252, %v2355
  %2357 = vmatmul.bf16.gmra.mxu0 %v823
  %v2358 = vpop.f32.mrf.mxu0
  %v2359 = vadd.f32 %v2255, %v2358
  %v2360 = vpop.f32.mrf.mxu0
  %v2361 = vadd.f32 %v2257, %v2360
  %2362 = vmatmul.bf16.gmra.mxu0 %v827
  %v2363 = vpop.f32.mrf.mxu0
  %v2364 = vadd.f32 %v2260, %v2363
  %v2365 = vpop.f32.mrf.mxu0
  %v2366 = vadd.f32 %v2262, %v2365
  %2367 = vmatmul.bf16.gmra.mxu0 %v831
  %v2368 = vpop.f32.mrf.mxu0
  %v2369 = vadd.f32 %v2265, %v2368
  %v2370 = vpop.f32.mrf.mxu0
  %v2371 = vadd.f32 %v2267, %v2370
  %2372 = vmatmul.bf16.gmra.mxu0 %v835
  %v2373 = vpop.f32.mrf.mxu0
  %v2374 = vadd.f32 %v2270, %v2373
  %v2375 = vpop.f32.mrf.mxu0
  %v2376 = vadd.f32 %v2272, %v2375
  %2377 = vmatmul.bf16.gmra.mxu0 %v839
  %v2378 = vpop.f32.mrf.mxu0
  %v2379 = vadd.f32 %v2275, %v2378
  %v2380 = vpop.f32.mrf.mxu0
  %v2381 = vadd.f32 %v2277, %v2380
  %2382 = vmatmul.bf16.gmra.mxu0 %v843
  %v2383 = vpop.f32.mrf.mxu0
  %v2384 = vadd.f32 %v2280, %v2383
  %v2385 = vpop.f32.mrf.mxu0
  %v2386 = vadd.f32 %v2282, %v2385
  %2387 = vmatmul.bf16.gmra.mxu0 %v847
  %v2388 = vpop.f32.mrf.mxu0
  %v2389 = vadd.f32 %v2285, %v2388
  %v2390 = vpop.f32.mrf.mxu0
  %v2391 = vadd.f32 %v2287, %v2390
  %2392 = vmatmul.bf16.gmra.mxu0 %v851
  %v2393 = vpop.f32.mrf.mxu0
  %v2394 = vadd.f32 %v2290, %v2393
  %v2395 = vpop.f32.mrf.mxu0
  %v2396 = vadd.f32 %v2292, %v2395
  %2397 = vmatmul.bf16.gmra.mxu0 %v855
  %v2398 = vpop.f32.mrf.mxu0
  %v2399 = vadd.f32 %v2295, %v2398
  %v2400 = vpop.f32.mrf.mxu0
  %v2401 = vadd.f32 %v2297, %v2400
  %2402 = vmatmul.bf16.gmra.mxu0 %v859
  %v2403 = vpop.f32.mrf.mxu0
  %v2404 = vadd.f32 %v2300, %v2403
  %v2405 = vpop.f32.mrf.mxu0
  %v2406 = vadd.f32 %v2302, %v2405
  %2407 = vmatmul.bf16.gmra.mxu0 %v863
  %v2408 = vpop.f32.mrf.mxu0
  %v2409 = vadd.f32 %v2305, %v2408
  %v2410 = vpop.f32.mrf.mxu0
  %v2411 = vadd.f32 %v2307, %v2410
  %2412 = vdwg.mxu0
  %v2413 = vld [vmem:[%s6] sm:$0x3]
  %v2415 = vperm.slane %v2413, 0
  %v2416 = vperm.slane %v2413, 1
  %v2419 = vadd.f32 %v1903, %v2415
  %v2420 = vadd.f32 %v2319, %v2416
  %v2421 = vadd.f32 %v1905, %v2415
  %v2422 = vadd.f32 %v2321, %v2416
  %v2423 = vadd.f32 %v1908, %v2415
  %v2424 = vadd.f32 %v2324, %v2416
  %v2425 = vadd.f32 %v1910, %v2415
  %v2426 = vadd.f32 %v2326, %v2416
  %v2427 = vadd.f32 %v1913, %v2415
  %v2428 = vadd.f32 %v2329, %v2416
  %v2429 = vadd.f32 %v1915, %v2415
  %v2430 = vadd.f32 %v2331, %v2416
  %v2431 = vadd.f32 %v1918, %v2415
  %v2432 = vadd.f32 %v2334, %v2416
  %v2433 = vadd.f32 %v1920, %v2415
  %v2434 = vadd.f32 %v2336, %v2416
  %v2435 = vadd.f32 %v1923, %v2415
  %v2436 = vadd.f32 %v2339, %v2416
  %v2437 = vadd.f32 %v1925, %v2415
  %v2438 = vadd.f32 %v2341, %v2416
  %v2439 = vadd.f32 %v1928, %v2415
  %v2440 = vadd.f32 %v2344, %v2416
  %v2441 = vadd.f32 %v1930, %v2415
  %v2442 = vadd.f32 %v2346, %v2416
  %v2443 = vadd.f32 %v1933, %v2415
  %v2444 = vadd.f32 %v2349, %v2416
  %v2445 = vadd.f32 %v1935, %v2415
  %v2446 = vadd.f32 %v2351, %v2416
  %v2447 = vadd.f32 %v1938, %v2415
  %v2448 = vadd.f32 %v2354, %v2416
  %v2449 = vadd.f32 %v1940, %v2415
  %v2450 = vadd.f32 %v2356, %v2416
  %v2451 = vadd.f32 %v1943, %v2415
  %v2452 = vadd.f32 %v2359, %v2416
  %v2453 = vadd.f32 %v1945, %v2415
  %v2454 = vadd.f32 %v2361, %v2416
  %v2455 = vadd.f32 %v1948, %v2415
  %v2456 = vadd.f32 %v2364, %v2416
  %v2457 = vadd.f32 %v1950, %v2415
  %v2458 = vadd.f32 %v2366, %v2416
  %v2459 = vadd.f32 %v1953, %v2415
  %v2460 = vadd.f32 %v2369, %v2416
  %v2461 = vadd.f32 %v1955, %v2415
  %v2462 = vadd.f32 %v2371, %v2416
  %v2463 = vadd.f32 %v1958, %v2415
  %v2464 = vadd.f32 %v2374, %v2416
  %v2465 = vadd.f32 %v1960, %v2415
  %v2466 = vadd.f32 %v2376, %v2416
  %v2467 = vadd.f32 %v1963, %v2415
  %v2468 = vadd.f32 %v2379, %v2416
  %v2469 = vadd.f32 %v1965, %v2415
  %v2470 = vadd.f32 %v2381, %v2416
  %v2471 = vadd.f32 %v1968, %v2415
  %v2472 = vadd.f32 %v2384, %v2416
  %v2473 = vadd.f32 %v1970, %v2415
  %v2474 = vadd.f32 %v2386, %v2416
  %v2475 = vadd.f32 %v1973, %v2415
  %v2476 = vadd.f32 %v2389, %v2416
  %v2477 = vadd.f32 %v1975, %v2415
  %v2478 = vadd.f32 %v2391, %v2416
  %v2479 = vadd.f32 %v1978, %v2415
  %v2480 = vadd.f32 %v2394, %v2416
  %v2481 = vadd.f32 %v1980, %v2415
  %v2482 = vadd.f32 %v2396, %v2416
  %v2483 = vadd.f32 %v1983, %v2415
  %v2484 = vadd.f32 %v2399, %v2416
  %v2485 = vadd.f32 %v1985, %v2415
  %v2486 = vadd.f32 %v2401, %v2416
  %v2487 = vadd.f32 %v1988, %v2415
  %v2488 = vadd.f32 %v2404, %v2416
  %v2489 = vadd.f32 %v1990, %v2415
  %v2490 = vadd.f32 %v2406, %v2416
  %v2491 = vadd.f32 %v1993, %v2415
  %v2492 = vadd.f32 %v2409, %v2416
  %v2493 = vadd.f32 %v1995, %v2415
  %v2494 = vadd.f32 %v2411, %v2416
  %v2495 = vmax.f32 %v2419, 0.0
  %v2496 = vmax.f32 %v2420, 0.0
  %v2497 = vmax.f32 %v2421, 0.0
  %v2498 = vmax.f32 %v2422, 0.0
  %v2499 = vmax.f32 %v2423, 0.0
  %v2500 = vmax.f32 %v2424, 0.0
  %v2501 = vmax.f32 %v2425, 0.0
  %v2502 = vmax.f32 %v2426, 0.0
  %v2503 = vmax.f32 %v2427, 0.0
  %v2504 = vmax.f32 %v2428, 0.0
  %v2505 = vmax.f32 %v2429, 0.0
  %v2506 = vmax.f32 %v2430, 0.0
  %v2507 = vmax.f32 %v2431, 0.0
  %v2508 = vmax.f32 %v2432, 0.0
  %v2509 = vmax.f32 %v2433, 0.0
  %v2510 = vmax.f32 %v2434, 0.0
  %v2511 = vmax.f32 %v2435, 0.0
  %v2512 = vmax.f32 %v2436, 0.0
  %v2513 = vmax.f32 %v2437, 0.0
  %v2514 = vmax.f32 %v2438, 0.0
  %v2515 = vmax.f32 %v2439, 0.0
  %v2516 = vmax.f32 %v2440, 0.0
  %v2517 = vmax.f32 %v2441, 0.0
  %v2518 = vmax.f32 %v2442, 0.0
  %v2519 = vmax.f32 %v2443, 0.0
  %v2520 = vmax.f32 %v2444, 0.0
  %v2521 = vmax.f32 %v2445, 0.0
  %v2522 = vmax.f32 %v2446, 0.0
  %v2523 = vmax.f32 %v2447, 0.0
  %v2524 = vmax.f32 %v2448, 0.0
  %v2525 = vmax.f32 %v2449, 0.0
  %v2526 = vmax.f32 %v2450, 0.0
  %v2527 = vmax.f32 %v2451, 0.0
  %v2528 = vmax.f32 %v2452, 0.0
  %v2529 = vmax.f32 %v2453, 0.0
  %v2530 = vmax.f32 %v2454, 0.0
  %v2531 = vmax.f32 %v2455, 0.0
  %v2532 = vmax.f32 %v2456, 0.0
  %v2533 = vmax.f32 %v2457, 0.0
  %v2534 = vmax.f32 %v2458, 0.0
  %v2535 = vmax.f32 %v2459, 0.0
  %v2536 = vmax.f32 %v2460, 0.0
  %v2537 = vmax.f32 %v2461, 0.0
  %v2538 = vmax.f32 %v2462, 0.0
  %v2539 = vmax.f32 %v2463, 0.0
  %v2540 = vmax.f32 %v2464, 0.0
  %v2541 = vmax.f32 %v2465, 0.0
  %v2542 = vmax.f32 %v2466, 0.0
  %v2543 = vmax.f32 %v2467, 0.0
  %v2544 = vmax.f32 %v2468, 0.0
  %v2545 = vmax.f32 %v2469, 0.0
  %v2546 = vmax.f32 %v2470, 0.0
  %v2547 = vmax.f32 %v2471, 0.0
  %v2548 = vmax.f32 %v2472, 0.0
  %v2549 = vmax.f32 %v2473, 0.0
  %v2550 = vmax.f32 %v2474, 0.0
  %v2551 = vmax.f32 %v2475, 0.0
  %v2552 = vmax.f32 %v2476, 0.0
  %v2553 = vmax.f32 %v2477, 0.0
  %v2554 = vmax.f32 %v2478, 0.0
  %v2555 = vmax.f32 %v2479, 0.0
  %v2556 = vmax.f32 %v2480, 0.0
  %v2557 = vmax.f32 %v2481, 0.0
  %v2558 = vmax.f32 %v2482, 0.0
  %v2559 = vmax.f32 %v2483, 0.0
  %v2560 = vmax.f32 %v2484, 0.0
  %v2561 = vmax.f32 %v2485, 0.0
  %v2562 = vmax.f32 %v2486, 0.0
  %v2563 = vmax.f32 %v2487, 0.0
  %v2564 = vmax.f32 %v2488, 0.0
  %v2565 = vmax.f32 %v2489, 0.0
  %v2566 = vmax.f32 %v2490, 0.0
  %v2567 = vmax.f32 %v2491, 0.0
  %v2568 = vmax.f32 %v2492, 0.0
  %v2569 = vmax.f32 %v2493, 0.0
  %v2570 = vmax.f32 %v2494, 0.0
  %v2571 = vpack.c.bf16 %v2497, %v2495
  %v2572 = vpack.c.bf16 %v2498, %v2496
  %v2573 = vpack.c.bf16 %v2501, %v2499
  %v2574 = vpack.c.bf16 %v2502, %v2500
  %v2575 = vpack.c.bf16 %v2505, %v2503
  %v2576 = vpack.c.bf16 %v2506, %v2504
  %v2577 = vpack.c.bf16 %v2509, %v2507
  %v2578 = vpack.c.bf16 %v2510, %v2508
  %v2579 = vpack.c.bf16 %v2513, %v2511
  %v2580 = vpack.c.bf16 %v2514, %v2512
  %v2581 = vpack.c.bf16 %v2517, %v2515
  %v2582 = vpack.c.bf16 %v2518, %v2516
  %v2583 = vpack.c.bf16 %v2521, %v2519
  %v2584 = vpack.c.bf16 %v2522, %v2520
  %v2585 = vpack.c.bf16 %v2525, %v2523
  %v2586 = vpack.c.bf16 %v2526, %v2524
  %v2587 = vpack.c.bf16 %v2529, %v2527
  %v2588 = vpack.c.bf16 %v2530, %v2528
  %v2589 = vpack.c.bf16 %v2533, %v2531
  %v2590 = vpack.c.bf16 %v2534, %v2532
  %v2591 = vpack.c.bf16 %v2537, %v2535
  %v2592 = vpack.c.bf16 %v2538, %v2536
  %v2593 = vpack.c.bf16 %v2541, %v2539
  %v2594 = vpack.c.bf16 %v2542, %v2540
  %v2595 = vpack.c.bf16 %v2545, %v2543
  %v2596 = vpack.c.bf16 %v2546, %v2544
  %v2597 = vpack.c.bf16 %v2549, %v2547
  %v2598 = vpack.c.bf16 %v2550, %v2548
  %v2599 = vpack.c.bf16 %v2553, %v2551
  %v2600 = vpack.c.bf16 %v2554, %v2552
  %v2601 = vpack.c.bf16 %v2557, %v2555
  %v2602 = vpack.c.bf16 %v2558, %v2556
  %v2603 = vpack.c.bf16 %v2561, %v2559
  %v2604 = vpack.c.bf16 %v2562, %v2560
  %v2605 = vpack.c.bf16 %v2565, %v2563
  %v2606 = vpack.c.bf16 %v2566, %v2564
  %v2607 = vpack.c.bf16 %v2569, %v2567
  %v2608 = vpack.c.bf16 %v2570, %v2568
  %v2609 = vld [vmem:[%s7] sm:$0xf]
  %v2610 = vld [vmem:[%s7 + $0x4] sm:$0xf]
  %v2611 = vld [vmem:[%s7 + $0x8] sm:$0xf]
  %v2612 = vld [vmem:[%s7 + $0xc] sm:$0xf]
  %v2613 = vld [vmem:[%s7 + $0x10] sm:$0xf]
  %v2614 = vld [vmem:[%s7 + $0x14] sm:$0xf]
  %v2615 = vld [vmem:[%s7 + $0x18] sm:$0xf]
  %v2616 = vld [vmem:[%s7 + $0x1c] sm:$0xf]
  %v2617 = vld [vmem:[%s7 + $0x20] sm:$0xf]
  %v2618 = vld [vmem:[%s7 + $0x24] sm:$0xf]
  %v2619 = vld [vmem:[%s7 + $0x28] sm:$0xf]
  %v2620 = vld [vmem:[%s7 + $0x2c] sm:$0xf]
  %v2621 = vld [vmem:[%s7 + $0x30] sm:$0xf]
  %v2622 = vld [vmem:[%s7 + $0x34] sm:$0xf]
  %v2623 = vld [vmem:[%s7 + $0x38] sm:$0xf]
  %v2624 = vld [vmem:[%s7 + $0x3c] sm:$0xf]
  %v2625 = vld [vmem:[%s7 + $0x40] sm:$0xf]
  %v2626 = vld [vmem:[%s7 + $0x44] sm:$0xf]
  %v2627 = vld [vmem:[%s7 + $0x48] sm:$0xf]
  %v2628 = vld [vmem:[%s7 + $0x4c] sm:$0xf]
  %v2629 = vld [vmem:[%s7 + $0x50] sm:$0xf]
  %v2630 = vld [vmem:[%s7 + $0x54] sm:$0xf]
  %v2631 = vld [vmem:[%s7 + $0x58] sm:$0xf]
  %v2632 = vld [vmem:[%s7 + $0x5c] sm:$0xf]
  %v2633 = vld [vmem:[%s7 + $0x60] sm:$0xf]
  %v2634 = vld [vmem:[%s7 + $0x64] sm:$0xf]
  %v2635 = vld [vmem:[%s7 + $0x68] sm:$0xf]
  %v2636 = vld [vmem:[%s7 + $0x6c] sm:$0xf]
  %v2637 = vld [vmem:[%s7 + $0x70] sm:$0xf]
  %v2638 = vld [vmem:[%s7 + $0x74] sm:$0xf]
  %v2639 = vld [vmem:[%s7 + $0x78] sm:$0xf]
  %v2640 = vld [vmem:[%s7 + $0x7c] sm:$0xf]
  %v2641 = vld [vmem:[%s8] sm:$0x1]
  %v2643 = vperm.slane %v2641, 0
  %v2677 = vunpack.c.l.b16 %v2609
  %v2678 = vunpack.c.l.b16 %v2610
  %v2679 = vunpack.c.l.b16 %v2611
  %v2680 = vunpack.c.l.b16 %v2612
  %v2681 = vunpack.c.l.b16 %v2613
  %v2682 = vunpack.c.l.b16 %v2614
  %v2683 = vunpack.c.l.b16 %v2615
  %v2684 = vunpack.c.l.b16 %v2616
  %v2685 = vunpack.c.l.b16 %v2617
  %v2686 = vunpack.c.l.b16 %v2618
  %v2687 = vunpack.c.l.b16 %v2619
  %v2688 = vunpack.c.l.b16 %v2620
  %v2689 = vunpack.c.l.b16 %v2621
  %v2690 = vunpack.c.l.b16 %v2622
  %v2691 = vunpack.c.l.b16 %v2623
  %v2692 = vunpack.c.l.b16 %v2624
  %v2693 = vunpack.c.l.b16 %v2625
  %v2694 = vunpack.c.l.b16 %v2626
  %v2695 = vunpack.c.l.b16 %v2627
  %v2696 = vunpack.c.l.b16 %v2628
  %v2697 = vunpack.c.l.b16 %v2629
  %v2698 = vunpack.c.l.b16 %v2630
  %v2699 = vunpack.c.l.b16 %v2631
  %v2700 = vunpack.c.l.b16 %v2632
  %v2701 = vunpack.c.l.b16 %v2633
  %v2702 = vunpack.c.l.b16 %v2634
  %v2703 = vunpack.c.l.b16 %v2635
  %v2704 = vunpack.c.l.b16 %v2636
  %v2705 = vunpack.c.l.b16 %v2637
  %v2706 = vunpack.c.l.b16 %v2638
  %v2707 = vunpack.c.l.b16 %v2639
  %v2708 = vunpack.c.l.b16 %v2640
  %v2709 = vpack.c.b16 %v2678, %v2677
  %v2710 = vpack.c.b16 %v2680, %v2679
  %v2711 = vpack.c.b16 %v2682, %v2681
  %v2712 = vpack.c.b16 %v2684, %v2683
  %v2713 = vpack.c.b16 %v2686, %v2685
  %v2714 = vpack.c.b16 %v2688, %v2687
  %v2715 = vpack.c.b16 %v2690, %v2689
  %v2716 = vpack.c.b16 %v2692, %v2691
  %v2717 = vpack.c.b16 %v2694, %v2693
  %v2718 = vpack.c.b16 %v2696, %v2695
  %v2719 = vpack.c.b16 %v2698, %v2697
  %v2720 = vpack.c.b16 %v2700, %v2699
  %v2721 = vpack.c.b16 %v2702, %v2701
  %v2722 = vpack.c.b16 %v2704, %v2703
  %v2723 = vpack.c.b16 %v2706, %v2705
  %v2724 = vpack.c.b16 %v2708, %v2707
  %2741 = vmatpush.bf16.msra.mxu0 %v2716
  %2742 = vmatpush.bf16.msra.mxu0 %v2715
  %2743 = vmatpush.bf16.msra.mxu0 %v2714
  %2744 = vmatpush.bf16.msra.mxu0 %v2713
  %2745 = vmatpush.bf16.msra.mxu0 %v2712
  %2746 = vmatpush.bf16.msra.mxu0 %v2711
  %2747 = vmatpush.bf16.msra.mxu0 %v2710
  %2748 = vmatpush.bf16.msra.mxu0 %v2709
  %2749 = vmatmul.bf16.gmra.mxu0 %v2571
  %v2750 = vpop.f32.mrf.mxu0
  %v2751 = vadd.f32 %v2643, %v2750
  %v2752 = vpop.f32.mrf.mxu0
  %v2753 = vadd.f32 %v2643, %v2752
  %2754 = vmatmul.bf16.gmra.mxu0 %v2573
  %v2755 = vpop.f32.mrf.mxu0
  %v2756 = vadd.f32 %v2643, %v2755
  %v2757 = vpop.f32.mrf.mxu0
  %v2758 = vadd.f32 %v2643, %v2757
  %2759 = vmatmul.bf16.gmra.mxu0 %v2575
  %v2760 = vpop.f32.mrf.mxu0
  %v2761 = vadd.f32 %v2643, %v2760
  %v2762 = vpop.f32.mrf.mxu0
  %v2763 = vadd.f32 %v2643, %v2762
  %2764 = vmatmul.bf16.gmra.mxu0 %v2577
  %v2765 = vpop.f32.mrf.mxu0
  %v2766 = vadd.f32 %v2643, %v2765
  %v2767 = vpop.f32.mrf.mxu0
  %v2768 = vadd.f32 %v2643, %v2767
  %2769 = vmatmul.bf16.gmra.mxu0 %v2579
  %v2770 = vpop.f32.mrf.mxu0
  %v2771 = vadd.f32 %v2643, %v2770
  %v2772 = vpop.f32.mrf.mxu0
  %v2773 = vadd.f32 %v2643, %v2772
  %2774 = vmatmul.bf16.gmra.mxu0 %v2581
  %v2775 = vpop.f32.mrf.mxu0
  %v2776 = vadd.f32 %v2643, %v2775
  %v2777 = vpop.f32.mrf.mxu0
  %v2778 = vadd.f32 %v2643, %v2777
  %2779 = vmatmul.bf16.gmra.mxu0 %v2583
  %v2780 = vpop.f32.mrf.mxu0
  %v2781 = vadd.f32 %v2643, %v2780
  %v2782 = vpop.f32.mrf.mxu0
  %v2783 = vadd.f32 %v2643, %v2782
  %2784 = vmatmul.bf16.gmra.mxu0 %v2585
  %v2785 = vpop.f32.mrf.mxu0
  %v2786 = vadd.f32 %v2643, %v2785
  %v2787 = vpop.f32.mrf.mxu0
  %v2788 = vadd.f32 %v2643, %v2787
  %2789 = vmatmul.bf16.gmra.mxu0 %v2587
  %v2790 = vpop.f32.mrf.mxu0
  %v2791 = vadd.f32 %v2643, %v2790
  %v2792 = vpop.f32.mrf.mxu0
  %v2793 = vadd.f32 %v2643, %v2792
  %2794 = vmatmul.bf16.gmra.mxu0 %v2589
  %v2795 = vpop.f32.mrf.mxu0
  %v2796 = vadd.f32 %v2643, %v2795
  %v2797 = vpop.f32.mrf.mxu0
  %v2798 = vadd.f32 %v2643, %v2797
  %2799 = vmatmul.bf16.gmra.mxu0 %v2591
  %v2800 = vpop.f32.mrf.mxu0
  %v2801 = vadd.f32 %v2643, %v2800
  %v2802 = vpop.f32.mrf.mxu0
  %v2803 = vadd.f32 %v2643, %v2802
  %2804 = vmatmul.bf16.gmra.mxu0 %v2593
  %v2805 = vpop.f32.mrf.mxu0
  %v2806 = vadd.f32 %v2643, %v2805
  %v2807 = vpop.f32.mrf.mxu0
  %v2808 = vadd.f32 %v2643, %v2807
  %2809 = vmatmul.bf16.gmra.mxu0 %v2595
  %v2810 = vpop.f32.mrf.mxu0
  %v2811 = vadd.f32 %v2643, %v2810
  %v2812 = vpop.f32.mrf.mxu0
  %v2813 = vadd.f32 %v2643, %v2812
  %2814 = vmatmul.bf16.gmra.mxu0 %v2597
  %v2815 = vpop.f32.mrf.mxu0
  %v2816 = vadd.f32 %v2643, %v2815
  %v2817 = vpop.f32.mrf.mxu0
  %v2818 = vadd.f32 %v2643, %v2817
  %2819 = vmatmul.bf16.gmra.mxu0 %v2599
  %v2820 = vpop.f32.mrf.mxu0
  %v2821 = vadd.f32 %v2643, %v2820
  %v2822 = vpop.f32.mrf.mxu0
  %v2823 = vadd.f32 %v2643, %v2822
  %2824 = vmatmul.bf16.gmra.mxu0 %v2601
  %v2825 = vpop.f32.mrf.mxu0
  %v2826 = vadd.f32 %v2643, %v2825
  %v2827 = vpop.f32.mrf.mxu0
  %v2828 = vadd.f32 %v2643, %v2827
  %2829 = vmatmul.bf16.gmra.mxu0 %v2603
  %v2830 = vpop.f32.mrf.mxu0
  %v2831 = vadd.f32 %v2643, %v2830
  %v2832 = vpop.f32.mrf.mxu0
  %v2833 = vadd.f32 %v2643, %v2832
  %2834 = vmatmul.bf16.gmra.mxu0 %v2605
  %v2835 = vpop.f32.mrf.mxu0
  %v2836 = vadd.f32 %v2643, %v2835
  %v2837 = vpop.f32.mrf.mxu0
  %v2838 = vadd.f32 %v2643, %v2837
  %2839 = vmatmul.bf16.gmra.mxu0 %v2607
  %v2840 = vpop.f32.mrf.mxu0
  %v2841 = vadd.f32 %v2643, %v2840
  %v2842 = vpop.f32.mrf.mxu0
  %v2843 = vadd.f32 %v2643, %v2842
  %2844 = vdwg.mxu0
  %2845 = vmatpush.bf16.msra.mxu0 %v2724
  %2846 = vmatpush.bf16.msra.mxu0 %v2723
  %2847 = vmatpush.bf16.msra.mxu0 %v2722
  %2848 = vmatpush.bf16.msra.mxu0 %v2721
  %2849 = vmatpush.bf16.msra.mxu0 %v2720
  %2850 = vmatpush.bf16.msra.mxu0 %v2719
  %2851 = vmatpush.bf16.msra.mxu0 %v2718
  %2852 = vmatpush.bf16.msra.mxu0 %v2717
  %2853 = vmatmul.bf16.gmra.mxu0 %v2572
  %v2854 = vpop.f32.mrf.mxu0
  %v2855 = vadd.f32 %v2751, %v2854
  %v2856 = vpop.f32.mrf.mxu0
  %v2857 = vadd.f32 %v2753, %v2856
  %2858 = vmatmul.bf16.gmra.mxu0 %v2574
  %v2859 = vpop.f32.mrf.mxu0
  %v2860 = vadd.f32 %v2756, %v2859
  %v2861 = vpop.f32.mrf.mxu0
  %v2862 = vadd.f32 %v2758, %v2861
  %2863 = vmatmul.bf16.gmra.mxu0 %v2576
  %v2864 = vpop.f32.mrf.mxu0
  %v2865 = vadd.f32 %v2761, %v2864
  %v2866 = vpop.f32.mrf.mxu0
  %v2867 = vadd.f32 %v2763, %v2866
  %2868 = vmatmul.bf16.gmra.mxu0 %v2578
  %v2869 = vpop.f32.mrf.mxu0
  %v2870 = vadd.f32 %v2766, %v2869
  %v2871 = vpop.f32.mrf.mxu0
  %v2872 = vadd.f32 %v2768, %v2871
  %2873 = vmatmul.bf16.gmra.mxu0 %v2580
  %v2874 = vpop.f32.mrf.mxu0
  %v2875 = vadd.f32 %v2771, %v2874
  %v2876 = vpop.f32.mrf.mxu0
  %v2877 = vadd.f32 %v2773, %v2876
  %2878 = vmatmul.bf16.gmra.mxu0 %v2582
  %v2879 = vpop.f32.mrf.mxu0
  %v2880 = vadd.f32 %v2776, %v2879
  %v2881 = vpop.f32.mrf.mxu0
  %v2882 = vadd.f32 %v2778, %v2881
  %2883 = vmatmul.bf16.gmra.mxu0 %v2584
  %v2884 = vpop.f32.mrf.mxu0
  %v2885 = vadd.f32 %v2781, %v2884
  %v2886 = vpop.f32.mrf.mxu0
  %v2887 = vadd.f32 %v2783, %v2886
  %2888 = vmatmul.bf16.gmra.mxu0 %v2586
  %v2889 = vpop.f32.mrf.mxu0
  %v2890 = vadd.f32 %v2786, %v2889
  %v2891 = vpop.f32.mrf.mxu0
  %v2892 = vadd.f32 %v2788, %v2891
  %2893 = vmatmul.bf16.gmra.mxu0 %v2588
  %v2894 = vpop.f32.mrf.mxu0
  %v2895 = vadd.f32 %v2791, %v2894
  %v2896 = vpop.f32.mrf.mxu0
  %v2897 = vadd.f32 %v2793, %v2896
  %2898 = vmatmul.bf16.gmra.mxu0 %v2590
  %v2899 = vpop.f32.mrf.mxu0
  %v2900 = vadd.f32 %v2796, %v2899
  %v2901 = vpop.f32.mrf.mxu0
  %v2902 = vadd.f32 %v2798, %v2901
  %2903 = vmatmul.bf16.gmra.mxu0 %v2592
  %v2904 = vpop.f32.mrf.mxu0
  %v2905 = vadd.f32 %v2801, %v2904
  %v2906 = vpop.f32.mrf.mxu0
  %v2907 = vadd.f32 %v2803, %v2906
  %2908 = vmatmul.bf16.gmra.mxu0 %v2594
  %v2909 = vpop.f32.mrf.mxu0
  %v2910 = vadd.f32 %v2806, %v2909
  %v2911 = vpop.f32.mrf.mxu0
  %v2912 = vadd.f32 %v2808, %v2911
  %2913 = vmatmul.bf16.gmra.mxu0 %v2596
  %v2914 = vpop.f32.mrf.mxu0
  %v2915 = vadd.f32 %v2811, %v2914
  %v2916 = vpop.f32.mrf.mxu0
  %v2917 = vadd.f32 %v2813, %v2916
  %2918 = vmatmul.bf16.gmra.mxu0 %v2598
  %v2919 = vpop.f32.mrf.mxu0
  %v2920 = vadd.f32 %v2816, %v2919
  %v2921 = vpop.f32.mrf.mxu0
  %v2922 = vadd.f32 %v2818, %v2921
  %2923 = vmatmul.bf16.gmra.mxu0 %v2600
  %v2924 = vpop.f32.mrf.mxu0
  %v2925 = vadd.f32 %v2821, %v2924
  %v2926 = vpop.f32.mrf.mxu0
  %v2927 = vadd.f32 %v2823, %v2926
  %2928 = vmatmul.bf16.gmra.mxu0 %v2602
  %v2929 = vpop.f32.mrf.mxu0
  %v2930 = vadd.f32 %v2826, %v2929
  %v2931 = vpop.f32.mrf.mxu0
  %v2932 = vadd.f32 %v2828, %v2931
  %2933 = vmatmul.bf16.gmra.mxu0 %v2604
  %v2934 = vpop.f32.mrf.mxu0
  %v2935 = vadd.f32 %v2831, %v2934
  %v2936 = vpop.f32.mrf.mxu0
  %v2937 = vadd.f32 %v2833, %v2936
  %2938 = vmatmul.bf16.gmra.mxu0 %v2606
  %v2939 = vpop.f32.mrf.mxu0
  %v2940 = vadd.f32 %v2836, %v2939
  %v2941 = vpop.f32.mrf.mxu0
  %v2942 = vadd.f32 %v2838, %v2941
  %2943 = vmatmul.bf16.gmra.mxu0 %v2608
  %v2944 = vpop.f32.mrf.mxu0
  %v2945 = vadd.f32 %v2841, %v2944
  %v2946 = vpop.f32.mrf.mxu0
  %v2947 = vadd.f32 %v2843, %v2946
  %2948 = vdwg.mxu0
  %v2949 = vmax.f32 %v2855, 0.0
  %v2950 = vmax.f32 %v2857, 0.0
  %v2951 = vmax.f32 %v2860, 0.0
  %v2952 = vmax.f32 %v2862, 0.0
  %v2953 = vmax.f32 %v2865, 0.0
  %v2954 = vmax.f32 %v2867, 0.0
  %v2955 = vmax.f32 %v2870, 0.0
  %v2956 = vmax.f32 %v2872, 0.0
  %v2957 = vmax.f32 %v2875, 0.0
  %v2958 = vmax.f32 %v2877, 0.0
  %v2959 = vmax.f32 %v2880, 0.0
  %v2960 = vmax.f32 %v2882, 0.0
  %v2961 = vmax.f32 %v2885, 0.0
  %v2962 = vmax.f32 %v2887, 0.0
  %v2963 = vmax.f32 %v2890, 0.0
  %v2964 = vmax.f32 %v2892, 0.0
  %v2965 = vmax.f32 %v2895, 0.0
  %v2966 = vmax.f32 %v2897, 0.0
  %v2967 = vmax.f32 %v2900, 0.0
  %v2968 = vmax.f32 %v2902, 0.0
  %v2969 = vmax.f32 %v2905, 0.0
  %v2970 = vmax.f32 %v2907, 0.0
  %v2971 = vmax.f32 %v2910, 0.0
  %v2972 = vmax.f32 %v2912, 0.0
  %v2973 = vmax.f32 %v2915, 0.0
  %v2974 = vmax.f32 %v2917, 0.0
  %v2975 = vmax.f32 %v2920, 0.0
  %v2976 = vmax.f32 %v2922, 0.0
  %v2977 = vmax.f32 %v2925, 0.0
  %v2978 = vmax.f32 %v2927, 0.0
  %v2979 = vmax.f32 %v2930, 0.0
  %v2980 = vmax.f32 %v2932, 0.0
  %v2981 = vmax.f32 %v2935, 0.0
  %v2982 = vmax.f32 %v2937, 0.0
  %v2983 = vmax.f32 %v2940, 0.0
  %v2984 = vmax.f32 %v2942, 0.0
  %v2985 = vmax.f32 %v2945, 0.0
  %v2986 = vmax.f32 %v2947, 0.0
  %v2987 = vpack.c.bf16 %v2950, %v2949
  %v2988 = vpack.c.bf16 %v2952, %v2951
  %v2989 = vpack.c.bf16 %v2954, %v2953
  %v2990 = vpack.c.bf16 %v2956, %v2955
  %v2991 = vpack.c.bf16 %v2958, %v2957
  %v2992 = vpack.c.bf16 %v2960, %v2959
  %v2993 = vpack.c.bf16 %v2962, %v2961
  %v2994 = vpack.c.bf16 %v2964, %v2963
  %v2995 = vpack.c.bf16 %v2966, %v2965
  %v2996 = vpack.c.bf16 %v2968, %v2967
  %v2997 = vpack.c.bf16 %v2970, %v2969
  %v2998 = vpack.c.bf16 %v2972, %v2971
  %v2999 = vpack.c.bf16 %v2974, %v2973
  %v3000 = vpack.c.bf16 %v2976, %v2975
  %v3001 = vpack.c.bf16 %v2978, %v2977
  %v3002 = vpack.c.bf16 %v2980, %v2979
  %v3003 = vpack.c.bf16 %v2982, %v2981
  %v3004 = vpack.c.bf16 %v2984, %v2983
  %v3005 = vpack.c.bf16 %v2986, %v2985
  %v3006 = vld [vmem:[%s9] sm:$0xf]
  %v3007 = vld [vmem:[%s9 + $0x4] sm:$0xf]
  %v3008 = vld [vmem:[%s9 + $0x8] sm:$0xf]
  %v3009 = vld [vmem:[%s9 + $0xc] sm:$0xf]
  %v3010 = vld [vmem:[%s9 + $0x10] sm:$0xf]
  %v3011 = vld [vmem:[%s9 + $0x14] sm:$0xf]
  %v3012 = vld [vmem:[%s9 + $0x18] sm:$0xf]
  %v3013 = vld [vmem:[%s9 + $0x1c] sm:$0xf]
  %v3014 = vld [vmem:[%s10] sm:$0x1]
  %v3016 = vperm.slane %v3014, 0
  %v3026 = vunpack.c.l.b16 %v3006
  %v3027 = vunpack.c.l.b16 %v3007
  %v3028 = vunpack.c.l.b16 %v3008
  %v3029 = vunpack.c.l.b16 %v3009
  %v3030 = vunpack.c.l.b16 %v3010
  %v3031 = vunpack.c.l.b16 %v3011
  %v3032 = vunpack.c.l.b16 %v3012
  %v3033 = vunpack.c.l.b16 %v3013
  %v3034 = vpack.c.b16 %v3027, %v3026
  %v3035 = vpack.c.b16 %v3029, %v3028
  %v3036 = vpack.c.b16 %v3031, %v3030
  %v3037 = vpack.c.b16 %v3033, %v3032
  %vm3042 = vcmask 523264
  %v3044 = vsel %vm3042, %v2987, 0
  %v3047 = vsel %vm3042, %v2988, 0
  %v3050 = vsel %vm3042, %v2989, 0
  %v3053 = vsel %vm3042, %v2990, 0
  %v3056 = vsel %vm3042, %v2991, 0
  %v3059 = vsel %vm3042, %v2992, 0
  %v3062 = vsel %vm3042, %v2993, 0
  %v3065 = vsel %vm3042, %v2994, 0
  %v3068 = vsel %vm3042, %v2995, 0
  %v3071 = vsel %vm3042, %v2996, 0
  %v3074 = vsel %vm3042, %v2997, 0
  %v3077 = vsel %vm3042, %v2998, 0
  %v3080 = vsel %vm3042, %v2999, 0
  %v3083 = vsel %vm3042, %v3000, 0
  %v3086 = vsel %vm3042, %v3001, 0
  %v3089 = vsel %vm3042, %v3002, 0
  %v3092 = vsel %vm3042, %v3003, 0
  %v3095 = vsel %vm3042, %v3004, 0
  %v3098 = vsel %vm3042, %v3005, 0
  %3100 = vmatpush.bf16.msra.mxu0 0
  %3101 = vmatpush.bf16.msra.mxu0 0
  %3102 = vmatpush.bf16.msra.mxu0 0
  %3103 = vmatpush.bf16.msra.mxu0 0
  %3104 = vmatpush.bf16.msra.mxu0 %v3037
  %3105 = vmatpush.bf16.msra.mxu0 %v3036
  %3106 = vmatpush.bf16.msra.mxu0 %v3035
  %3107 = vmatpush.bf16.msra.mxu0 %v3034
  %3108 = vmatmul.bf16.gmra.mxu0 %v3044
  %v3109 = vpop.f32.mrf.mxu0
  %v3110 = vadd.f32 %v3016, %v3109
  %v3111 = vpop.f32.mrf.mxu0
  %v3112 = vadd.f32 %v3016, %v3111
  %3113 = vmatmul.bf16.gmra.mxu0 %v3047
  %v3114 = vpop.f32.mrf.mxu0
  %v3115 = vadd.f32 %v3016, %v3114
  %v3116 = vpop.f32.mrf.mxu0
  %v3117 = vadd.f32 %v3016, %v3116
  %3118 = vmatmul.bf16.gmra.mxu0 %v3050
  %v3119 = vpop.f32.mrf.mxu0
  %v3120 = vadd.f32 %v3016, %v3119
  %v3121 = vpop.f32.mrf.mxu0
  %v3122 = vadd.f32 %v3016, %v3121
  %3123 = vmatmul.bf16.gmra.mxu0 %v3053
  %v3124 = vpop.f32.mrf.mxu0
  %v3125 = vadd.f32 %v3016, %v3124
  %v3126 = vpop.f32.mrf.mxu0
  %v3127 = vadd.f32 %v3016, %v3126
  %3128 = vmatmul.bf16.gmra.mxu0 %v3056
  %v3129 = vpop.f32.mrf.mxu0
  %v3130 = vadd.f32 %v3016, %v3129
  %v3131 = vpop.f32.mrf.mxu0
  %v3132 = vadd.f32 %v3016, %v3131
  %3133 = vmatmul.bf16.gmra.mxu0 %v3059
  %v3134 = vpop.f32.mrf.mxu0
  %v3135 = vadd.f32 %v3016, %v3134
  %v3136 = vpop.f32.mrf.mxu0
  %v3137 = vadd.f32 %v3016, %v3136
  %3138 = vmatmul.bf16.gmra.mxu0 %v3062
  %v3139 = vpop.f32.mrf.mxu0
  %v3140 = vadd.f32 %v3016, %v3139
  %v3141 = vpop.f32.mrf.mxu0
  %v3142 = vadd.f32 %v3016, %v3141
  %3143 = vmatmul.bf16.gmra.mxu0 %v3065
  %v3144 = vpop.f32.mrf.mxu0
  %v3145 = vadd.f32 %v3016, %v3144
  %v3146 = vpop.f32.mrf.mxu0
  %v3147 = vadd.f32 %v3016, %v3146
  %3148 = vmatmul.bf16.gmra.mxu0 %v3068
  %v3149 = vpop.f32.mrf.mxu0
  %v3150 = vadd.f32 %v3016, %v3149
  %v3151 = vpop.f32.mrf.mxu0
  %v3152 = vadd.f32 %v3016, %v3151
  %3153 = vmatmul.bf16.gmra.mxu0 %v3071
  %v3154 = vpop.f32.mrf.mxu0
  %v3155 = vadd.f32 %v3016, %v3154
  %v3156 = vpop.f32.mrf.mxu0
  %v3157 = vadd.f32 %v3016, %v3156
  %3158 = vmatmul.bf16.gmra.mxu0 %v3074
  %v3159 = vpop.f32.mrf.mxu0
  %v3160 = vadd.f32 %v3016, %v3159
  %v3161 = vpop.f32.mrf.mxu0
  %v3162 = vadd.f32 %v3016, %v3161
  %3163 = vmatmul.bf16.gmra.mxu0 %v3077
  %v3164 = vpop.f32.mrf.mxu0
  %v3165 = vadd.f32 %v3016, %v3164
  %v3166 = vpop.f32.mrf.mxu0
  %v3167 = vadd.f32 %v3016, %v3166
  %3168 = vmatmul.bf16.gmra.mxu0 %v3080
  %v3169 = vpop.f32.mrf.mxu0
  %v3170 = vadd.f32 %v3016, %v3169
  %v3171 = vpop.f32.mrf.mxu0
  %v3172 = vadd.f32 %v3016, %v3171
  %3173 = vmatmul.bf16.gmra.mxu0 %v3083
  %v3174 = vpop.f32.mrf.mxu0
  %v3175 = vadd.f32 %v3016, %v3174
  %v3176 = vpop.f32.mrf.mxu0
  %v3177 = vadd.f32 %v3016, %v3176
  %3178 = vmatmul.bf16.gmra.mxu0 %v3086
  %v3179 = vpop.f32.mrf.mxu0
  %v3180 = vadd.f32 %v3016, %v3179
  %v3181 = vpop.f32.mrf.mxu0
  %v3182 = vadd.f32 %v3016, %v3181
  %3183 = vmatmul.bf16.gmra.mxu0 %v3089
  %v3184 = vpop.f32.mrf.mxu0
  %v3185 = vadd.f32 %v3016, %v3184
  %v3186 = vpop.f32.mrf.mxu0
  %v3187 = vadd.f32 %v3016, %v3186
  %3188 = vmatmul.bf16.gmra.mxu0 %v3092
  %v3189 = vpop.f32.mrf.mxu0
  %v3190 = vadd.f32 %v3016, %v3189
  %v3191 = vpop.f32.mrf.mxu0
  %v3192 = vadd.f32 %v3016, %v3191
  %3193 = vmatmul.bf16.gmra.mxu0 %v3095
  %v3194 = vpop.f32.mrf.mxu0
  %v3195 = vadd.f32 %v3016, %v3194
  %v3196 = vpop.f32.mrf.mxu0
  %v3197 = vadd.f32 %v3016, %v3196
  %3198 = vmatmul.bf16.gmra.mxu0 %v3098
  %v3199 = vpop.f32.mrf.mxu0
  %v3200 = vadd.f32 %v3016, %v3199
  %v3201 = vpop.f32.mrf.mxu0
  %v3202 = vadd.f32 %v3016, %v3201
  %3203 = vdwg.mxu0
  %v3204 = vmax.f32 %v3110, 0.0
  %v3205 = vmax.f32 %v3112, 0.0
  %v3206 = vmax.f32 %v3115, 0.0
  %v3207 = vmax.f32 %v3117, 0.0
  %v3208 = vmax.f32 %v3120, 0.0
  %v3209 = vmax.f32 %v3122, 0.0
  %v3210 = vmax.f32 %v3125, 0.0
  %v3211 = vmax.f32 %v3127, 0.0
  %v3212 = vmax.f32 %v3130, 0.0
  %v3213 = vmax.f32 %v3132, 0.0
  %v3214 = vmax.f32 %v3135, 0.0
  %v3215 = vmax.f32 %v3137, 0.0
  %v3216 = vmax.f32 %v3140, 0.0
  %v3217 = vmax.f32 %v3142, 0.0
  %v3218 = vmax.f32 %v3145, 0.0
  %v3219 = vmax.f32 %v3147, 0.0
  %v3220 = vmax.f32 %v3150, 0.0
  %v3221 = vmax.f32 %v3152, 0.0
  %v3222 = vmax.f32 %v3155, 0.0
  %v3223 = vmax.f32 %v3157, 0.0
  %v3224 = vmax.f32 %v3160, 0.0
  %v3225 = vmax.f32 %v3162, 0.0
  %v3226 = vmax.f32 %v3165, 0.0
  %v3227 = vmax.f32 %v3167, 0.0
  %v3228 = vmax.f32 %v3170, 0.0
  %v3229 = vmax.f32 %v3172, 0.0
  %v3230 = vmax.f32 %v3175, 0.0
  %v3231 = vmax.f32 %v3177, 0.0
  %v3232 = vmax.f32 %v3180, 0.0
  %v3233 = vmax.f32 %v3182, 0.0
  %v3234 = vmax.f32 %v3185, 0.0
  %v3235 = vmax.f32 %v3187, 0.0
  %v3236 = vmax.f32 %v3190, 0.0
  %v3237 = vmax.f32 %v3192, 0.0
  %v3238 = vmax.f32 %v3195, 0.0
  %v3239 = vmax.f32 %v3197, 0.0
  %v3240 = vmax.f32 %v3200, 0.0
  %v3241 = vmax.f32 %v3202, 0.0
  %3242 = vxpose.xlu0.b32.start [1/16] %v3204, 128
  %3243 = vxpose.xlu0.b32.cont [2/16] %v3205, 128
  %3244 = vxpose.xlu0.b32.cont [3/16] %v3206, 128
  %3245 = vxpose.xlu0.b32.cont [4/16] %v3207, 128
  %3246 = vxpose.xlu0.b32.cont [5/16] %v3208, 128
  %3247 = vxpose.xlu0.b32.cont [6/16] %v3209, 128
  %3248 = vxpose.xlu0.b32.cont [7/16] %v3210, 128
  %3249 = vxpose.xlu0.b32.cont [8/16] %v3211, 128
  %3250 = vxpose.xlu0.b32.cont [9/16] %v3212, 128
  %3251 = vxpose.xlu0.b32.cont [10/16] %v3213, 128
  %3252 = vxpose.xlu0.b32.cont [11/16] %v3214, 128
  %3253 = vxpose.xlu0.b32.cont [12/16] %v3215, 128
  %3254 = vxpose.xlu0.b32.cont [13/16] %v3216, 128
  %3255 = vxpose.xlu0.b32.cont [14/16] %v3217, 128
  %3256 = vxpose.xlu0.b32.cont [15/16] %v3218, 128
  %3257 = vxpose.xlu0.b32.end [16/16] %v3219, 128
  %v3258 = vpop.trf.xlu0
  %v3259 = vpop.trf.xlu0
  %v3260 = vpop.trf.xlu0
  %v3261 = vpop.trf.xlu0
  %v3262 = vpop.trf.xlu0
  %v3263 = vpop.trf.xlu0
  %v3264 = vpop.trf.xlu0
  %v3265 = vpop.trf.xlu0
  %v3266 = vpop.trf.xlu0
  %v3267 = vpop.trf.xlu0
  %v3268 = vpop.trf.xlu0
  %v3269 = vpop.trf.xlu0
  %v3270 = vpop.trf.xlu0
  %v3271 = vpop.trf.xlu0
  %v3272 = vpop.trf.xlu0
  %v3273 = vpop.trf.xlu0
  %3274 = vxpose.xlu0.b32.start [1/16] %v3220, 128
  %3275 = vxpose.xlu0.b32.cont [2/16] %v3221, 128
  %3276 = vxpose.xlu0.b32.cont [3/16] %v3222, 128
  %3277 = vxpose.xlu0.b32.cont [4/16] %v3223, 128
  %3278 = vxpose.xlu0.b32.cont [5/16] %v3224, 128
  %3279 = vxpose.xlu0.b32.cont [6/16] %v3225, 128
  %3280 = vxpose.xlu0.b32.cont [7/16] %v3226, 128
  %3281 = vxpose.xlu0.b32.cont [8/16] %v3227, 128
  %3282 = vxpose.xlu0.b32.cont [9/16] %v3228, 128
  %3283 = vxpose.xlu0.b32.cont [10/16] %v3229, 128
  %3284 = vxpose.xlu0.b32.cont [11/16] %v3230, 128
  %3285 = vxpose.xlu0.b32.cont [12/16] %v3231, 128
  %3286 = vxpose.xlu0.b32.cont [13/16] %v3232, 128
  %3287 = vxpose.xlu0.b32.cont [14/16] %v3233, 128
  %3288 = vxpose.xlu0.b32.cont [15/16] %v3234, 128
  %3289 = vxpose.xlu0.b32.end [16/16] %v3235, 128
  %v3290 = vpop.trf.xlu0
  %v3291 = vpop.trf.xlu0
  %v3292 = vpop.trf.xlu0
  %v3293 = vpop.trf.xlu0
  %v3294 = vpop.trf.xlu0
  %v3295 = vpop.trf.xlu0
  %v3296 = vpop.trf.xlu0
  %v3297 = vpop.trf.xlu0
  %v3298 = vpop.trf.xlu0
  %v3299 = vpop.trf.xlu0
  %v3300 = vpop.trf.xlu0
  %v3301 = vpop.trf.xlu0
  %v3302 = vpop.trf.xlu0
  %v3303 = vpop.trf.xlu0
  %v3304 = vpop.trf.xlu0
  %v3305 = vpop.trf.xlu0
  %3306 = vxpose.xlu0.b32.start [1/16] %v3236, 128
  %3307 = vxpose.xlu0.b32.cont [2/16] %v3237, 128
  %3308 = vxpose.xlu0.b32.cont [3/16] %v3238, 128
  %3309 = vxpose.xlu0.b32.cont [4/16] %v3239, 128
  %3310 = vxpose.xlu0.b32.cont [5/16] %v3240, 128
  %3311 = vxpose.xlu0.b32.cont [6/16] %v3241, 128
  %3312 = vxpose.xlu0.b32.cont [7/16] 0.0, 128
  %3313 = vxpose.xlu0.b32.cont [8/16] 0.0, 128
  %3314 = vxpose.xlu0.b32.cont [9/16] 0.0, 128
  %3315 = vxpose.xlu0.b32.cont [10/16] 0.0, 128
  %3316 = vxpose.xlu0.b32.cont [11/16] 0.0, 128
  %3317 = vxpose.xlu0.b32.cont [12/16] 0.0, 128
  %3318 = vxpose.xlu0.b32.cont [13/16] 0.0, 128
  %3319 = vxpose.xlu0.b32.cont [14/16] 0.0, 128
  %3320 = vxpose.xlu0.b32.cont [15/16] 0.0, 128
  %3321 = vxpose.xlu0.b32.end [16/16] 0.0, 128
  %v3322 = vpop.trf.xlu0
  %v3323 = vpop.trf.xlu0
  %v3324 = vpop.trf.xlu0
  %v3325 = vpop.trf.xlu0
  %v3326 = vpop.trf.xlu0
  %v3327 = vpop.trf.xlu0
  %v3328 = vpop.trf.xlu0
  %v3329 = vpop.trf.xlu0
  %v3330 = vpop.trf.xlu0
  %v3331 = vpop.trf.xlu0
  %v3332 = vpop.trf.xlu0
  %v3333 = vpop.trf.xlu0
  %v3334 = vpop.trf.xlu0
  %v3335 = vpop.trf.xlu0
  %v3336 = vpop.trf.xlu0
  %v3337 = vpop.trf.xlu0
  %v3338 = vld [vmem:[%s11] sm:$0xff]
  %v3339 = vld [vmem:[%s11 + $0x8] sm:$0xff]
  %3341 = vset.pattern.permute.xlu0 0
  %3342 = vperm.xlu0 %3341, %v3338
  %v3343 = vpop.permute.xlu0 %3342
  %3346 = vset.pattern.permute.xlu0 0
  %3347 = vperm.xlu0 %3346, %v3339
  %v3348 = vpop.permute.xlu0 %3347
  %v3350 = vmul.f32 %v3258, %v3343
  %v3351 = vmul.f32 %v3290, %v3343
  %v3352 = vmul.f32 %v3322, %v3343
  %v3353 = vmul.f32 %v3259, %v3348
  %v3354 = vmul.f32 %v3291, %v3348
  %v3355 = vmul.f32 %v3323, %v3348
  %v3356 = vadd.f32 %v3350, %v3353
  %v3357 = vrot.slane %v3356, 4
  %v3358 = vadd.f32 %v3356, %v3357
  %v3359 = vrot.slane %v3358, 2
  %v3360 = vadd.f32 %v3358, %v3359
  %v3361 = vrot.slane %v3360, 1
  %v3362 = vadd.f32 %v3360, %v3361
  %v3363 = vadd.f32 %v3351, %v3354
  %v3364 = vrot.slane %v3363, 4
  %v3365 = vadd.f32 %v3363, %v3364
  %v3366 = vrot.slane %v3365, 2
  %v3367 = vadd.f32 %v3365, %v3366
  %v3368 = vrot.slane %v3367, 1
  %v3369 = vadd.f32 %v3367, %v3368
  %vm3370 = vcmask 392192
  %v3371 = vsel %vm3370, %v3352, 0.0
  %v3372 = vsel %vm3370, %v3355, 0.0
  %v3373 = vadd.f32 %v3371, %v3372
  %v3374 = vrot.slane %v3373, 4
  %v3375 = vadd.f32 %v3373, %v3374
  %v3376 = vrot.slane %v3375, 2
  %v3377 = vadd.f32 %v3375, %v3376
  %v3378 = vrot.slane %v3377, 1
  %v3379 = vadd.f32 %v3377, %v3378
  %v3380 = vld [vmem:[#allocation2] sm:$0x1]
  %3382 = vset.pattern.permute.xlu0 0
  %3383 = vperm.xlu0 %3382, %v3380
  %v3384 = vpop.permute.xlu0 %3383
  %v3386 = vperm.slane %v3384, 0
  %v3387 = vadd.f32 %v3362, %v3386
  %v3388 = vadd.f32 %v3369, %v3386
  %v3389 = vadd.f32 %v3379, %v3386
  %v3393 = vrot.slane %v3388, 7
  %v3394 = vrot.slane %v3389, 6
  %vm3395 = vcmask 1040384
  %v3396 = vsel %vm3395, %v3387, %v3393
  %v3397 = vsel %vm1048, %v3396, %v3394
  %v3399 = vlaneseq
  %vm3400 = vcmp.ge.s32.totalorder %v3399, 0
  %vm3401 = vcmp.lt.s32.totalorder %v3399, 304
  %vm3402 = vmand %vm3400, %vm3401
  %3403 = vst.msk [vmem:[%s13] sm:$0x7] %vm3402, %v3397
  // Predicated region
  $region54: #{critic_forward.1} parent=0 // pred_check
    _
  $region55: #{critic_forward.1} parent=0 // pred_check_branch
    %3405 = sbr.rel (0) target = $region57
  $region56: #{critic_forward.1} parent=0 // pred_region
    _
  $region57: #{critic_forward.1} parent=0 // pred_fallthru
    _
  // Predicated region
  $region58: #{critic_forward.1} parent=0 // pred_check
    _
  $region59: #{critic_forward.1} parent=0 // pred_check_branch
    %3407 = sbr.rel (0) target = $region61
  $region60: #{critic_forward.1} parent=0 // pred_region
    _
  $region61: #{critic_forward.1} parent=0 // pred_fallthru
    _

</llo_original>
